<compile_context>
chip_gen: v7x
topology: tpu7x:2x2x1
jax: 0.10.0
libtpu: 0.0.40
codegen_flags: <defaults>
</compile_context>

<pallas_src>
import numpy as np

import jax
import jax.numpy as jnp
from jax.experimental import pallas as pl
from jax.experimental.pallas import tpu as pltpu

LANE = 128
TB_MAX = 8                      # images per grid step (sweepable)
COMPUTE_DTYPE = jnp.bfloat16    # MXU operand dtype; accumulation stays f32


def _round_up(x, m):
    return (x + m - 1) // m * m


def _cdiv(a, b):
    return (a + b - 1) // b


def _batch_tiling(batch):
    """>=2 (even) grid steps for v7x megacore; tile from cdiv (no 2x blowup)."""
    num_tiles = max(2, _cdiv(batch, TB_MAX))
    if num_tiles % 2:
        num_tiles += 1
    tb = _round_up(_cdiv(batch, num_tiles), 8)
    return tb, num_tiles


# ----------------------------------------------------------------------------
# The fused LeNet kernel.
#
# Per batch tile (TB images), the input block is (TB*32, 32): each image is the
# 28x28 input zero-padded to 32x32 (conv1's padding=2), stacked along rows.
# conv1:  out(i, 2*w2+ph, co) = sum_di  x[i+di, :] @ T1[di][:, ph*128 + co*14 + w2]
# so 5 row-shifted GEMMs produce both maxpool column phases at once; the W-pool
# is an elementwise max of the two 128-lane halves, the H-pool merges adjacent
# row pairs into lanes ((M,128)->(M/2,256)) and takes another max.  Rows 28..31
# of each image (and the pooled rows 14,15 / 5..7 downstream) are finite
# "don't-care" rows that are never read by valid outputs (conv row windows stay
# inside the image) and are multiplied by zero FC weights at the flatten.
# conv2 works identically on the pooled (ci,w)-packed 128-lane columns.
# ----------------------------------------------------------------------------
def _lenet_kernel(x_ref, t1_ref, b1_ref, t2_ref, b2_ref,
                  w3_ref, b3_ref, w4_ref, b4_ref, w5_ref, b5_ref, o_ref):
    f32 = jnp.float32
    cdt = t1_ref.dtype                     # bf16 MXU operand dtype
    rows1 = x_ref.shape[0]                 # TB * 32
    tb = rows1 // 32

    # ---- conv1 (5x5, pad 2) + bias + ReLU + 2x2 maxpool ----
    x = x_ref[...]                                              # (TB*32, 32)
    xpad = jnp.concatenate([x, jnp.zeros((8, 32), x.dtype)], axis=0)
    acc = jnp.zeros((rows1, 2 * LANE), f32)
    for di in range(5):                                         # 5 shifted GEMMs
        acc = acc + jnp.dot(xpad[di:di + rows1, :], t1_ref[di],
                            preferred_element_type=f32)
    h = jnp.maximum(acc[:, :LANE], acc[:, LANE:])               # maxpool over W
    h = jnp.maximum(h + b1_ref[...], 0.0)                       # bias + ReLU
    h = h.reshape(rows1 // 2, 2 * LANE)                         # merge row pairs
    h = jnp.maximum(h[:, :LANE], h[:, LANE:]).astype(cdt)       # maxpool over H
    # h: (TB*16, 128); per image 16 rows (14 valid), cols = ci*14 + w2 (84 used)

    # ---- conv2 (5x5, valid) + bias + ReLU + 2x2 maxpool ----
    rows2 = rows1 // 2
    hpad = jnp.concatenate([h, jnp.zeros((8, LANE), cdt)], axis=0)
    acc2 = jnp.zeros((rows2, 2 * LANE), f32)
    for di in range(5):
        acc2 = acc2 + jnp.dot(hpad[di:di + rows2, :], t2_ref[di],
                              preferred_element_type=f32)
    g = jnp.maximum(acc2[:, :LANE], acc2[:, LANE:])             # maxpool over W
    g = jnp.maximum(g + b2_ref[...], 0.0)                       # bias + ReLU
    g = g.reshape(rows2 // 2, 2 * LANE)
    g = jnp.maximum(g[:, :LANE], g[:, LANE:])                   # maxpool over H
    # g: (TB*8, 128); per image 8 rows (5 valid), cols = co*5 + w' (80 used)

    # ---- FC stack 400 -> 120 -> 84 -> 10 (weights pre-permuted, 128-padded) ----
    gf = g.reshape(tb, 8 * LANE).astype(cdt)                    # (TB, 1024)
    z = jnp.dot(gf, w3_ref[...], preferred_element_type=f32)
    z = jnp.maximum(z + b3_ref[...], 0.0).astype(cdt)
    z = jnp.dot(z, w4_ref[...], preferred_element_type=f32)
    z = jnp.maximum(z + b4_ref[...], 0.0).astype(cdt)
    z = jnp.dot(z, w5_ref[...], preferred_element_type=f32)
    o_ref[...] = (z + b5_ref[...]).astype(o_ref.dtype)


# ----------------------------------------------------------------------------
# One-time parameter preparation (host side, OUTSIDE jit).
# Torch layouts: conv (cout, cin, kh, kw); linear (out, in); y = x @ W.T + b.
# ----------------------------------------------------------------------------
def prepare_params(p):
    w1 = np.asarray(p["conv1_w"], np.float32)   # (6, 1, 5, 5)
    b1 = np.asarray(p["conv1_b"], np.float32)
    w2 = np.asarray(p["conv2_w"], np.float32)   # (16, 6, 5, 5)
    b2 = np.asarray(p["conv2_b"], np.float32)
    w3 = np.asarray(p["fc1_w"], np.float32)     # (120, 400)
    b3 = np.asarray(p["fc1_b"], np.float32)
    w4 = np.asarray(p["fc2_w"], np.float32)     # (84, 120)
    b4 = np.asarray(p["fc2_b"], np.float32)
    w5 = np.asarray(p["fc3_w"], np.float32)     # (10, 84)
    b5 = np.asarray(p["fc3_b"], np.float32)

    # conv1 Toeplitz: (di, input col a, phase*128 + co*14 + w2) with
    # a = 2*w2 + phase + dj encoding both the column shift and the pool phase.
    t1 = np.zeros((5, 32, 2 * LANE), np.float32)
    for di in range(5):
        for co in range(6):
            for w2o in range(14):
                for ph in range(2):
                    for dj in range(5):
                        a = 2 * w2o + ph + dj
                        t1[di, a, ph * LANE + co * 14 + w2o] = w1[co, 0, di, dj]
    b1row = np.zeros((1, LANE), np.float32)
    for co in range(6):
        b1row[0, co * 14: co * 14 + 14] = b1[co]

    # conv2 Toeplitz: input cols a = ci*14 + (2*j2 + phase + dj),
    # output cols phase*128 + co*5 + j2.
    t2 = np.zeros((5, LANE, 2 * LANE), np.float32)
    for di in range(5):
        for ci in range(6):
            for co in range(16):
                for j2 in range(5):
                    for ph in range(2):
                        for dj in range(5):
                            a = ci * 14 + 2 * j2 + ph + dj
                            t2[di, a, ph * LANE + co * 5 + j2] = w2[co, ci, di, dj]
    b2row = np.zeros((1, LANE), np.float32)
    for co in range(16):
        b2row[0, co * 5: co * 5 + 5] = b2[co]

    # fc1: kernel flatten index = h'*128 + co*5 + w'  <->  torch co*25 + h'*5 + w'
    w3p = np.zeros((8 * LANE, LANE), np.float32)
    for co in range(16):
        for hp in range(5):
            for wp in range(5):
                w3p[hp * LANE + co * 5 + wp, :120] = w3[:, co * 25 + hp * 5 + wp]
    b3row = np.zeros((1, LANE), np.float32); b3row[0, :120] = b3
    w4p = np.zeros((LANE, LANE), np.float32); w4p[:120, :84] = w4.T
    b4row = np.zeros((1, LANE), np.float32); b4row[0, :84] = b4
    w5p = np.zeros((LANE, LANE), np.float32); w5p[:84, :10] = w5.T
    b5row = np.zeros((1, LANE), np.float32); b5row[0, :10] = b5

    cd = COMPUTE_DTYPE
    return {
        "t1": jnp.asarray(t1, cd), "b1": jnp.asarray(b1row),
        "t2": jnp.asarray(t2, cd), "b2": jnp.asarray(b2row),
        "w3": jnp.asarray(w3p, cd), "b3": jnp.asarray(b3row),
        "w4": jnp.asarray(w4p, cd), "b4": jnp.asarray(b4row),
        "w5": jnp.asarray(w5p, cd), "b5": jnp.asarray(b5row),
    }


# ----------------------------------------------------------------------------
# Forward pass (jit this; prepare_params must be called once, outside).
# ----------------------------------------------------------------------------
def lenet_forward(x_nchw, kp):
    """x_nchw: (B, 1, 28, 28) f32 -> logits (B, 10), matching Net.forward."""
    B = x_nchw.shape[0]
    TB, num_tiles = _batch_tiling(B)
    Bp = TB * num_tiles

    # conv1 padding=2 -> each image becomes 32x32; stack images along rows.
    x = jnp.pad(x_nchw, ((0, Bp - B), (0, 0), (2, 2), (2, 2)))   # (Bp,1,32,32)
    x2d = x.reshape(Bp * 32, 32).astype(COMPUTE_DTYPE)

    full2 = lambda i: (0, 0)
    full3 = lambda i: (0, 0, 0)
    out = pl.pallas_call(
        _lenet_kernel,
        out_shape=jax.ShapeDtypeStruct((Bp, LANE), jnp.float32),
        grid=(num_tiles,),
        in_specs=[
            pl.BlockSpec((TB * 32, 32), lambda i: (i, 0)),
            pl.BlockSpec(kp["t1"].shape, full3),
            pl.BlockSpec((1, LANE), full2),
            pl.BlockSpec(kp["t2"].shape, full3),
            pl.BlockSpec((1, LANE), full2),
            pl.BlockSpec(kp["w3"].shape, full2),
            pl.BlockSpec((1, LANE), full2),
            pl.BlockSpec(kp["w4"].shape, full2),
            pl.BlockSpec((1, LANE), full2),
            pl.BlockSpec(kp["w5"].shape, full2),
            pl.BlockSpec((1, LANE), full2),
        ],
        out_specs=pl.BlockSpec((TB, LANE), lambda i: (i, 0)),
        compiler_params=pltpu.CompilerParams(
            dimension_semantics=("parallel",)),
    )(x2d, kp["t1"], kp["b1"], kp["t2"], kp["b2"],
      kp["w3"], kp["b3"], kp["w4"], kp["b4"], kp["w5"], kp["b5"])
    return out[:B, :10]


# ----------------------------------------------------------------------------
# Pure-JAX reference (torch semantics) + synthetic params + driver.
# ----------------------------------------------------------------------------
def lenet_reference(x, p):
    y = jax.lax.conv_general_dilated(x, p["conv1_w"], (1, 1), ((2, 2), (2, 2)),
                                     dimension_numbers=("NCHW", "OIHW", "NCHW"))
    y = jax.nn.relu(y + p["conv1_b"][None, :, None, None])
    y = jax.lax.reduce_window(y, -jnp.inf, jax.lax.max,
                              (1, 1, 2, 2), (1, 1, 2, 2), "VALID")
    y = jax.lax.conv_general_dilated(y, p["conv2_w"], (1, 1), "VALID",
                                     dimension_numbers=("NCHW", "OIHW", "NCHW"))
    y = jax.nn.relu(y + p["conv2_b"][None, :, None, None])
    y = jax.lax.reduce_window(y, -jnp.inf, jax.lax.max,
                              (1, 1, 2, 2), (1, 1, 2, 2), "VALID")
    y = y.reshape(y.shape[0], -1)
    y = jax.nn.relu(y @ p["fc1_w"].T + p["fc1_b"])
    y = jax.nn.relu(y @ p["fc2_w"].T + p["fc2_b"])
    return y @ p["fc3_w"].T + p["fc3_b"]


def init_torch_params(key):
    ks = jax.random.split(key, 10)
    s = 0.1
    return {
        "conv1_w": s * jax.random.normal(ks[0], (6, 1, 5, 5), jnp.float32),
        "conv1_b": s * jax.random.normal(ks[1], (6,), jnp.float32),
        "conv2_w": s * jax.random.normal(ks[2], (16, 6, 5, 5), jnp.float32),
        "conv2_b": s * jax.random.normal(ks[3], (16,), jnp.float32),
        "fc1_w": s * jax.random.normal(ks[4], (120, 400), jnp.float32),
        "fc1_b": s * jax.random.normal(ks[5], (120,), jnp.float32),
        "fc2_w": s * jax.random.normal(ks[6], (84, 120), jnp.float32),
        "fc2_b": s * jax.random.normal(ks[7], (84,), jnp.float32),
        "fc3_w": s * jax.random.normal(ks[8], (10, 84), jnp.float32),
        "fc3_b": s * jax.random.normal(ks[9], (10,), jnp.float32),
    }


if __name__ == "__main__":
    key = jax.random.PRNGKey(0)
    kx, kp = jax.random.split(key)
    # Input shape implied by the module: 1x28x28 (MNIST) so flatten == 16*5*5.
    x = jax.random.normal(kx, (2, 1, 28, 28), jnp.float32)
    torch_params = init_torch_params(kp)

    kernel_params = prepare_params(torch_params)     # once, outside jit
    fwd = jax.jit(lenet_forward)
    out = jax.block_until_ready(fwd(x, kernel_params))
    assert out.shape == (2, 10) and out.dtype == jnp.float32

    ref = jax.block_until_ready(jax.jit(lenet_reference)(x, torch_params))
    err = float(jnp.max(jnp.abs(out - ref)))
    assert err < 0.1, f"max abs error vs reference too large: {err}"
    print("KERNEL_OK")
</pallas_src>

<mosaic_0001>
module attributes {stable_mosaic.version = 11 : i64} {
  func.func @_lenet_kernel(%arg0: i32, %arg1: memref<256x32xbf16, #tpu.memory_space<vmem>>, %arg2: memref<5x32x256xbf16, #tpu.memory_space<vmem>>, %arg3: memref<1x128xf32, #tpu.memory_space<vmem>>, %arg4: memref<5x128x256xbf16, #tpu.memory_space<vmem>>, %arg5: memref<1x128xf32, #tpu.memory_space<vmem>>, %arg6: memref<1024x128xbf16, #tpu.memory_space<vmem>>, %arg7: memref<1x128xf32, #tpu.memory_space<vmem>>, %arg8: memref<128x128xbf16, #tpu.memory_space<vmem>>, %arg9: memref<1x128xf32, #tpu.memory_space<vmem>>, %arg10: memref<128x128xbf16, #tpu.memory_space<vmem>>, %arg11: memref<1x128xf32, #tpu.memory_space<vmem>>, %arg12: memref<8x128xf32, #tpu.memory_space<vmem>>) attributes {dimension_semantics = [#tpu.dimension_semantics<parallel>], iteration_bounds = array<i64: 2>, scalar_prefetch = 0 : i64, scratch_operands = 0 : i64, tpu.core_type = #tpu.core_type<tc>, window_params = [{transform_indices = @transform_0, window_bounds = array<i64: 256, 32>}, {pipeline_mode = #tpu.pipeline_mode<synchronous>, transform_indices = @transform_1, window_bounds = array<i64: 5, 32, 256>}, {pipeline_mode = #tpu.pipeline_mode<synchronous>, transform_indices = @transform_2, window_bounds = array<i64: 1, 128>}, {pipeline_mode = #tpu.pipeline_mode<synchronous>, transform_indices = @transform_3, window_bounds = array<i64: 5, 128, 256>}, {pipeline_mode = #tpu.pipeline_mode<synchronous>, transform_indices = @transform_4, window_bounds = array<i64: 1, 128>}, {pipeline_mode = #tpu.pipeline_mode<synchronous>, transform_indices = @transform_5, window_bounds = array<i64: 1024, 128>}, {pipeline_mode = #tpu.pipeline_mode<synchronous>, transform_indices = @transform_6, window_bounds = array<i64: 1, 128>}, {pipeline_mode = #tpu.pipeline_mode<synchronous>, transform_indices = @transform_7, window_bounds = array<i64: 128, 128>}, {pipeline_mode = #tpu.pipeline_mode<synchronous>, transform_indices = @transform_8, window_bounds = array<i64: 1, 128>}, {pipeline_mode = #tpu.pipeline_mode<synchronous>, transform_indices = @transform_9, window_bounds = array<i64: 128, 128>}, {pipeline_mode = #tpu.pipeline_mode<synchronous>, transform_indices = @transform_10, window_bounds = array<i64: 1, 128>}, {transform_indices = @transform_11, window_bounds = array<i64: 8, 128>}]} {
    %c0 = arith.constant 0 : index
    %c0_0 = arith.constant 0 : index
    %0 = vector.load %arg1[%c0, %c0_0] : memref<256x32xbf16, #tpu.memory_space<vmem>>, vector<256x32xbf16>
    %cst = arith.constant 0.000000e+00 : bf16
    %1 = vector.broadcast %cst : bf16 to vector<8x32xbf16>
    %2 = tpu.concatenate %0, %1 in 0 : vector<256x32xbf16>, vector<8x32xbf16> -> vector<264x32xbf16>
    %cst_1 = arith.constant 0.000000e+00 : f32
    %3 = vector.broadcast %cst_1 : f32 to vector<256x256xf32>
    %4 = vector.extract_strided_slice %2 {offsets = [0, 0], sizes = [256, 32], strides = [1, 1]} : vector<264x32xbf16> to vector<256x32xbf16>
    %c0_2 = arith.constant 0 : index
    %c0_3 = arith.constant 0 : index
    %c0_4 = arith.constant 0 : index
    %5 = vector.load %arg2[%c0_2, %c0_3, %c0_4] : memref<5x32x256xbf16, #tpu.memory_space<vmem>>, vector<1x32x256xbf16>
    %6 = vector.shape_cast %5 : vector<1x32x256xbf16> to vector<32x256xbf16>
    %cst_5 = arith.constant dense<0.000000e+00> : vector<256x256xf32>
    %7 = tpu.matmul %4, %6, %cst_5 {dimension_numbers = #tpu.dot_dimension_numbers<[1], [0], [0], [1], [0, 0, 1, 1], [], []>} : vector<256x32xbf16>, vector<32x256xbf16>, vector<256x256xf32> -> vector<256x256xf32>
    %8 = arith.addf %3, %7 : vector<256x256xf32>
    %9 = vector.extract_strided_slice %2 {offsets = [1, 0], sizes = [256, 32], strides = [1, 1]} : vector<264x32xbf16> to vector<256x32xbf16>
    %c1 = arith.constant 1 : index
    %c0_6 = arith.constant 0 : index
    %c0_7 = arith.constant 0 : index
    %10 = vector.load %arg2[%c1, %c0_6, %c0_7] : memref<5x32x256xbf16, #tpu.memory_space<vmem>>, vector<1x32x256xbf16>
    %11 = vector.shape_cast %10 : vector<1x32x256xbf16> to vector<32x256xbf16>
    %cst_8 = arith.constant dense<0.000000e+00> : vector<256x256xf32>
    %12 = tpu.matmul %9, %11, %cst_8 {dimension_numbers = #tpu.dot_dimension_numbers<[1], [0], [0], [1], [0, 0, 1, 1], [], []>} : vector<256x32xbf16>, vector<32x256xbf16>, vector<256x256xf32> -> vector<256x256xf32>
    %13 = arith.addf %8, %12 : vector<256x256xf32>
    %14 = vector.extract_strided_slice %2 {offsets = [2, 0], sizes = [256, 32], strides = [1, 1]} : vector<264x32xbf16> to vector<256x32xbf16>
    %c2 = arith.constant 2 : index
    %c0_9 = arith.constant 0 : index
    %c0_10 = arith.constant 0 : index
    %15 = vector.load %arg2[%c2, %c0_9, %c0_10] : memref<5x32x256xbf16, #tpu.memory_space<vmem>>, vector<1x32x256xbf16>
    %16 = vector.shape_cast %15 : vector<1x32x256xbf16> to vector<32x256xbf16>
    %cst_11 = arith.constant dense<0.000000e+00> : vector<256x256xf32>
    %17 = tpu.matmul %14, %16, %cst_11 {dimension_numbers = #tpu.dot_dimension_numbers<[1], [0], [0], [1], [0, 0, 1, 1], [], []>} : vector<256x32xbf16>, vector<32x256xbf16>, vector<256x256xf32> -> vector<256x256xf32>
    %18 = arith.addf %13, %17 : vector<256x256xf32>
    %19 = vector.extract_strided_slice %2 {offsets = [3, 0], sizes = [256, 32], strides = [1, 1]} : vector<264x32xbf16> to vector<256x32xbf16>
    %c3 = arith.constant 3 : index
    %c0_12 = arith.constant 0 : index
    %c0_13 = arith.constant 0 : index
    %20 = vector.load %arg2[%c3, %c0_12, %c0_13] : memref<5x32x256xbf16, #tpu.memory_space<vmem>>, vector<1x32x256xbf16>
    %21 = vector.shape_cast %20 : vector<1x32x256xbf16> to vector<32x256xbf16>
    %cst_14 = arith.constant dense<0.000000e+00> : vector<256x256xf32>
    %22 = tpu.matmul %19, %21, %cst_14 {dimension_numbers = #tpu.dot_dimension_numbers<[1], [0], [0], [1], [0, 0, 1, 1], [], []>} : vector<256x32xbf16>, vector<32x256xbf16>, vector<256x256xf32> -> vector<256x256xf32>
    %23 = arith.addf %18, %22 : vector<256x256xf32>
    %24 = vector.extract_strided_slice %2 {offsets = [4, 0], sizes = [256, 32], strides = [1, 1]} : vector<264x32xbf16> to vector<256x32xbf16>
    %c4 = arith.constant 4 : index
    %c0_15 = arith.constant 0 : index
    %c0_16 = arith.constant 0 : index
    %25 = vector.load %arg2[%c4, %c0_15, %c0_16] : memref<5x32x256xbf16, #tpu.memory_space<vmem>>, vector<1x32x256xbf16>
    %26 = vector.shape_cast %25 : vector<1x32x256xbf16> to vector<32x256xbf16>
    %cst_17 = arith.constant dense<0.000000e+00> : vector<256x256xf32>
    %27 = tpu.matmul %24, %26, %cst_17 {dimension_numbers = #tpu.dot_dimension_numbers<[1], [0], [0], [1], [0, 0, 1, 1], [], []>} : vector<256x32xbf16>, vector<32x256xbf16>, vector<256x256xf32> -> vector<256x256xf32>
    %28 = arith.addf %23, %27 : vector<256x256xf32>
    %29 = vector.extract_strided_slice %28 {offsets = [0, 0], sizes = [256, 128], strides = [1, 1]} : vector<256x256xf32> to vector<256x128xf32>
    %30 = vector.extract_strided_slice %28 {offsets = [0, 128], sizes = [256, 128], strides = [1, 1]} : vector<256x256xf32> to vector<256x128xf32>
    %31 = arith.maximumf %29, %30 : vector<256x128xf32>
    %c0_18 = arith.constant 0 : index
    %c0_19 = arith.constant 0 : index
    %32 = vector.load %arg3[%c0_18, %c0_19] : memref<1x128xf32, #tpu.memory_space<vmem>>, vector<1x128xf32>
    %33 = vector.broadcast %32 : vector<1x128xf32> to vector<256x128xf32>
    %34 = arith.addf %31, %33 : vector<256x128xf32>
    %cst_20 = arith.constant 0.000000e+00 : f32
    %35 = vector.broadcast %cst_20 : f32 to vector<256x128xf32>
    %36 = arith.maximumf %34, %35 : vector<256x128xf32>
    %37 = vector.shape_cast %36 : vector<256x128xf32> to vector<128x256xf32>
    %38 = vector.extract_strided_slice %37 {offsets = [0, 0], sizes = [128, 128], strides = [1, 1]} : vector<128x256xf32> to vector<128x128xf32>
    %39 = vector.extract_strided_slice %37 {offsets = [0, 128], sizes = [128, 128], strides = [1, 1]} : vector<128x256xf32> to vector<128x128xf32>
    %40 = arith.maximumf %38, %39 : vector<128x128xf32>
    %41 = arith.truncf %40 : vector<128x128xf32> to vector<128x128xbf16>
    %cst_21 = arith.constant 0.000000e+00 : bf16
    %42 = vector.broadcast %cst_21 : bf16 to vector<8x128xbf16>
    %43 = tpu.concatenate %41, %42 in 0 : vector<128x128xbf16>, vector<8x128xbf16> -> vector<136x128xbf16>
    %cst_22 = arith.constant 0.000000e+00 : f32
    %44 = vector.broadcast %cst_22 : f32 to vector<128x256xf32>
    %45 = vector.extract_strided_slice %43 {offsets = [0, 0], sizes = [128, 128], strides = [1, 1]} : vector<136x128xbf16> to vector<128x128xbf16>
    %c0_23 = arith.constant 0 : index
    %c0_24 = arith.constant 0 : index
    %c0_25 = arith.constant 0 : index
    %46 = vector.load %arg4[%c0_23, %c0_24, %c0_25] : memref<5x128x256xbf16, #tpu.memory_space<vmem>>, vector<1x128x256xbf16>
    %47 = vector.shape_cast %46 : vector<1x128x256xbf16> to vector<128x256xbf16>
    %cst_26 = arith.constant dense<0.000000e+00> : vector<128x256xf32>
    %48 = tpu.matmul %45, %47, %cst_26 {dimension_numbers = #tpu.dot_dimension_numbers<[1], [0], [0], [1], [0, 0, 1, 1], [], []>} : vector<128x128xbf16>, vector<128x256xbf16>, vector<128x256xf32> -> vector<128x256xf32>
    %49 = arith.addf %44, %48 : vector<128x256xf32>
    %50 = vector.extract_strided_slice %43 {offsets = [1, 0], sizes = [128, 128], strides = [1, 1]} : vector<136x128xbf16> to vector<128x128xbf16>
    %c1_27 = arith.constant 1 : index
    %c0_28 = arith.constant 0 : index
    %c0_29 = arith.constant 0 : index
    %51 = vector.load %arg4[%c1_27, %c0_28, %c0_29] : memref<5x128x256xbf16, #tpu.memory_space<vmem>>, vector<1x128x256xbf16>
    %52 = vector.shape_cast %51 : vector<1x128x256xbf16> to vector<128x256xbf16>
    %cst_30 = arith.constant dense<0.000000e+00> : vector<128x256xf32>
    %53 = tpu.matmul %50, %52, %cst_30 {dimension_numbers = #tpu.dot_dimension_numbers<[1], [0], [0], [1], [0, 0, 1, 1], [], []>} : vector<128x128xbf16>, vector<128x256xbf16>, vector<128x256xf32> -> vector<128x256xf32>
    %54 = arith.addf %49, %53 : vector<128x256xf32>
    %55 = vector.extract_strided_slice %43 {offsets = [2, 0], sizes = [128, 128], strides = [1, 1]} : vector<136x128xbf16> to vector<128x128xbf16>
    %c2_31 = arith.constant 2 : index
    %c0_32 = arith.constant 0 : index
    %c0_33 = arith.constant 0 : index
    %56 = vector.load %arg4[%c2_31, %c0_32, %c0_33] : memref<5x128x256xbf16, #tpu.memory_space<vmem>>, vector<1x128x256xbf16>
    %57 = vector.shape_cast %56 : vector<1x128x256xbf16> to vector<128x256xbf16>
    %cst_34 = arith.constant dense<0.000000e+00> : vector<128x256xf32>
    %58 = tpu.matmul %55, %57, %cst_34 {dimension_numbers = #tpu.dot_dimension_numbers<[1], [0], [0], [1], [0, 0, 1, 1], [], []>} : vector<128x128xbf16>, vector<128x256xbf16>, vector<128x256xf32> -> vector<128x256xf32>
    %59 = arith.addf %54, %58 : vector<128x256xf32>
    %60 = vector.extract_strided_slice %43 {offsets = [3, 0], sizes = [128, 128], strides = [1, 1]} : vector<136x128xbf16> to vector<128x128xbf16>
    %c3_35 = arith.constant 3 : index
    %c0_36 = arith.constant 0 : index
    %c0_37 = arith.constant 0 : index
    %61 = vector.load %arg4[%c3_35, %c0_36, %c0_37] : memref<5x128x256xbf16, #tpu.memory_space<vmem>>, vector<1x128x256xbf16>
    %62 = vector.shape_cast %61 : vector<1x128x256xbf16> to vector<128x256xbf16>
    %cst_38 = arith.constant dense<0.000000e+00> : vector<128x256xf32>
    %63 = tpu.matmul %60, %62, %cst_38 {dimension_numbers = #tpu.dot_dimension_numbers<[1], [0], [0], [1], [0, 0, 1, 1], [], []>} : vector<128x128xbf16>, vector<128x256xbf16>, vector<128x256xf32> -> vector<128x256xf32>
    %64 = arith.addf %59, %63 : vector<128x256xf32>
    %65 = vector.extract_strided_slice %43 {offsets = [4, 0], sizes = [128, 128], strides = [1, 1]} : vector<136x128xbf16> to vector<128x128xbf16>
    %c4_39 = arith.constant 4 : index
    %c0_40 = arith.constant 0 : index
    %c0_41 = arith.constant 0 : index
    %66 = vector.load %arg4[%c4_39, %c0_40, %c0_41] : memref<5x128x256xbf16, #tpu.memory_space<vmem>>, vector<1x128x256xbf16>
    %67 = vector.shape_cast %66 : vector<1x128x256xbf16> to vector<128x256xbf16>
    %cst_42 = arith.constant dense<0.000000e+00> : vector<128x256xf32>
    %68 = tpu.matmul %65, %67, %cst_42 {dimension_numbers = #tpu.dot_dimension_numbers<[1], [0], [0], [1], [0, 0, 1, 1], [], []>} : vector<128x128xbf16>, vector<128x256xbf16>, vector<128x256xf32> -> vector<128x256xf32>
    %69 = arith.addf %64, %68 : vector<128x256xf32>
    %70 = vector.extract_strided_slice %69 {offsets = [0, 0], sizes = [128, 128], strides = [1, 1]} : vector<128x256xf32> to vector<128x128xf32>
    %71 = vector.extract_strided_slice %69 {offsets = [0, 128], sizes = [128, 128], strides = [1, 1]} : vector<128x256xf32> to vector<128x128xf32>
    %72 = arith.maximumf %70, %71 : vector<128x128xf32>
    %c0_43 = arith.constant 0 : index
    %c0_44 = arith.constant 0 : index
    %73 = vector.load %arg5[%c0_43, %c0_44] : memref<1x128xf32, #tpu.memory_space<vmem>>, vector<1x128xf32>
    %74 = vector.broadcast %73 : vector<1x128xf32> to vector<128x128xf32>
    %75 = arith.addf %72, %74 : vector<128x128xf32>
    %cst_45 = arith.constant 0.000000e+00 : f32
    %76 = vector.broadcast %cst_45 : f32 to vector<128x128xf32>
    %77 = arith.maximumf %75, %76 : vector<128x128xf32>
    %78 = vector.shape_cast %77 : vector<128x128xf32> to vector<64x256xf32>
    %79 = vector.extract_strided_slice %78 {offsets = [0, 0], sizes = [64, 128], strides = [1, 1]} : vector<64x256xf32> to vector<64x128xf32>
    %80 = vector.extract_strided_slice %78 {offsets = [0, 128], sizes = [64, 128], strides = [1, 1]} : vector<64x256xf32> to vector<64x128xf32>
    %81 = arith.maximumf %79, %80 : vector<64x128xf32>
    %82 = vector.shape_cast %81 : vector<64x128xf32> to vector<8x1024xf32>
    %83 = arith.truncf %82 : vector<8x1024xf32> to vector<8x1024xbf16>
    %c0_46 = arith.constant 0 : index
    %c0_47 = arith.constant 0 : index
    %84 = vector.load %arg6[%c0_46, %c0_47] : memref<1024x128xbf16, #tpu.memory_space<vmem>>, vector<1024x128xbf16>
    %cst_48 = arith.constant dense<0.000000e+00> : vector<8x128xf32>
    %85 = tpu.matmul %83, %84, %cst_48 {dimension_numbers = #tpu.dot_dimension_numbers<[1], [0], [0], [1], [0, 0, 1, 1], [], []>} : vector<8x1024xbf16>, vector<1024x128xbf16>, vector<8x128xf32> -> vector<8x128xf32>
    %c0_49 = arith.constant 0 : index
    %c0_50 = arith.constant 0 : index
    %86 = vector.load %arg7[%c0_49, %c0_50] : memref<1x128xf32, #tpu.memory_space<vmem>>, vector<1x128xf32>
    %87 = vector.broadcast %86 : vector<1x128xf32> to vector<8x128xf32>
    %88 = arith.addf %85, %87 : vector<8x128xf32>
    %cst_51 = arith.constant 0.000000e+00 : f32
    %89 = vector.broadcast %cst_51 : f32 to vector<8x128xf32>
    %90 = arith.maximumf %88, %89 : vector<8x128xf32>
    %91 = arith.truncf %90 : vector<8x128xf32> to vector<8x128xbf16>
    %c0_52 = arith.constant 0 : index
    %c0_53 = arith.constant 0 : index
    %92 = vector.load %arg8[%c0_52, %c0_53] : memref<128x128xbf16, #tpu.memory_space<vmem>>, vector<128x128xbf16>
    %cst_54 = arith.constant dense<0.000000e+00> : vector<8x128xf32>
    %93 = tpu.matmul %91, %92, %cst_54 {dimension_numbers = #tpu.dot_dimension_numbers<[1], [0], [0], [1], [0, 0, 1, 1], [], []>} : vector<8x128xbf16>, vector<128x128xbf16>, vector<8x128xf32> -> vector<8x128xf32>
    %c0_55 = arith.constant 0 : index
    %c0_56 = arith.constant 0 : index
    %94 = vector.load %arg9[%c0_55, %c0_56] : memref<1x128xf32, #tpu.memory_space<vmem>>, vector<1x128xf32>
    %95 = vector.broadcast %94 : vector<1x128xf32> to vector<8x128xf32>
    %96 = arith.addf %93, %95 : vector<8x128xf32>
    %cst_57 = arith.constant 0.000000e+00 : f32
    %97 = vector.broadcast %cst_57 : f32 to vector<8x128xf32>
    %98 = arith.maximumf %96, %97 : vector<8x128xf32>
    %99 = arith.truncf %98 : vector<8x128xf32> to vector<8x128xbf16>
    %c0_58 = arith.constant 0 : index
    %c0_59 = arith.constant 0 : index
    %100 = vector.load %arg10[%c0_58, %c0_59] : memref<128x128xbf16, #tpu.memory_space<vmem>>, vector<128x128xbf16>
    %cst_60 = arith.constant dense<0.000000e+00> : vector<8x128xf32>
    %101 = tpu.matmul %99, %100, %cst_60 {dimension_numbers = #tpu.dot_dimension_numbers<[1], [0], [0], [1], [0, 0, 1, 1], [], []>} : vector<8x128xbf16>, vector<128x128xbf16>, vector<8x128xf32> -> vector<8x128xf32>
    %c0_61 = arith.constant 0 : index
    %c0_62 = arith.constant 0 : index
    %102 = vector.load %arg11[%c0_61, %c0_62] : memref<1x128xf32, #tpu.memory_space<vmem>>, vector<1x128xf32>
    %103 = vector.broadcast %102 : vector<1x128xf32> to vector<8x128xf32>
    %104 = arith.addf %101, %103 : vector<8x128xf32>
    %c0_63 = arith.constant 0 : index
    %c0_64 = arith.constant 0 : index
    %105 = vector.load %arg12[%c0_63, %c0_64] : memref<8x128xf32, #tpu.memory_space<vmem>>, vector<8x128xf32>
    tpu.vector_store %arg12[%c0_63, %c0_64], %104 {strides = array<i32>} : memref<8x128xf32, #tpu.memory_space<vmem>>, vector<8x128xf32>,
    return
  }
  func.func @transform_0(%arg0: i32) -> (i32, i32) {
    %c0_i32 = arith.constant 0 : i32
    %c0_i32_0 = arith.constant 0 : i32
    return %arg0, %c0_i32 : i32, i32
  }
  func.func @transform_1(%arg0: i32) -> (i32, i32, i32) {
    %c0_i32 = arith.constant 0 : i32
    %c0_i32_0 = arith.constant 0 : i32
    %c0_i32_1 = arith.constant 0 : i32
    %c0_i32_2 = arith.constant 0 : i32
    return %c0_i32, %c0_i32_0, %c0_i32_1 : i32, i32, i32
  }
  func.func @transform_2(%arg0: i32) -> (i32, i32) {
    %c0_i32 = arith.constant 0 : i32
    %c0_i32_0 = arith.constant 0 : i32
    %c0_i32_1 = arith.constant 0 : i32
    return %c0_i32, %c0_i32_0 : i32, i32
  }
  func.func @transform_3(%arg0: i32) -> (i32, i32, i32) {
    %c0_i32 = arith.constant 0 : i32
    %c0_i32_0 = arith.constant 0 : i32
    %c0_i32_1 = arith.constant 0 : i32
    %c0_i32_2 = arith.constant 0 : i32
    return %c0_i32, %c0_i32_0, %c0_i32_1 : i32, i32, i32
  }
  func.func @transform_4(%arg0: i32) -> (i32, i32) {
    %c0_i32 = arith.constant 0 : i32
    %c0_i32_0 = arith.constant 0 : i32
    %c0_i32_1 = arith.constant 0 : i32
    return %c0_i32, %c0_i32_0 : i32, i32
  }
  func.func @transform_5(%arg0: i32) -> (i32, i32) {
    %c0_i32 = arith.constant 0 : i32
    %c0_i32_0 = arith.constant 0 : i32
    %c0_i32_1 = arith.constant 0 : i32
    return %c0_i32, %c0_i32_0 : i32, i32
  }
  func.func @transform_6(%arg0: i32) -> (i32, i32) {
    %c0_i32 = arith.constant 0 : i32
    %c0_i32_0 = arith.constant 0 : i32
    %c0_i32_1 = arith.constant 0 : i32
    return %c0_i32, %c0_i32_0 : i32, i32
  }
  func.func @transform_7(%arg0: i32) -> (i32, i32) {
    %c0_i32 = arith.constant 0 : i32
    %c0_i32_0 = arith.constant 0 : i32
    %c0_i32_1 = arith.constant 0 : i32
    return %c0_i32, %c0_i32_0 : i32, i32
  }
  func.func @transform_8(%arg0: i32) -> (i32, i32) {
    %c0_i32 = arith.constant 0 : i32
    %c0_i32_0 = arith.constant 0 : i32
    %c0_i32_1 = arith.constant 0 : i32
    return %c0_i32, %c0_i32_0 : i32, i32
  }
  func.func @transform_9(%arg0: i32) -> (i32, i32) {
    %c0_i32 = arith.constant 0 : i32
    %c0_i32_0 = arith.constant 0 : i32
    %c0_i32_1 = arith.constant 0 : i32
    return %c0_i32, %c0_i32_0 : i32, i32
  }
  func.func @transform_10(%arg0: i32) -> (i32, i32) {
    %c0_i32 = arith.constant 0 : i32
    %c0_i32_0 = arith.constant 0 : i32
    %c0_i32_1 = arith.constant 0 : i32
    return %c0_i32, %c0_i32_0 : i32, i32
  }
  func.func @transform_11(%arg0: i32) -> (i32, i32) {
    %c0_i32 = arith.constant 0 : i32
    %c0_i32_0 = arith.constant 0 : i32
    return %arg0, %c0_i32 : i32, i32
  }
}

</mosaic_0001>

<llo_original>
// kernel: lenet_forward.1
$region0: #{lenet_forward.1}
  #allocation0 [shape = 'u32[]', space=smem, size = 0x4, offset = 0x4, fixed_abs, tag = 'smem constant byte address 0x4 - core index']
  #allocation1 [shape = 'u32[144,128]{1,0:T(1,128)}', space=vmem, size = 0x12000, scoped, tag = 'internal scratch']
  %s0 = inlined_call_operand.vmem [shape: bf16[512,32], index: 0, kind: input, shape index: {}]
  %s1 = inlined_call_operand.hbm [shape: bf16[5,32,256], index: 1, kind: input, shape index: {}]
  %s2 = inlined_call_operand.vmem [shape: f32[1,128], index: 2, kind: input, shape index: {}]
  %s3 = inlined_call_operand.hbm [shape: bf16[5,128,256], index: 3, kind: input, shape index: {}]
  %s4 = inlined_call_operand.vmem [shape: f32[1,128], index: 4, kind: input, shape index: {}]
  %s5 = inlined_call_operand.vmem [shape: bf16[1024,128], index: 5, kind: input, shape index: {}]
  %s6 = inlined_call_operand.vmem [shape: f32[1,128], index: 6, kind: input, shape index: {}]
  %s7 = inlined_call_operand.hbm [shape: bf16[128,128], index: 7, kind: input, shape index: {}]
  %s8 = inlined_call_operand.vmem [shape: f32[1,128], index: 8, kind: input, shape index: {}]
  %s9 = inlined_call_operand.hbm [shape: bf16[128,128], index: 9, kind: input, shape index: {}]
  %s10 = inlined_call_operand.vmem [shape: f32[1,128], index: 10, kind: input, shape index: {}]
  %s11 = inlined_call_operand.vmem [shape: f32[16,128], index: 11, kind: output, shape index: {}]
  %s12 = sld [smem:[#allocation0]]
  $region93: #{lenet_forward.1} parent=0
    _
  %s14 = ssub.s32 1, %s12
  %s15 = scalar_select 0, %s14, %s12
  $region1: #{lenet_forward.1} parent=0
    #allocation2 [shape = 'u8[81920]{0}', space=vmem, size = 0x14000, scoped, tag = 'input window, operand 1, single buffered']
    #allocation3 [shape = 's32[2]{0}', space=sflag, size = 0x8, scoped, tag = 'scoped memory for lenet_forward.1']
    #allocation4 [shape = 'u8[327680]{0}', space=vmem, size = 0x50000, scoped, tag = 'input window, operand 3, single buffered']
    #allocation5 [shape = 's32[1]{0}', space=sflag, size = 0x4, scoped, tag = 'scoped memory for lenet_forward.1']
    #allocation6 [shape = 'u8[32768]{0}', space=vmem, size = 0x8000, scoped, tag = 'input window, operand 7, single buffered']
    #allocation7 [shape = 'u8[32768]{0}', space=vmem, size = 0x8000, scoped, tag = 'input window, operand 9, single buffered']
    #allocation8 [shape = 's32[1]{0}', space=sflag, size = 0x4, scoped, tag = 'scoped memory for lenet_forward.1']
    %16 = vsyncpa [#allocation3], 0
    %17 = vsyncpa [#allocation5], 0
    %18 = vsyncpa [#allocation8], 0
    loop: start=0, step=1, limit=4
    $region2: #{lenet_forward.1} parent=1 // loop_pre_header
      _
    $region3: #{lenet_forward.1} parent=1 // loop_header
      %s20 = sphi 0, %s24
      %p21 = scmp.ge.s32.totalorder %s20, 4
      %s30 = sphi 0, %s32
      %s33 = sphi 0, %s30
      %s34 = sphi 0, %s33
      %s50 = sphi 0, %s34
      %s54 = sphi 0, %s54
      %s56 = sphi 0, %s54
      %s57 = sphi 0, %s56
      %s71 = sphi 0, %s57
      %s75 = sphi 0, %s75
      %s77 = sphi 0, %s75
      %s78 = sphi 0, %s77
      %s92 = sphi 0, %s78
      %s96 = sphi 0, %s96
      %s98 = sphi 0, %s96
      %s99 = sphi 0, %s98
      %s113 = sphi 0, %s99
      %s117 = sphi 0, %s117
      %s119 = sphi 0, %s117
      %s120 = sphi 0, %s119
      %s134 = sphi 0, %s120
      %s138 = sphi 0, %s138
      %s140 = sphi 0, %s138
      %s141 = sphi 0, %s140
      %s155 = sphi 0, %s141
      %s159 = sphi 0, %s159
      %s161 = sphi 0, %s159
      %s162 = sphi 0, %s161
      %s176 = sphi 0, %s162
      %s180 = sphi 0, %s180
      %s182 = sphi 0, %s180
      %s183 = sphi 0, %s182
      %s197 = sphi 0, %s183
      %s201 = sphi 0, %s201
      %s203 = sphi 0, %s201
      %s204 = sphi 0, %s203
      %s218 = sphi 0, %s204
      %s222 = sphi 0, %s222
      %s224 = sphi 0, %s222
      %s225 = sphi 0, %s224
      %s239 = sphi 0, %s225
      %s243 = sphi 0, %s243
      %s245 = sphi 0, %s243
      %s246 = sphi 0, %s245
      %s260 = sphi 0, %s246
      %s266 = sphi 0, %s268
      %s269 = sphi 0, %s266
      %s270 = sphi 0, %s269
      %s286 = sphi 0, %s270
    $region4: #{lenet_forward.1} parent=1 // loop_header_branch
      %23 = sbr.rel (%p21) target = $region8
    $region5: #{lenet_forward.1} parent=1 // loop_body
      %s25 = ssub.s32 %s20, 1
      %s26 = ssub.s32 %s20, 2
      %s27 = sadd.s32 %s20, 1
      %s28 = ssub.s32 %s20, %s27
      %p29 = scmp.eq.s32.totalorder %s28, 0
      %s31 = sadd.s32 %s30, 1
      %s32 = scalar_select %p29, %s30, %s31
      %p35 = pneg %p29
      %p36 = scmp.eq.s32.totalorder %s20, 1
      %p37 = por %p35, %p36
      %p38 = scmp.ne.s32.totalorder %s30, %s33
      %p39 = scmp.eq.s32.totalorder %s20, 0
      %p40 = por %p38, %p39
      %p41 = scmp.ne.s32.totalorder %s30, %s33
      %p42 = scmp.eq.s32.totalorder %s25, 1
      %p43 = por %p41, %p42
      %p44 = scmp.ne.s32.totalorder %s33, %s34
      %p45 = scmp.eq.s32.totalorder %s25, 0
      %p46 = por %p44, %p45
      %p47 = scmp.ne.s32.totalorder %s33, %s34
      %p48 = scmp.eq.s32.totalorder %s26, 1
      %p49 = por %p47, %p48
      %p51 = scmp.ne.s32.totalorder %s34, %s50
      %p52 = scmp.eq.s32.totalorder %s26, 0
      %p53 = por %p51, %p52
      %s55 = sadd.s32 %s54, 1
      %p58 = scmp.eq.s32.totalorder %s20, 1
      %p59 = scmp.ne.s32.totalorder %s54, %s56
      %p60 = scmp.eq.s32.totalorder %s20, 0
      %p61 = por %p59, %p60
      %p62 = scmp.ne.s32.totalorder %s54, %s56
      %p63 = scmp.eq.s32.totalorder %s25, 1
      %p64 = por %p62, %p63
      %p65 = scmp.ne.s32.totalorder %s56, %s57
      %p66 = scmp.eq.s32.totalorder %s25, 0
      %p67 = por %p65, %p66
      %p68 = scmp.ne.s32.totalorder %s56, %s57
      %p69 = scmp.eq.s32.totalorder %s26, 1
      %p70 = por %p68, %p69
      %p72 = scmp.ne.s32.totalorder %s57, %s71
      %p73 = scmp.eq.s32.totalorder %s26, 0
      %p74 = por %p72, %p73
      %s76 = sadd.s32 %s75, 1
      %p79 = scmp.eq.s32.totalorder %s20, 1
      %p80 = scmp.ne.s32.totalorder %s75, %s77
      %p81 = scmp.eq.s32.totalorder %s20, 0
      %p82 = por %p80, %p81
      %p83 = scmp.ne.s32.totalorder %s75, %s77
      %p84 = scmp.eq.s32.totalorder %s25, 1
      %p85 = por %p83, %p84
      %p86 = scmp.ne.s32.totalorder %s77, %s78
      %p87 = scmp.eq.s32.totalorder %s25, 0
      %p88 = por %p86, %p87
      %p89 = scmp.ne.s32.totalorder %s77, %s78
      %p90 = scmp.eq.s32.totalorder %s26, 1
      %p91 = por %p89, %p90
      %p93 = scmp.ne.s32.totalorder %s78, %s92
      %p94 = scmp.eq.s32.totalorder %s26, 0
      %p95 = por %p93, %p94
      %s97 = sadd.s32 %s96, 1
      %p100 = scmp.eq.s32.totalorder %s20, 1
      %p101 = scmp.ne.s32.totalorder %s96, %s98
      %p102 = scmp.eq.s32.totalorder %s20, 0
      %p103 = por %p101, %p102
      %p104 = scmp.ne.s32.totalorder %s96, %s98
      %p105 = scmp.eq.s32.totalorder %s25, 1
      %p106 = por %p104, %p105
      %p107 = scmp.ne.s32.totalorder %s98, %s99
      %p108 = scmp.eq.s32.totalorder %s25, 0
      %p109 = por %p107, %p108
      %p110 = scmp.ne.s32.totalorder %s98, %s99
      %p111 = scmp.eq.s32.totalorder %s26, 1
      %p112 = por %p110, %p111
      %p114 = scmp.ne.s32.totalorder %s99, %s113
      %p115 = scmp.eq.s32.totalorder %s26, 0
      %p116 = por %p114, %p115
      %s118 = sadd.s32 %s117, 1
      %p121 = scmp.eq.s32.totalorder %s20, 1
      %p122 = scmp.ne.s32.totalorder %s117, %s119
      %p123 = scmp.eq.s32.totalorder %s20, 0
      %p124 = por %p122, %p123
      %p125 = scmp.ne.s32.totalorder %s117, %s119
      %p126 = scmp.eq.s32.totalorder %s25, 1
      %p127 = por %p125, %p126
      %p128 = scmp.ne.s32.totalorder %s119, %s120
      %p129 = scmp.eq.s32.totalorder %s25, 0
      %p130 = por %p128, %p129
      %p131 = scmp.ne.s32.totalorder %s119, %s120
      %p132 = scmp.eq.s32.totalorder %s26, 1
      %p133 = por %p131, %p132
      %p135 = scmp.ne.s32.totalorder %s120, %s134
      %p136 = scmp.eq.s32.totalorder %s26, 0
      %p137 = por %p135, %p136
      %s139 = sadd.s32 %s138, 1
      %p142 = scmp.eq.s32.totalorder %s20, 1
      %p143 = scmp.ne.s32.totalorder %s138, %s140
      %p144 = scmp.eq.s32.totalorder %s20, 0
      %p145 = por %p143, %p144
      %p146 = scmp.ne.s32.totalorder %s138, %s140
      %p147 = scmp.eq.s32.totalorder %s25, 1
      %p148 = por %p146, %p147
      %p149 = scmp.ne.s32.totalorder %s140, %s141
      %p150 = scmp.eq.s32.totalorder %s25, 0
      %p151 = por %p149, %p150
      %p152 = scmp.ne.s32.totalorder %s140, %s141
      %p153 = scmp.eq.s32.totalorder %s26, 1
      %p154 = por %p152, %p153
      %p156 = scmp.ne.s32.totalorder %s141, %s155
      %p157 = scmp.eq.s32.totalorder %s26, 0
      %p158 = por %p156, %p157
      %s160 = sadd.s32 %s159, 1
      %p163 = scmp.eq.s32.totalorder %s20, 1
      %p164 = scmp.ne.s32.totalorder %s159, %s161
      %p165 = scmp.eq.s32.totalorder %s20, 0
      %p166 = por %p164, %p165
      %p167 = scmp.ne.s32.totalorder %s159, %s161
      %p168 = scmp.eq.s32.totalorder %s25, 1
      %p169 = por %p167, %p168
      %p170 = scmp.ne.s32.totalorder %s161, %s162
      %p171 = scmp.eq.s32.totalorder %s25, 0
      %p172 = por %p170, %p171
      %p173 = scmp.ne.s32.totalorder %s161, %s162
      %p174 = scmp.eq.s32.totalorder %s26, 1
      %p175 = por %p173, %p174
      %p177 = scmp.ne.s32.totalorder %s162, %s176
      %p178 = scmp.eq.s32.totalorder %s26, 0
      %p179 = por %p177, %p178
      %s181 = sadd.s32 %s180, 1
      %p184 = scmp.eq.s32.totalorder %s20, 1
      %p185 = scmp.ne.s32.totalorder %s180, %s182
      %p186 = scmp.eq.s32.totalorder %s20, 0
      %p187 = por %p185, %p186
      %p188 = scmp.ne.s32.totalorder %s180, %s182
      %p189 = scmp.eq.s32.totalorder %s25, 1
      %p190 = por %p188, %p189
      %p191 = scmp.ne.s32.totalorder %s182, %s183
      %p192 = scmp.eq.s32.totalorder %s25, 0
      %p193 = por %p191, %p192
      %p194 = scmp.ne.s32.totalorder %s182, %s183
      %p195 = scmp.eq.s32.totalorder %s26, 1
      %p196 = por %p194, %p195
      %p198 = scmp.ne.s32.totalorder %s183, %s197
      %p199 = scmp.eq.s32.totalorder %s26, 0
      %p200 = por %p198, %p199
      %s202 = sadd.s32 %s201, 1
      %p205 = scmp.eq.s32.totalorder %s20, 1
      %p206 = scmp.ne.s32.totalorder %s201, %s203
      %p207 = scmp.eq.s32.totalorder %s20, 0
      %p208 = por %p206, %p207
      %p209 = scmp.ne.s32.totalorder %s201, %s203
      %p210 = scmp.eq.s32.totalorder %s25, 1
      %p211 = por %p209, %p210
      %p212 = scmp.ne.s32.totalorder %s203, %s204
      %p213 = scmp.eq.s32.totalorder %s25, 0
      %p214 = por %p212, %p213
      %p215 = scmp.ne.s32.totalorder %s203, %s204
      %p216 = scmp.eq.s32.totalorder %s26, 1
      %p217 = por %p215, %p216
      %p219 = scmp.ne.s32.totalorder %s204, %s218
      %p220 = scmp.eq.s32.totalorder %s26, 0
      %p221 = por %p219, %p220
      %s223 = sadd.s32 %s222, 1
      %p226 = scmp.eq.s32.totalorder %s20, 1
      %p227 = scmp.ne.s32.totalorder %s222, %s224
      %p228 = scmp.eq.s32.totalorder %s20, 0
      %p229 = por %p227, %p228
      %p230 = scmp.ne.s32.totalorder %s222, %s224
      %p231 = scmp.eq.s32.totalorder %s25, 1
      %p232 = por %p230, %p231
      %p233 = scmp.ne.s32.totalorder %s224, %s225
      %p234 = scmp.eq.s32.totalorder %s25, 0
      %p235 = por %p233, %p234
      %p236 = scmp.ne.s32.totalorder %s224, %s225
      %p237 = scmp.eq.s32.totalorder %s26, 1
      %p238 = por %p236, %p237
      %p240 = scmp.ne.s32.totalorder %s225, %s239
      %p241 = scmp.eq.s32.totalorder %s26, 0
      %p242 = por %p240, %p241
      %s244 = sadd.s32 %s243, 1
      %p247 = scmp.eq.s32.totalorder %s20, 1
      %p248 = scmp.ne.s32.totalorder %s243, %s245
      %p249 = scmp.eq.s32.totalorder %s20, 0
      %p250 = por %p248, %p249
      %p251 = scmp.ne.s32.totalorder %s243, %s245
      %p252 = scmp.eq.s32.totalorder %s25, 1
      %p253 = por %p251, %p252
      %p254 = scmp.ne.s32.totalorder %s245, %s246
      %p255 = scmp.eq.s32.totalorder %s25, 0
      %p256 = por %p254, %p255
      %p257 = scmp.ne.s32.totalorder %s245, %s246
      %p258 = scmp.eq.s32.totalorder %s26, 1
      %p259 = por %p257, %p258
      %p261 = scmp.ne.s32.totalorder %s246, %s260
      %p262 = scmp.eq.s32.totalorder %s26, 0
      %p263 = por %p261, %p262
      %s264 = ssub.s32 %s20, %s27
      %p265 = scmp.eq.s32.totalorder %s264, 0
      %s267 = sadd.s32 %s266, 1
      %s268 = scalar_select %p265, %s266, %s267
      %p271 = pneg %p265
      %p272 = scmp.eq.s32.totalorder %s20, 1
      %p273 = por %p271, %p272
      %p274 = scmp.ne.s32.totalorder %s266, %s269
      %p275 = scmp.eq.s32.totalorder %s20, 0
      %p276 = por %p274, %p275
      %p277 = scmp.ne.s32.totalorder %s266, %s269
      %p278 = scmp.eq.s32.totalorder %s25, 1
      %p279 = por %p277, %p278
      %p280 = scmp.ne.s32.totalorder %s269, %s270
      %p281 = scmp.eq.s32.totalorder %s25, 0
      %p282 = por %p280, %p281
      %p283 = scmp.ne.s32.totalorder %s269, %s270
      %p284 = scmp.eq.s32.totalorder %s26, 1
      %p285 = por %p283, %p284
      %p287 = scmp.ne.s32.totalorder %s270, %s286
      %p288 = scmp.eq.s32.totalorder %s26, 0
      %p289 = por %p287, %p288
      %p290 = scmp.le.s32.totalorder 1, %s20
      %p291 = scmp.lt.s32.totalorder %s20, 3
      %p292 = pnand %p290, %p291
      %p293 = pneg %p292
      // Predicated region
      $region9: #{lenet_forward.1} parent=5 // pred_check
        _
      $region10: #{lenet_forward.1} parent=5 // pred_check_branch
        %295 = sbr.rel (%p292) target = $region12
      $region11: #{lenet_forward.1} parent=5 // pred_region
        %s296 = ssub.s32 %s20, 1
        // Predicated region
        $region13: #{lenet_forward.1} parent=11 // pred_check
          %p297 = pneg %p67
        $region14: #{lenet_forward.1} parent=11 // pred_check_branch
          %299 = sbr.rel (%p297) target = $region16
        $region15: #{lenet_forward.1} parent=11 // pred_region
          %s301 = ssub.s32 2560, 2560
          %302 = vsyncadd [#allocation3], %s301
          %s303 = sshll.u32 [#allocation2], 4
          %s304 = int_to_ptr.vmem [resolvable:$true] %s303
          %309 = dma.hbm_to_vmem [thread:$0]  %s1, 2560, %s304, [#allocation3], 128, 128, 8
        $region16: #{lenet_forward.1} parent=11 // pred_fallthru
          _
        // Predicated region
        $region17: #{lenet_forward.1} parent=11 // pred_check
          %p310 = pneg %p88
        $region18: #{lenet_forward.1} parent=11 // pred_check_branch
          %312 = sbr.rel (%p310) target = $region20
        $region19: #{lenet_forward.1} parent=11 // pred_region
          _
        $region20: #{lenet_forward.1} parent=11 // pred_fallthru
          _
        // Predicated region
        $region21: #{lenet_forward.1} parent=11 // pred_check
          %p313 = pneg %p109
        $region22: #{lenet_forward.1} parent=11 // pred_check_branch
          %315 = sbr.rel (%p313) target = $region24
        $region23: #{lenet_forward.1} parent=11 // pred_region
          %s317 = ssub.s32 10240, 10240
          %318 = vsyncadd [#allocation5], %s317
          %s319 = sshll.u32 [#allocation4], 4
          %s320 = int_to_ptr.vmem [resolvable:$true] %s319
          %325 = dma.hbm_to_vmem [thread:$0]  %s3, 10240, %s320, [#allocation5], 128, 128, 8
        $region24: #{lenet_forward.1} parent=11 // pred_fallthru
          _
        // Predicated region
        $region25: #{lenet_forward.1} parent=11 // pred_check
          %p326 = pneg %p130
        $region26: #{lenet_forward.1} parent=11 // pred_check_branch
          %328 = sbr.rel (%p326) target = $region28
        $region27: #{lenet_forward.1} parent=11 // pred_region
          _
        $region28: #{lenet_forward.1} parent=11 // pred_fallthru
          _
        // Predicated region
        $region29: #{lenet_forward.1} parent=11 // pred_check
          %p329 = pneg %p151
        $region30: #{lenet_forward.1} parent=11 // pred_check_branch
          %331 = sbr.rel (%p329) target = $region32
        $region31: #{lenet_forward.1} parent=11 // pred_region
          _
        $region32: #{lenet_forward.1} parent=11 // pred_fallthru
          _
        // Predicated region
        $region33: #{lenet_forward.1} parent=11 // pred_check
          %p332 = pneg %p172
        $region34: #{lenet_forward.1} parent=11 // pred_check_branch
          %334 = sbr.rel (%p332) target = $region36
        $region35: #{lenet_forward.1} parent=11 // pred_region
          _
        $region36: #{lenet_forward.1} parent=11 // pred_fallthru
          _
        // Predicated region
        $region37: #{lenet_forward.1} parent=11 // pred_check
          %p335 = pneg %p193
        $region38: #{lenet_forward.1} parent=11 // pred_check_branch
          %337 = sbr.rel (%p335) target = $region40
        $region39: #{lenet_forward.1} parent=11 // pred_region
          %s339 = ssub.s32 1024, 1024
          %340 = vsyncadd [#allocation5], %s339
          %s341 = sshll.u32 [#allocation6], 4
          %s342 = int_to_ptr.vmem [resolvable:$true] %s341
          %347 = dma.hbm_to_vmem [thread:$0]  %s7, 1024, %s342, [#allocation5], 64, 64, 4
        $region40: #{lenet_forward.1} parent=11 // pred_fallthru
          _
        // Predicated region
        $region41: #{lenet_forward.1} parent=11 // pred_check
          %p348 = pneg %p214
        $region42: #{lenet_forward.1} parent=11 // pred_check_branch
          %350 = sbr.rel (%p348) target = $region44
        $region43: #{lenet_forward.1} parent=11 // pred_region
          _
        $region44: #{lenet_forward.1} parent=11 // pred_fallthru
          _
        // Predicated region
        $region45: #{lenet_forward.1} parent=11 // pred_check
          %p351 = pneg %p235
        $region46: #{lenet_forward.1} parent=11 // pred_check_branch
          %353 = sbr.rel (%p351) target = $region48
        $region47: #{lenet_forward.1} parent=11 // pred_region
          %s355 = ssub.s32 1024, 1024
          %356 = vsyncadd [#allocation8], %s355
          %s357 = sshll.u32 [#allocation7], 4
          %s358 = int_to_ptr.vmem [resolvable:$true] %s357
          %363 = dma.hbm_to_vmem [thread:$0]  %s9, 1024, %s358, [#allocation8], 64, 64, 4
        $region48: #{lenet_forward.1} parent=11 // pred_fallthru
          _
        // Predicated region
        $region49: #{lenet_forward.1} parent=11 // pred_check
          %p364 = pneg %p256
        $region50: #{lenet_forward.1} parent=11 // pred_check_branch
          %366 = sbr.rel (%p364) target = $region52
        $region51: #{lenet_forward.1} parent=11 // pred_region
          _
        $region52: #{lenet_forward.1} parent=11 // pred_fallthru
          _
      $region12: #{lenet_forward.1} parent=5 // pred_fallthru
        _
      %p367 = scmp.lt.s32.totalorder %s20, 2
      // Predicated region
      $region53: #{lenet_forward.1} parent=5 // pred_check
        %p368 = pneg %p367
      $region54: #{lenet_forward.1} parent=5 // pred_check_branch
        %370 = sbr.rel (%p368) target = $region56
      $region55: #{lenet_forward.1} parent=5 // pred_region
        // Predicated region
        $region57: #{lenet_forward.1} parent=55 // pred_check
          %p371 = pneg %p40
        $region58: #{lenet_forward.1} parent=55 // pred_check_branch
          %373 = sbr.rel (%p371) target = $region60
        $region59: #{lenet_forward.1} parent=55 // pred_region
          %s374 = smul.u32 32, %s20
          %p375 = scmp.lt.s32.totalorder %s374, 63
          %s376 = scalar_select %p375, %s374, 63
          %s377 = smul.addr %s376, 4
          %s378 = scalar_lea.vmem %s0, %s377
          %s379 = smul.u32 32, %s20
        $region60: #{lenet_forward.1} parent=55 // pred_fallthru
          _
      $region56: #{lenet_forward.1} parent=5 // pred_fallthru
        _
      %p380 = scmp.le.s32.totalorder 1, %s20
      %p381 = scmp.lt.s32.totalorder %s20, 3
      %p382 = pnand %p380, %p381
      %p383 = pneg %p382
      // Predicated region
      $region61: #{lenet_forward.1} parent=5 // pred_check
        _
      $region62: #{lenet_forward.1} parent=5 // pred_check_branch
        %385 = sbr.rel (%p382) target = $region64
      $region63: #{lenet_forward.1} parent=5 // pred_region
        %s386 = ssub.s32 %s20, 1
        // Predicated region
        $region65: #{lenet_forward.1} parent=63 // pred_check
          %p387 = pneg %p67
        $region66: #{lenet_forward.1} parent=63 // pred_check_branch
          %389 = sbr.rel (%p387) target = $region68
        $region67: #{lenet_forward.1} parent=63 // pred_region
          %390 = dma.done [#allocation3], 2560
        $region68: #{lenet_forward.1} parent=63 // pred_fallthru
          _
        // Predicated region
        $region69: #{lenet_forward.1} parent=63 // pred_check
          %p391 = pneg %p109
        $region70: #{lenet_forward.1} parent=63 // pred_check_branch
          %393 = sbr.rel (%p391) target = $region72
        $region71: #{lenet_forward.1} parent=63 // pred_region
          %394 = dma.done [#allocation5], 10240
        $region72: #{lenet_forward.1} parent=63 // pred_fallthru
          _
        // Predicated region
        $region73: #{lenet_forward.1} parent=63 // pred_check
          %p395 = pneg %p193
        $region74: #{lenet_forward.1} parent=63 // pred_check_branch
          %397 = sbr.rel (%p395) target = $region76
        $region75: #{lenet_forward.1} parent=63 // pred_region
          %398 = dma.done [#allocation5], 1024
        $region76: #{lenet_forward.1} parent=63 // pred_fallthru
          _
        // Predicated region
        $region77: #{lenet_forward.1} parent=63 // pred_check
          %p399 = pneg %p235
        $region78: #{lenet_forward.1} parent=63 // pred_check_branch
          %401 = sbr.rel (%p399) target = $region80
        $region79: #{lenet_forward.1} parent=63 // pred_region
          %402 = dma.done [#allocation8], 1024
        $region80: #{lenet_forward.1} parent=63 // pred_fallthru
          _
        %s403 = smul.u32 32, %s25
        %p404 = scmp.lt.s32.totalorder %s403, 63
        %s405 = scalar_select %p404, %s403, 63
        %s406 = smul.addr %s405, 4
        %s407 = scalar_lea.vmem %s0, %s406
        %p408 = pneg %p46
        %p409 = pneg %p43
        %p410 = pneg %p67
        %p411 = pneg %p64
        %p412 = pneg %p88
        %p413 = pneg %p85
        %p414 = pneg %p109
        %p415 = pneg %p106
        %p416 = pneg %p130
        %p417 = pneg %p127
        %p418 = pneg %p151
        %p419 = pneg %p148
        %p420 = pneg %p172
        %p421 = pneg %p169
        %p422 = pneg %p193
        %p423 = pneg %p190
        %p424 = pneg %p214
        %p425 = pneg %p211
        %p426 = pneg %p235
        %p427 = pneg %p232
        %p428 = pneg %p256
        %p429 = pneg %p253
        %p430 = pneg %p282
        %p431 = pneg %p279
        %p432 = scmp.lt.s32.totalorder %s25, 1
        %s433 = scalar_select %p432, %s25, 1
        %s434 = smul.addr %s433, 8
        %s435 = scalar_lea.vmem %s11, %s434
        %s436 = smul.u32 32, %s25
        %p437 = scmp.lt.s32.totalorder %s436, 63
        %s438 = scalar_select %p437, %s436, 63
        %s439 = smul.addr %s438, 4
        %s440 = scalar_lea.vmem %s0, %s439
        %s441 = smul.u32 32, %s25
        %p442 = scmp.lt.s32.totalorder %s25, 1
        %s443 = scalar_select %p442, %s25, 1
        %s444 = smul.addr %s443, 8
        %s445 = scalar_lea.vmem %s11, %s444
        %v447 = vld [vmem:[%s440] sm:$0xf]
        %v448 = vld [vmem:[%s440 + $0x4] sm:$0xf]
        %v449 = vld [vmem:[%s440 + $0x8] sm:$0xf]
        %v450 = vld [vmem:[%s440 + $0xc] sm:$0xf]
        %v451 = vld [vmem:[%s440 + $0x10] sm:$0xf]
        %v452 = vld [vmem:[%s440 + $0x14] sm:$0xf]
        %v453 = vld [vmem:[%s440 + $0x18] sm:$0xf]
        %v454 = vld [vmem:[%s440 + $0x1c] sm:$0xf]
        %v455 = vld [vmem:[%s440 + $0x20] sm:$0xf]
        %v456 = vld [vmem:[%s440 + $0x24] sm:$0xf]
        %v457 = vld [vmem:[%s440 + $0x28] sm:$0xf]
        %v458 = vld [vmem:[%s440 + $0x2c] sm:$0xf]
        %v459 = vld [vmem:[%s440 + $0x30] sm:$0xf]
        %v460 = vld [vmem:[%s440 + $0x34] sm:$0xf]
        %v461 = vld [vmem:[%s440 + $0x38] sm:$0xf]
        %v462 = vld [vmem:[%s440 + $0x3c] sm:$0xf]
        %v463 = vld [vmem:[%s440 + $0x40] sm:$0xf]
        %v464 = vld [vmem:[%s440 + $0x44] sm:$0xf]
        %v465 = vld [vmem:[%s440 + $0x48] sm:$0xf]
        %v466 = vld [vmem:[%s440 + $0x4c] sm:$0xf]
        %v467 = vld [vmem:[%s440 + $0x50] sm:$0xf]
        %v468 = vld [vmem:[%s440 + $0x54] sm:$0xf]
        %v469 = vld [vmem:[%s440 + $0x58] sm:$0xf]
        %v470 = vld [vmem:[%s440 + $0x5c] sm:$0xf]
        %v471 = vld [vmem:[%s440 + $0x60] sm:$0xf]
        %v472 = vld [vmem:[%s440 + $0x64] sm:$0xf]
        %v473 = vld [vmem:[%s440 + $0x68] sm:$0xf]
        %v474 = vld [vmem:[%s440 + $0x6c] sm:$0xf]
        %v475 = vld [vmem:[%s440 + $0x70] sm:$0xf]
        %v476 = vld [vmem:[%s440 + $0x74] sm:$0xf]
        %v477 = vld [vmem:[%s440 + $0x78] sm:$0xf]
        %v478 = vld [vmem:[%s440 + $0x7c] sm:$0xf]
        %v511 = vunpack.c.l.b16 %v447
        %v512 = vunpack.c.l.b16 %v448
        %v513 = vunpack.c.l.b16 %v449
        %v514 = vunpack.c.l.b16 %v450
        %v515 = vunpack.c.l.b16 %v451
        %v516 = vunpack.c.l.b16 %v452
        %v517 = vunpack.c.l.b16 %v453
        %v518 = vunpack.c.l.b16 %v454
        %v519 = vunpack.c.l.b16 %v455
        %v520 = vunpack.c.l.b16 %v456
        %v521 = vunpack.c.l.b16 %v457
        %v522 = vunpack.c.l.b16 %v458
        %v523 = vunpack.c.l.b16 %v459
        %v524 = vunpack.c.l.b16 %v460
        %v525 = vunpack.c.l.b16 %v461
        %v526 = vunpack.c.l.b16 %v462
        %v527 = vunpack.c.l.b16 %v463
        %v528 = vunpack.c.l.b16 %v464
        %v529 = vunpack.c.l.b16 %v465
        %v530 = vunpack.c.l.b16 %v466
        %v531 = vunpack.c.l.b16 %v467
        %v532 = vunpack.c.l.b16 %v468
        %v533 = vunpack.c.l.b16 %v469
        %v534 = vunpack.c.l.b16 %v470
        %v535 = vunpack.c.l.b16 %v471
        %v536 = vunpack.c.l.b16 %v472
        %v537 = vunpack.c.l.b16 %v473
        %v538 = vunpack.c.l.b16 %v474
        %v539 = vunpack.c.l.b16 %v475
        %v540 = vunpack.c.l.b16 %v476
        %v541 = vunpack.c.l.b16 %v477
        %v542 = vunpack.c.l.b16 %v478
        %v543 = vpack.c.b16 %v512, %v511
        %v544 = vpack.c.b16 %v514, %v513
        %v545 = vpack.c.b16 %v516, %v515
        %v546 = vpack.c.b16 %v518, %v517
        %v547 = vpack.c.b16 %v520, %v519
        %v548 = vpack.c.b16 %v522, %v521
        %v549 = vpack.c.b16 %v524, %v523
        %v550 = vpack.c.b16 %v526, %v525
        %v551 = vpack.c.b16 %v528, %v527
        %v552 = vpack.c.b16 %v530, %v529
        %v553 = vpack.c.b16 %v532, %v531
        %v554 = vpack.c.b16 %v534, %v533
        %v555 = vpack.c.b16 %v536, %v535
        %v556 = vpack.c.b16 %v538, %v537
        %v557 = vpack.c.b16 %v540, %v539
        %v558 = vpack.c.b16 %v542, %v541
        %v559 = vld [vmem:[#allocation2] sm:$0xff]
        %v560 = vld [vmem:[#allocation2 + $0x8] sm:$0xff]
        %v561 = vld [vmem:[#allocation2 + $0x10] sm:$0xff]
        %v562 = vld [vmem:[#allocation2 + $0x18] sm:$0xff]
        %s563 = scalar_lea.vmem [#allocation2], 32
        %v564 = vld [vmem:[%s563] sm:$0xff]
        %v565 = vld [vmem:[%s563 + $0x8] sm:$0xff]
        %v566 = vld [vmem:[%s563 + $0x10] sm:$0xff]
        %v567 = vld [vmem:[%s563 + $0x18] sm:$0xff]
        %vm568 = vsmask.f32 7424
        %v570 = vshrl.u32 %v543, 16
        %v572 = vshll.u32 %v543, 16
        %v574 = vrot.slane %v572, 1
        %v575 = vor.u32 %v570, %v574
        %v577 = vshll.u32 %v544, 16
        %v579 = vrot.slane %v577, 1
        %v580 = vsel %vm568, %v575, %v579
        %v581 = vshrl.u32 %v544, 16
        %v583 = vor.u32 %v581, %v579
        %v585 = vshll.u32 %v545, 16
        %v587 = vrot.slane %v585, 1
        %v588 = vsel %vm568, %v583, %v587
        %v589 = vshrl.u32 %v545, 16
        %v591 = vor.u32 %v589, %v587
        %v593 = vshll.u32 %v546, 16
        %v595 = vrot.slane %v593, 1
        %v596 = vsel %vm568, %v591, %v595
        %v597 = vshrl.u32 %v546, 16
        %v599 = vor.u32 %v597, %v595
        %v601 = vshll.u32 %v547, 16
        %v603 = vrot.slane %v601, 1
        %v604 = vsel %vm568, %v599, %v603
        %v605 = vshrl.u32 %v547, 16
        %v607 = vor.u32 %v605, %v603
        %v609 = vshll.u32 %v548, 16
        %v611 = vrot.slane %v609, 1
        %v612 = vsel %vm568, %v607, %v611
        %v613 = vshrl.u32 %v548, 16
        %v615 = vor.u32 %v613, %v611
        %v617 = vshll.u32 %v549, 16
        %v619 = vrot.slane %v617, 1
        %v620 = vsel %vm568, %v615, %v619
        %v621 = vshrl.u32 %v549, 16
        %v623 = vor.u32 %v621, %v619
        %v625 = vshll.u32 %v550, 16
        %v627 = vrot.slane %v625, 1
        %v628 = vsel %vm568, %v623, %v627
        %v629 = vshrl.u32 %v550, 16
        %v631 = vor.u32 %v629, %v627
        %v633 = vshll.u32 %v551, 16
        %v635 = vrot.slane %v633, 1
        %v636 = vsel %vm568, %v631, %v635
        %v637 = vshrl.u32 %v551, 16
        %v639 = vor.u32 %v637, %v635
        %v641 = vshll.u32 %v552, 16
        %v643 = vrot.slane %v641, 1
        %v644 = vsel %vm568, %v639, %v643
        %v645 = vshrl.u32 %v552, 16
        %v647 = vor.u32 %v645, %v643
        %v649 = vshll.u32 %v553, 16
        %v651 = vrot.slane %v649, 1
        %v652 = vsel %vm568, %v647, %v651
        %v653 = vshrl.u32 %v553, 16
        %v655 = vor.u32 %v653, %v651
        %v657 = vshll.u32 %v554, 16
        %v659 = vrot.slane %v657, 1
        %v660 = vsel %vm568, %v655, %v659
        %v661 = vshrl.u32 %v554, 16
        %v663 = vor.u32 %v661, %v659
        %v665 = vshll.u32 %v555, 16
        %v667 = vrot.slane %v665, 1
        %v668 = vsel %vm568, %v663, %v667
        %v669 = vshrl.u32 %v555, 16
        %v671 = vor.u32 %v669, %v667
        %v673 = vshll.u32 %v556, 16
        %v675 = vrot.slane %v673, 1
        %v676 = vsel %vm568, %v671, %v675
        %v677 = vshrl.u32 %v556, 16
        %v679 = vor.u32 %v677, %v675
        %v681 = vshll.u32 %v557, 16
        %v683 = vrot.slane %v681, 1
        %v684 = vsel %vm568, %v679, %v683
        %v685 = vshrl.u32 %v557, 16
        %v687 = vor.u32 %v685, %v683
        %v689 = vshll.u32 %v558, 16
        %v691 = vrot.slane %v689, 1
        %v692 = vsel %vm568, %v687, %v691
        %v693 = vshrl.u32 %v558, 16
        %v695 = vor.u32 %v693, %v691
        %v697 = vshll.u32 0, 16
        %v699 = vrot.slane %v697, 1
        %v700 = vsel %vm568, %v695, %v699
        %v705 = vunpack.c.l.b16 %v564
        %v706 = vunpack.c.h.b16 %v564
        %v707 = vunpack.c.l.b16 %v565
        %v708 = vunpack.c.h.b16 %v565
        %v709 = vunpack.c.l.b16 %v566
        %v710 = vunpack.c.h.b16 %v566
        %v711 = vunpack.c.l.b16 %v567
        %v712 = vunpack.c.h.b16 %v567
        %v713 = vpack.c.b16 %v707, %v705
        %v714 = vpack.c.b16 %v708, %v706
        %v715 = vpack.c.b16 %v711, %v709
        %v716 = vpack.c.b16 %v712, %v710
        %vm721 = vcmask 261120
        %v723 = vsel %vm721, %v580, 0
        %v726 = vsel %vm721, %v588, 0
        %v729 = vsel %vm721, %v596, 0
        %v732 = vsel %vm721, %v604, 0
        %v735 = vsel %vm721, %v612, 0
        %v738 = vsel %vm721, %v620, 0
        %v741 = vsel %vm721, %v628, 0
        %v744 = vsel %vm721, %v636, 0
        %v747 = vsel %vm721, %v644, 0
        %v750 = vsel %vm721, %v652, 0
        %v753 = vsel %vm721, %v660, 0
        %v756 = vsel %vm721, %v668, 0
        %v759 = vsel %vm721, %v676, 0
        %v762 = vsel %vm721, %v684, 0
        %v765 = vsel %vm721, %v692, 0
        %v768 = vsel %vm721, %v700, 0
        %770 = vmatprep.subr.bf16.mxu0 %v714
        %771 = vmatpush1.bf16.msra.mxu0 %v713
        %772 = vmatprep.subr.bf16.mxu0 %v716
        %773 = vmatpush1.bf16.msra.mxu0 %v715
        %774 = vmatprep.subr.bf16.mxu0 0
        %775 = vmatpush1.bf16.msra.mxu0 0
        %776 = vmatprep.subr.bf16.mxu0 0
        %777 = vmatpush1.bf16.msra.mxu0 0
        %778 = vmatprep.subr.bf16.mxu0 0
        %779 = vmatpush1.bf16.msra.mxu0 0
        %780 = vmatprep.subr.bf16.mxu0 0
        %781 = vmatpush1.bf16.msra.mxu0 0
        %782 = vmatprep.subr.bf16.mxu0 0
        %783 = vmatpush1.bf16.msra.mxu0 0
        %784 = vmatprep.subr.bf16.mxu0 0
        %785 = vmatpush1.bf16.msra.mxu0 0
        %786 = vmatprep.subr.bf16.mxu0 0
        %787 = vmatpush1.bf16.msra.mxu0 0
        %788 = vmatprep.subr.bf16.mxu0 0
        %789 = vmatpush1.bf16.msra.mxu0 0
        %790 = vmatprep.subr.bf16.mxu0 0
        %791 = vmatpush1.bf16.msra.mxu0 0
        %792 = vmatprep.subr.bf16.mxu0 0
        %793 = vmatpush1.bf16.msra.mxu0 0
        %794 = vmatprep.subr.bf16.mxu0 0
        %795 = vmatpush1.bf16.msra.mxu0 0
        %796 = vmatprep.subr.bf16.mxu0 0
        %797 = vmatpush1.bf16.msra.mxu0 0
        %798 = vmatprep.subr.bf16.mxu0 0
        %799 = vmatpush1.bf16.msra.mxu0 0
        %800 = vmatprep.subr.bf16.mxu0 0
        %801 = vmatpush1.bf16.msra.mxu0 0
        %802 = vmatprep.mubr.bf16.mxu0 0
        %803 = vmatmul.mubr.bf16.gmra.mrb[0].mxu0 %v723
        %v804 = vpop.f32.mrb[0].mxu0
        %v805 = vadd.f32 0.0, %v804
        %v806 = vpop.f32.mrb[0].mxu0
        %v807 = vadd.f32 0.0, %v806
        %v808 = vpop.f32.mrb[0].mxu0
        %v809 = vadd.f32 0.0, %v808
        %v810 = vpop.f32.mrb[0].mxu0
        %v811 = vadd.f32 0.0, %v810
        %812 = vmatprep.mubr.bf16.mxu0 0
        %813 = vmatmul.mubr.bf16.gmra.mrb[0].mxu0 %v726
        %v814 = vpop.f32.mrb[0].mxu0
        %v815 = vadd.f32 0.0, %v814
        %v816 = vpop.f32.mrb[0].mxu0
        %v817 = vadd.f32 0.0, %v816
        %v818 = vpop.f32.mrb[0].mxu0
        %v819 = vadd.f32 0.0, %v818
        %v820 = vpop.f32.mrb[0].mxu0
        %v821 = vadd.f32 0.0, %v820
        %822 = vmatprep.mubr.bf16.mxu0 0
        %823 = vmatmul.mubr.bf16.gmra.mrb[0].mxu0 %v729
        %v824 = vpop.f32.mrb[0].mxu0
        %v825 = vadd.f32 0.0, %v824
        %v826 = vpop.f32.mrb[0].mxu0
        %v827 = vadd.f32 0.0, %v826
        %v828 = vpop.f32.mrb[0].mxu0
        %v829 = vadd.f32 0.0, %v828
        %v830 = vpop.f32.mrb[0].mxu0
        %v831 = vadd.f32 0.0, %v830
        %832 = vmatprep.mubr.bf16.mxu0 0
        %833 = vmatmul.mubr.bf16.gmra.mrb[0].mxu0 %v732
        %v834 = vpop.f32.mrb[0].mxu0
        %v835 = vadd.f32 0.0, %v834
        %v836 = vpop.f32.mrb[0].mxu0
        %v837 = vadd.f32 0.0, %v836
        %v838 = vpop.f32.mrb[0].mxu0
        %v839 = vadd.f32 0.0, %v838
        %v840 = vpop.f32.mrb[0].mxu0
        %v841 = vadd.f32 0.0, %v840
        %842 = vmatprep.mubr.bf16.mxu0 0
        %843 = vmatmul.mubr.bf16.gmra.mrb[0].mxu0 %v735
        %v844 = vpop.f32.mrb[0].mxu0
        %v845 = vadd.f32 0.0, %v844
        %v846 = vpop.f32.mrb[0].mxu0
        %v847 = vadd.f32 0.0, %v846
        %v848 = vpop.f32.mrb[0].mxu0
        %v849 = vadd.f32 0.0, %v848
        %v850 = vpop.f32.mrb[0].mxu0
        %v851 = vadd.f32 0.0, %v850
        %852 = vmatprep.mubr.bf16.mxu0 0
        %853 = vmatmul.mubr.bf16.gmra.mrb[0].mxu0 %v738
        %v854 = vpop.f32.mrb[0].mxu0
        %v855 = vadd.f32 0.0, %v854
        %v856 = vpop.f32.mrb[0].mxu0
        %v857 = vadd.f32 0.0, %v856
        %v858 = vpop.f32.mrb[0].mxu0
        %v859 = vadd.f32 0.0, %v858
        %v860 = vpop.f32.mrb[0].mxu0
        %v861 = vadd.f32 0.0, %v860
        %862 = vmatprep.mubr.bf16.mxu0 0
        %863 = vmatmul.mubr.bf16.gmra.mrb[0].mxu0 %v741
        %v864 = vpop.f32.mrb[0].mxu0
        %v865 = vadd.f32 0.0, %v864
        %v866 = vpop.f32.mrb[0].mxu0
        %v867 = vadd.f32 0.0, %v866
        %v868 = vpop.f32.mrb[0].mxu0
        %v869 = vadd.f32 0.0, %v868
        %v870 = vpop.f32.mrb[0].mxu0
        %v871 = vadd.f32 0.0, %v870
        %872 = vmatprep.mubr.bf16.mxu0 0
        %873 = vmatmul.mubr.bf16.gmra.mrb[0].mxu0 %v744
        %v874 = vpop.f32.mrb[0].mxu0
        %v875 = vadd.f32 0.0, %v874
        %v876 = vpop.f32.mrb[0].mxu0
        %v877 = vadd.f32 0.0, %v876
        %v878 = vpop.f32.mrb[0].mxu0
        %v879 = vadd.f32 0.0, %v878
        %v880 = vpop.f32.mrb[0].mxu0
        %v881 = vadd.f32 0.0, %v880
        %882 = vmatprep.mubr.bf16.mxu0 0
        %883 = vmatmul.mubr.bf16.gmra.mrb[0].mxu0 %v747
        %v884 = vpop.f32.mrb[0].mxu0
        %v885 = vadd.f32 0.0, %v884
        %v886 = vpop.f32.mrb[0].mxu0
        %v887 = vadd.f32 0.0, %v886
        %v888 = vpop.f32.mrb[0].mxu0
        %v889 = vadd.f32 0.0, %v888
        %v890 = vpop.f32.mrb[0].mxu0
        %v891 = vadd.f32 0.0, %v890
        %892 = vmatprep.mubr.bf16.mxu0 0
        %893 = vmatmul.mubr.bf16.gmra.mrb[0].mxu0 %v750
        %v894 = vpop.f32.mrb[0].mxu0
        %v895 = vadd.f32 0.0, %v894
        %v896 = vpop.f32.mrb[0].mxu0
        %v897 = vadd.f32 0.0, %v896
        %v898 = vpop.f32.mrb[0].mxu0
        %v899 = vadd.f32 0.0, %v898
        %v900 = vpop.f32.mrb[0].mxu0
        %v901 = vadd.f32 0.0, %v900
        %902 = vmatprep.mubr.bf16.mxu0 0
        %903 = vmatmul.mubr.bf16.gmra.mrb[0].mxu0 %v753
        %v904 = vpop.f32.mrb[0].mxu0
        %v905 = vadd.f32 0.0, %v904
        %v906 = vpop.f32.mrb[0].mxu0
        %v907 = vadd.f32 0.0, %v906
        %v908 = vpop.f32.mrb[0].mxu0
        %v909 = vadd.f32 0.0, %v908
        %v910 = vpop.f32.mrb[0].mxu0
        %v911 = vadd.f32 0.0, %v910
        %912 = vmatprep.mubr.bf16.mxu0 0
        %913 = vmatmul.mubr.bf16.gmra.mrb[0].mxu0 %v756
        %v914 = vpop.f32.mrb[0].mxu0
        %v915 = vadd.f32 0.0, %v914
        %v916 = vpop.f32.mrb[0].mxu0
        %v917 = vadd.f32 0.0, %v916
        %v918 = vpop.f32.mrb[0].mxu0
        %v919 = vadd.f32 0.0, %v918
        %v920 = vpop.f32.mrb[0].mxu0
        %v921 = vadd.f32 0.0, %v920
        %922 = vmatprep.mubr.bf16.mxu0 0
        %923 = vmatmul.mubr.bf16.gmra.mrb[0].mxu0 %v759
        %v924 = vpop.f32.mrb[0].mxu0
        %v925 = vadd.f32 0.0, %v924
        %v926 = vpop.f32.mrb[0].mxu0
        %v927 = vadd.f32 0.0, %v926
        %v928 = vpop.f32.mrb[0].mxu0
        %v929 = vadd.f32 0.0, %v928
        %v930 = vpop.f32.mrb[0].mxu0
        %v931 = vadd.f32 0.0, %v930
        %932 = vmatprep.mubr.bf16.mxu0 0
        %933 = vmatmul.mubr.bf16.gmra.mrb[0].mxu0 %v762
        %v934 = vpop.f32.mrb[0].mxu0
        %v935 = vadd.f32 0.0, %v934
        %v936 = vpop.f32.mrb[0].mxu0
        %v937 = vadd.f32 0.0, %v936
        %v938 = vpop.f32.mrb[0].mxu0
        %v939 = vadd.f32 0.0, %v938
        %v940 = vpop.f32.mrb[0].mxu0
        %v941 = vadd.f32 0.0, %v940
        %942 = vmatprep.mubr.bf16.mxu0 0
        %943 = vmatmul.mubr.bf16.gmra.mrb[0].mxu0 %v765
        %v944 = vpop.f32.mrb[0].mxu0
        %v945 = vadd.f32 0.0, %v944
        %v946 = vpop.f32.mrb[0].mxu0
        %v947 = vadd.f32 0.0, %v946
        %v948 = vpop.f32.mrb[0].mxu0
        %v949 = vadd.f32 0.0, %v948
        %v950 = vpop.f32.mrb[0].mxu0
        %v951 = vadd.f32 0.0, %v950
        %952 = vmatprep.mubr.bf16.mxu0 0
        %953 = vmatmul.mubr.bf16.gmra.mrb[0].mxu0 %v768
        %v954 = vpop.f32.mrb[0].mxu0
        %v955 = vadd.f32 0.0, %v954
        %v956 = vpop.f32.mrb[0].mxu0
        %v957 = vadd.f32 0.0, %v956
        %v958 = vpop.f32.mrb[0].mxu0
        %v959 = vadd.f32 0.0, %v958
        %v960 = vpop.f32.mrb[0].mxu0
        %v961 = vadd.f32 0.0, %v960
        %962 = vdwg.mxu0
        %v967 = vunpack.c.l.b16 %v559
        %v968 = vunpack.c.h.b16 %v559
        %v969 = vunpack.c.l.b16 %v560
        %v970 = vunpack.c.h.b16 %v560
        %v971 = vunpack.c.l.b16 %v561
        %v972 = vunpack.c.h.b16 %v561
        %v973 = vunpack.c.l.b16 %v562
        %v974 = vunpack.c.h.b16 %v562
        %v975 = vpack.c.b16 %v969, %v967
        %v976 = vpack.c.b16 %v970, %v968
        %v977 = vpack.c.b16 %v973, %v971
        %v978 = vpack.c.b16 %v974, %v972
        %v983 = vsel %vm721, %v543, 0
        %v985 = vsel %vm721, %v544, 0
        %v987 = vsel %vm721, %v545, 0
        %v989 = vsel %vm721, %v546, 0
        %v991 = vsel %vm721, %v547, 0
        %v993 = vsel %vm721, %v548, 0
        %v995 = vsel %vm721, %v549, 0
        %v997 = vsel %vm721, %v550, 0
        %v999 = vsel %vm721, %v551, 0
        %v1001 = vsel %vm721, %v552, 0
        %v1003 = vsel %vm721, %v553, 0
        %v1005 = vsel %vm721, %v554, 0
        %v1007 = vsel %vm721, %v555, 0
        %v1009 = vsel %vm721, %v556, 0
        %v1011 = vsel %vm721, %v557, 0
        %v1013 = vsel %vm721, %v558, 0
        %1015 = vmatprep.subr.bf16.mxu0 %v976
        %1016 = vmatpush1.bf16.msra.mxu0 %v975
        %1017 = vmatprep.subr.bf16.mxu0 %v978
        %1018 = vmatpush1.bf16.msra.mxu0 %v977
        %1019 = vmatprep.subr.bf16.mxu0 0
        %1020 = vmatpush1.bf16.msra.mxu0 0
        %1021 = vmatprep.subr.bf16.mxu0 0
        %1022 = vmatpush1.bf16.msra.mxu0 0
        %1023 = vmatprep.subr.bf16.mxu0 0
        %1024 = vmatpush1.bf16.msra.mxu0 0
        %1025 = vmatprep.subr.bf16.mxu0 0
        %1026 = vmatpush1.bf16.msra.mxu0 0
        %1027 = vmatprep.subr.bf16.mxu0 0
        %1028 = vmatpush1.bf16.msra.mxu0 0
        %1029 = vmatprep.subr.bf16.mxu0 0
        %1030 = vmatpush1.bf16.msra.mxu0 0
        %1031 = vmatprep.subr.bf16.mxu0 0
        %1032 = vmatpush1.bf16.msra.mxu0 0
        %1033 = vmatprep.subr.bf16.mxu0 0
        %1034 = vmatpush1.bf16.msra.mxu0 0
        %1035 = vmatprep.subr.bf16.mxu0 0
        %1036 = vmatpush1.bf16.msra.mxu0 0
        %1037 = vmatprep.subr.bf16.mxu0 0
        %1038 = vmatpush1.bf16.msra.mxu0 0
        %1039 = vmatprep.subr.bf16.mxu0 0
        %1040 = vmatpush1.bf16.msra.mxu0 0
        %1041 = vmatprep.subr.bf16.mxu0 0
        %1042 = vmatpush1.bf16.msra.mxu0 0
        %1043 = vmatprep.subr.bf16.mxu0 0
        %1044 = vmatpush1.bf16.msra.mxu0 0
        %1045 = vmatprep.subr.bf16.mxu0 0
        %1046 = vmatpush1.bf16.msra.mxu0 0
        %1047 = vmatprep.mubr.bf16.mxu0 0
        %1048 = vmatmul.mubr.bf16.gmra.mrb[0].mxu0 %v983
        %v1049 = vpop.f32.mrb[0].mxu0
        %v1050 = vadd.f32 %v805, %v1049
        %v1051 = vpop.f32.mrb[0].mxu0
        %v1052 = vadd.f32 %v807, %v1051
        %v1053 = vpop.f32.mrb[0].mxu0
        %v1054 = vadd.f32 %v809, %v1053
        %v1055 = vpop.f32.mrb[0].mxu0
        %v1056 = vadd.f32 %v811, %v1055
        %1057 = vmatprep.mubr.bf16.mxu0 0
        %1058 = vmatmul.mubr.bf16.gmra.mrb[0].mxu0 %v985
        %v1059 = vpop.f32.mrb[0].mxu0
        %v1060 = vadd.f32 %v815, %v1059
        %v1061 = vpop.f32.mrb[0].mxu0
        %v1062 = vadd.f32 %v817, %v1061
        %v1063 = vpop.f32.mrb[0].mxu0
        %v1064 = vadd.f32 %v819, %v1063
        %v1065 = vpop.f32.mrb[0].mxu0
        %v1066 = vadd.f32 %v821, %v1065
        %1067 = vmatprep.mubr.bf16.mxu0 0
        %1068 = vmatmul.mubr.bf16.gmra.mrb[0].mxu0 %v987
        %v1069 = vpop.f32.mrb[0].mxu0
        %v1070 = vadd.f32 %v825, %v1069
        %v1071 = vpop.f32.mrb[0].mxu0
        %v1072 = vadd.f32 %v827, %v1071
        %v1073 = vpop.f32.mrb[0].mxu0
        %v1074 = vadd.f32 %v829, %v1073
        %v1075 = vpop.f32.mrb[0].mxu0
        %v1076 = vadd.f32 %v831, %v1075
        %1077 = vmatprep.mubr.bf16.mxu0 0
        %1078 = vmatmul.mubr.bf16.gmra.mrb[0].mxu0 %v989
        %v1079 = vpop.f32.mrb[0].mxu0
        %v1080 = vadd.f32 %v835, %v1079
        %v1081 = vpop.f32.mrb[0].mxu0
        %v1082 = vadd.f32 %v837, %v1081
        %v1083 = vpop.f32.mrb[0].mxu0
        %v1084 = vadd.f32 %v839, %v1083
        %v1085 = vpop.f32.mrb[0].mxu0
        %v1086 = vadd.f32 %v841, %v1085
        %1087 = vmatprep.mubr.bf16.mxu0 0
        %1088 = vmatmul.mubr.bf16.gmra.mrb[0].mxu0 %v991
        %v1089 = vpop.f32.mrb[0].mxu0
        %v1090 = vadd.f32 %v845, %v1089
        %v1091 = vpop.f32.mrb[0].mxu0
        %v1092 = vadd.f32 %v847, %v1091
        %v1093 = vpop.f32.mrb[0].mxu0
        %v1094 = vadd.f32 %v849, %v1093
        %v1095 = vpop.f32.mrb[0].mxu0
        %v1096 = vadd.f32 %v851, %v1095
        %1097 = vmatprep.mubr.bf16.mxu0 0
        %1098 = vmatmul.mubr.bf16.gmra.mrb[0].mxu0 %v993
        %v1099 = vpop.f32.mrb[0].mxu0
        %v1100 = vadd.f32 %v855, %v1099
        %v1101 = vpop.f32.mrb[0].mxu0
        %v1102 = vadd.f32 %v857, %v1101
        %v1103 = vpop.f32.mrb[0].mxu0
        %v1104 = vadd.f32 %v859, %v1103
        %v1105 = vpop.f32.mrb[0].mxu0
        %v1106 = vadd.f32 %v861, %v1105
        %1107 = vmatprep.mubr.bf16.mxu0 0
        %1108 = vmatmul.mubr.bf16.gmra.mrb[0].mxu0 %v995
        %v1109 = vpop.f32.mrb[0].mxu0
        %v1110 = vadd.f32 %v865, %v1109
        %v1111 = vpop.f32.mrb[0].mxu0
        %v1112 = vadd.f32 %v867, %v1111
        %v1113 = vpop.f32.mrb[0].mxu0
        %v1114 = vadd.f32 %v869, %v1113
        %v1115 = vpop.f32.mrb[0].mxu0
        %v1116 = vadd.f32 %v871, %v1115
        %1117 = vmatprep.mubr.bf16.mxu0 0
        %1118 = vmatmul.mubr.bf16.gmra.mrb[0].mxu0 %v997
        %v1119 = vpop.f32.mrb[0].mxu0
        %v1120 = vadd.f32 %v875, %v1119
        %v1121 = vpop.f32.mrb[0].mxu0
        %v1122 = vadd.f32 %v877, %v1121
        %v1123 = vpop.f32.mrb[0].mxu0
        %v1124 = vadd.f32 %v879, %v1123
        %v1125 = vpop.f32.mrb[0].mxu0
        %v1126 = vadd.f32 %v881, %v1125
        %1127 = vmatprep.mubr.bf16.mxu0 0
        %1128 = vmatmul.mubr.bf16.gmra.mrb[0].mxu0 %v999
        %v1129 = vpop.f32.mrb[0].mxu0
        %v1130 = vadd.f32 %v885, %v1129
        %v1131 = vpop.f32.mrb[0].mxu0
        %v1132 = vadd.f32 %v887, %v1131
        %v1133 = vpop.f32.mrb[0].mxu0
        %v1134 = vadd.f32 %v889, %v1133
        %v1135 = vpop.f32.mrb[0].mxu0
        %v1136 = vadd.f32 %v891, %v1135
        %1137 = vmatprep.mubr.bf16.mxu0 0
        %1138 = vmatmul.mubr.bf16.gmra.mrb[0].mxu0 %v1001
        %v1139 = vpop.f32.mrb[0].mxu0
        %v1140 = vadd.f32 %v895, %v1139
        %v1141 = vpop.f32.mrb[0].mxu0
        %v1142 = vadd.f32 %v897, %v1141
        %v1143 = vpop.f32.mrb[0].mxu0
        %v1144 = vadd.f32 %v899, %v1143
        %v1145 = vpop.f32.mrb[0].mxu0
        %v1146 = vadd.f32 %v901, %v1145
        %1147 = vmatprep.mubr.bf16.mxu0 0
        %1148 = vmatmul.mubr.bf16.gmra.mrb[0].mxu0 %v1003
        %v1149 = vpop.f32.mrb[0].mxu0
        %v1150 = vadd.f32 %v905, %v1149
        %v1151 = vpop.f32.mrb[0].mxu0
        %v1152 = vadd.f32 %v907, %v1151
        %v1153 = vpop.f32.mrb[0].mxu0
        %v1154 = vadd.f32 %v909, %v1153
        %v1155 = vpop.f32.mrb[0].mxu0
        %v1156 = vadd.f32 %v911, %v1155
        %1157 = vmatprep.mubr.bf16.mxu0 0
        %1158 = vmatmul.mubr.bf16.gmra.mrb[0].mxu0 %v1005
        %v1159 = vpop.f32.mrb[0].mxu0
        %v1160 = vadd.f32 %v915, %v1159
        %v1161 = vpop.f32.mrb[0].mxu0
        %v1162 = vadd.f32 %v917, %v1161
        %v1163 = vpop.f32.mrb[0].mxu0
        %v1164 = vadd.f32 %v919, %v1163
        %v1165 = vpop.f32.mrb[0].mxu0
        %v1166 = vadd.f32 %v921, %v1165
        %1167 = vmatprep.mubr.bf16.mxu0 0
        %1168 = vmatmul.mubr.bf16.gmra.mrb[0].mxu0 %v1007
        %v1169 = vpop.f32.mrb[0].mxu0
        %v1170 = vadd.f32 %v925, %v1169
        %v1171 = vpop.f32.mrb[0].mxu0
        %v1172 = vadd.f32 %v927, %v1171
        %v1173 = vpop.f32.mrb[0].mxu0
        %v1174 = vadd.f32 %v929, %v1173
        %v1175 = vpop.f32.mrb[0].mxu0
        %v1176 = vadd.f32 %v931, %v1175
        %1177 = vmatprep.mubr.bf16.mxu0 0
        %1178 = vmatmul.mubr.bf16.gmra.mrb[0].mxu0 %v1009
        %v1179 = vpop.f32.mrb[0].mxu0
        %v1180 = vadd.f32 %v935, %v1179
        %v1181 = vpop.f32.mrb[0].mxu0
        %v1182 = vadd.f32 %v937, %v1181
        %v1183 = vpop.f32.mrb[0].mxu0
        %v1184 = vadd.f32 %v939, %v1183
        %v1185 = vpop.f32.mrb[0].mxu0
        %v1186 = vadd.f32 %v941, %v1185
        %1187 = vmatprep.mubr.bf16.mxu0 0
        %1188 = vmatmul.mubr.bf16.gmra.mrb[0].mxu0 %v1011
        %v1189 = vpop.f32.mrb[0].mxu0
        %v1190 = vadd.f32 %v945, %v1189
        %v1191 = vpop.f32.mrb[0].mxu0
        %v1192 = vadd.f32 %v947, %v1191
        %v1193 = vpop.f32.mrb[0].mxu0
        %v1194 = vadd.f32 %v949, %v1193
        %v1195 = vpop.f32.mrb[0].mxu0
        %v1196 = vadd.f32 %v951, %v1195
        %1197 = vmatprep.mubr.bf16.mxu0 0
        %1198 = vmatmul.mubr.bf16.gmra.mrb[0].mxu0 %v1013
        %v1199 = vpop.f32.mrb[0].mxu0
        %v1200 = vadd.f32 %v955, %v1199
        %v1201 = vpop.f32.mrb[0].mxu0
        %v1202 = vadd.f32 %v957, %v1201
        %v1203 = vpop.f32.mrb[0].mxu0
        %v1204 = vadd.f32 %v959, %v1203
        %v1205 = vpop.f32.mrb[0].mxu0
        %v1206 = vadd.f32 %v961, %v1205
        %1207 = vdwg.mxu0
        %s1208 = scalar_lea.vmem [#allocation2], 64
        %v1209 = vld [vmem:[%s1208] sm:$0xff]
        %v1210 = vld [vmem:[%s1208 + $0x8] sm:$0xff]
        %v1211 = vld [vmem:[%s1208 + $0x10] sm:$0xff]
        %v1212 = vld [vmem:[%s1208 + $0x18] sm:$0xff]
        %vm1214 = vcmask 1046528
        %v1215 = vrot.slane %v543, 1
        %v1216 = vrot.slane %v544, 1
        %v1217 = vsel %vm1214, %v1215, %v1216
        %v1218 = vrot.slane %v545, 1
        %v1219 = vsel %vm1214, %v1216, %v1218
        %v1220 = vrot.slane %v546, 1
        %v1221 = vsel %vm1214, %v1218, %v1220
        %v1222 = vrot.slane %v547, 1
        %v1223 = vsel %vm1214, %v1220, %v1222
        %v1224 = vrot.slane %v548, 1
        %v1225 = vsel %vm1214, %v1222, %v1224
        %v1226 = vrot.slane %v549, 1
        %v1227 = vsel %vm1214, %v1224, %v1226
        %v1228 = vrot.slane %v550, 1
        %v1229 = vsel %vm1214, %v1226, %v1228
        %v1230 = vrot.slane %v551, 1
        %v1231 = vsel %vm1214, %v1228, %v1230
        %v1232 = vrot.slane %v552, 1
        %v1233 = vsel %vm1214, %v1230, %v1232
        %v1234 = vrot.slane %v553, 1
        %v1235 = vsel %vm1214, %v1232, %v1234
        %v1236 = vrot.slane %v554, 1
        %v1237 = vsel %vm1214, %v1234, %v1236
        %v1238 = vrot.slane %v555, 1
        %v1239 = vsel %vm1214, %v1236, %v1238
        %v1240 = vrot.slane %v556, 1
        %v1241 = vsel %vm1214, %v1238, %v1240
        %v1242 = vrot.slane %v557, 1
        %v1243 = vsel %vm1214, %v1240, %v1242
        %v1244 = vrot.slane %v558, 1
        %v1245 = vsel %vm1214, %v1242, %v1244
        %v1246 = vrot.slane 0, 1
        %v1247 = vsel %vm1214, %v1244, %v1246
        %v1252 = vunpack.c.l.b16 %v1209
        %v1253 = vunpack.c.h.b16 %v1209
        %v1254 = vunpack.c.l.b16 %v1210
        %v1255 = vunpack.c.h.b16 %v1210
        %v1256 = vunpack.c.l.b16 %v1211
        %v1257 = vunpack.c.h.b16 %v1211
        %v1258 = vunpack.c.l.b16 %v1212
        %v1259 = vunpack.c.h.b16 %v1212
        %v1260 = vpack.c.b16 %v1254, %v1252
        %v1261 = vpack.c.b16 %v1255, %v1253
        %v1262 = vpack.c.b16 %v1258, %v1256
        %v1263 = vpack.c.b16 %v1259, %v1257
        %v1269 = vsel %vm721, %v1217, 0
        %v1272 = vsel %vm721, %v1219, 0
        %v1275 = vsel %vm721, %v1221, 0
        %v1278 = vsel %vm721, %v1223, 0
        %v1281 = vsel %vm721, %v1225, 0
        %v1284 = vsel %vm721, %v1227, 0
        %v1287 = vsel %vm721, %v1229, 0
        %v1290 = vsel %vm721, %v1231, 0
        %v1293 = vsel %vm721, %v1233, 0
        %v1296 = vsel %vm721, %v1235, 0
        %v1299 = vsel %vm721, %v1237, 0
        %v1302 = vsel %vm721, %v1239, 0
        %v1305 = vsel %vm721, %v1241, 0
        %v1308 = vsel %vm721, %v1243, 0
        %v1311 = vsel %vm721, %v1245, 0
        %v1314 = vsel %vm721, %v1247, 0
        %1316 = vmatprep.subr.bf16.mxu0 %v1261
        %1317 = vmatpush1.bf16.msra.mxu0 %v1260
        %1318 = vmatprep.subr.bf16.mxu0 %v1263
        %1319 = vmatpush1.bf16.msra.mxu0 %v1262
        %1320 = vmatprep.subr.bf16.mxu0 0
        %1321 = vmatpush1.bf16.msra.mxu0 0
        %1322 = vmatprep.subr.bf16.mxu0 0
        %1323 = vmatpush1.bf16.msra.mxu0 0
        %1324 = vmatprep.subr.bf16.mxu0 0
        %1325 = vmatpush1.bf16.msra.mxu0 0
        %1326 = vmatprep.subr.bf16.mxu0 0
        %1327 = vmatpush1.bf16.msra.mxu0 0
        %1328 = vmatprep.subr.bf16.mxu0 0
        %1329 = vmatpush1.bf16.msra.mxu0 0
        %1330 = vmatprep.subr.bf16.mxu0 0
        %1331 = vmatpush1.bf16.msra.mxu0 0
        %1332 = vmatprep.subr.bf16.mxu0 0
        %1333 = vmatpush1.bf16.msra.mxu0 0
        %1334 = vmatprep.subr.bf16.mxu0 0
        %1335 = vmatpush1.bf16.msra.mxu0 0
        %1336 = vmatprep.subr.bf16.mxu0 0
        %1337 = vmatpush1.bf16.msra.mxu0 0
        %1338 = vmatprep.subr.bf16.mxu0 0
        %1339 = vmatpush1.bf16.msra.mxu0 0
        %1340 = vmatprep.subr.bf16.mxu0 0
        %1341 = vmatpush1.bf16.msra.mxu0 0
        %1342 = vmatprep.subr.bf16.mxu0 0
        %1343 = vmatpush1.bf16.msra.mxu0 0
        %1344 = vmatprep.subr.bf16.mxu0 0
        %1345 = vmatpush1.bf16.msra.mxu0 0
        %1346 = vmatprep.subr.bf16.mxu0 0
        %1347 = vmatpush1.bf16.msra.mxu0 0
        %1348 = vmatprep.mubr.bf16.mxu0 0
        %1349 = vmatmul.mubr.bf16.gmra.mrb[0].mxu0 %v1269
        %v1350 = vpop.f32.mrb[0].mxu0
        %v1351 = vadd.f32 0.0, %v1350
        %v1352 = vpop.f32.mrb[0].mxu0
        %v1353 = vadd.f32 0.0, %v1352
        %v1354 = vpop.f32.mrb[0].mxu0
        %v1355 = vadd.f32 0.0, %v1354
        %v1356 = vpop.f32.mrb[0].mxu0
        %v1357 = vadd.f32 0.0, %v1356
        %1358 = vmatprep.mubr.bf16.mxu0 0
        %1359 = vmatmul.mubr.bf16.gmra.mrb[0].mxu0 %v1272
        %v1360 = vpop.f32.mrb[0].mxu0
        %v1361 = vadd.f32 0.0, %v1360
        %v1362 = vpop.f32.mrb[0].mxu0
        %v1363 = vadd.f32 0.0, %v1362
        %v1364 = vpop.f32.mrb[0].mxu0
        %v1365 = vadd.f32 0.0, %v1364
        %v1366 = vpop.f32.mrb[0].mxu0
        %v1367 = vadd.f32 0.0, %v1366
        %1368 = vmatprep.mubr.bf16.mxu0 0
        %1369 = vmatmul.mubr.bf16.gmra.mrb[0].mxu0 %v1275
        %v1370 = vpop.f32.mrb[0].mxu0
        %v1371 = vadd.f32 0.0, %v1370
        %v1372 = vpop.f32.mrb[0].mxu0
        %v1373 = vadd.f32 0.0, %v1372
        %v1374 = vpop.f32.mrb[0].mxu0
        %v1375 = vadd.f32 0.0, %v1374
        %v1376 = vpop.f32.mrb[0].mxu0
        %v1377 = vadd.f32 0.0, %v1376
        %1378 = vmatprep.mubr.bf16.mxu0 0
        %1379 = vmatmul.mubr.bf16.gmra.mrb[0].mxu0 %v1278
        %v1380 = vpop.f32.mrb[0].mxu0
        %v1381 = vadd.f32 0.0, %v1380
        %v1382 = vpop.f32.mrb[0].mxu0
        %v1383 = vadd.f32 0.0, %v1382
        %v1384 = vpop.f32.mrb[0].mxu0
        %v1385 = vadd.f32 0.0, %v1384
        %v1386 = vpop.f32.mrb[0].mxu0
        %v1387 = vadd.f32 0.0, %v1386
        %1388 = vmatprep.mubr.bf16.mxu0 0
        %1389 = vmatmul.mubr.bf16.gmra.mrb[0].mxu0 %v1281
        %v1390 = vpop.f32.mrb[0].mxu0
        %v1391 = vadd.f32 0.0, %v1390
        %v1392 = vpop.f32.mrb[0].mxu0
        %v1393 = vadd.f32 0.0, %v1392
        %v1394 = vpop.f32.mrb[0].mxu0
        %v1395 = vadd.f32 0.0, %v1394
        %v1396 = vpop.f32.mrb[0].mxu0
        %v1397 = vadd.f32 0.0, %v1396
        %1398 = vmatprep.mubr.bf16.mxu0 0
        %1399 = vmatmul.mubr.bf16.gmra.mrb[0].mxu0 %v1284
        %v1400 = vpop.f32.mrb[0].mxu0
        %v1401 = vadd.f32 0.0, %v1400
        %v1402 = vpop.f32.mrb[0].mxu0
        %v1403 = vadd.f32 0.0, %v1402
        %v1404 = vpop.f32.mrb[0].mxu0
        %v1405 = vadd.f32 0.0, %v1404
        %v1406 = vpop.f32.mrb[0].mxu0
        %v1407 = vadd.f32 0.0, %v1406
        %1408 = vmatprep.mubr.bf16.mxu0 0
        %1409 = vmatmul.mubr.bf16.gmra.mrb[0].mxu0 %v1287
        %v1410 = vpop.f32.mrb[0].mxu0
        %v1411 = vadd.f32 0.0, %v1410
        %v1412 = vpop.f32.mrb[0].mxu0
        %v1413 = vadd.f32 0.0, %v1412
        %v1414 = vpop.f32.mrb[0].mxu0
        %v1415 = vadd.f32 0.0, %v1414
        %v1416 = vpop.f32.mrb[0].mxu0
        %v1417 = vadd.f32 0.0, %v1416
        %1418 = vmatprep.mubr.bf16.mxu0 0
        %1419 = vmatmul.mubr.bf16.gmra.mrb[0].mxu0 %v1290
        %v1420 = vpop.f32.mrb[0].mxu0
        %v1421 = vadd.f32 0.0, %v1420
        %v1422 = vpop.f32.mrb[0].mxu0
        %v1423 = vadd.f32 0.0, %v1422
        %v1424 = vpop.f32.mrb[0].mxu0
        %v1425 = vadd.f32 0.0, %v1424
        %v1426 = vpop.f32.mrb[0].mxu0
        %v1427 = vadd.f32 0.0, %v1426
        %1428 = vmatprep.mubr.bf16.mxu0 0
        %1429 = vmatmul.mubr.bf16.gmra.mrb[0].mxu0 %v1293
        %v1430 = vpop.f32.mrb[0].mxu0
        %v1431 = vadd.f32 0.0, %v1430
        %v1432 = vpop.f32.mrb[0].mxu0
        %v1433 = vadd.f32 0.0, %v1432
        %v1434 = vpop.f32.mrb[0].mxu0
        %v1435 = vadd.f32 0.0, %v1434
        %v1436 = vpop.f32.mrb[0].mxu0
        %v1437 = vadd.f32 0.0, %v1436
        %1438 = vmatprep.mubr.bf16.mxu0 0
        %1439 = vmatmul.mubr.bf16.gmra.mrb[0].mxu0 %v1296
        %v1440 = vpop.f32.mrb[0].mxu0
        %v1441 = vadd.f32 0.0, %v1440
        %v1442 = vpop.f32.mrb[0].mxu0
        %v1443 = vadd.f32 0.0, %v1442
        %v1444 = vpop.f32.mrb[0].mxu0
        %v1445 = vadd.f32 0.0, %v1444
        %v1446 = vpop.f32.mrb[0].mxu0
        %v1447 = vadd.f32 0.0, %v1446
        %1448 = vmatprep.mubr.bf16.mxu0 0
        %1449 = vmatmul.mubr.bf16.gmra.mrb[0].mxu0 %v1299
        %v1450 = vpop.f32.mrb[0].mxu0
        %v1451 = vadd.f32 0.0, %v1450
        %v1452 = vpop.f32.mrb[0].mxu0
        %v1453 = vadd.f32 0.0, %v1452
        %v1454 = vpop.f32.mrb[0].mxu0
        %v1455 = vadd.f32 0.0, %v1454
        %v1456 = vpop.f32.mrb[0].mxu0
        %v1457 = vadd.f32 0.0, %v1456
        %1458 = vmatprep.mubr.bf16.mxu0 0
        %1459 = vmatmul.mubr.bf16.gmra.mrb[0].mxu0 %v1302
        %v1460 = vpop.f32.mrb[0].mxu0
        %v1461 = vadd.f32 0.0, %v1460
        %v1462 = vpop.f32.mrb[0].mxu0
        %v1463 = vadd.f32 0.0, %v1462
        %v1464 = vpop.f32.mrb[0].mxu0
        %v1465 = vadd.f32 0.0, %v1464
        %v1466 = vpop.f32.mrb[0].mxu0
        %v1467 = vadd.f32 0.0, %v1466
        %1468 = vmatprep.mubr.bf16.mxu0 0
        %1469 = vmatmul.mubr.bf16.gmra.mrb[0].mxu0 %v1305
        %v1470 = vpop.f32.mrb[0].mxu0
        %v1471 = vadd.f32 0.0, %v1470
        %v1472 = vpop.f32.mrb[0].mxu0
        %v1473 = vadd.f32 0.0, %v1472
        %v1474 = vpop.f32.mrb[0].mxu0
        %v1475 = vadd.f32 0.0, %v1474
        %v1476 = vpop.f32.mrb[0].mxu0
        %v1477 = vadd.f32 0.0, %v1476
        %1478 = vmatprep.mubr.bf16.mxu0 0
        %1479 = vmatmul.mubr.bf16.gmra.mrb[0].mxu0 %v1308
        %v1480 = vpop.f32.mrb[0].mxu0
        %v1481 = vadd.f32 0.0, %v1480
        %v1482 = vpop.f32.mrb[0].mxu0
        %v1483 = vadd.f32 0.0, %v1482
        %v1484 = vpop.f32.mrb[0].mxu0
        %v1485 = vadd.f32 0.0, %v1484
        %v1486 = vpop.f32.mrb[0].mxu0
        %v1487 = vadd.f32 0.0, %v1486
        %1488 = vmatprep.mubr.bf16.mxu0 0
        %1489 = vmatmul.mubr.bf16.gmra.mrb[0].mxu0 %v1311
        %v1490 = vpop.f32.mrb[0].mxu0
        %v1491 = vadd.f32 0.0, %v1490
        %v1492 = vpop.f32.mrb[0].mxu0
        %v1493 = vadd.f32 0.0, %v1492
        %v1494 = vpop.f32.mrb[0].mxu0
        %v1495 = vadd.f32 0.0, %v1494
        %v1496 = vpop.f32.mrb[0].mxu0
        %v1497 = vadd.f32 0.0, %v1496
        %1498 = vmatprep.mubr.bf16.mxu0 0
        %1499 = vmatmul.mubr.bf16.gmra.mrb[0].mxu0 %v1314
        %v1500 = vpop.f32.mrb[0].mxu0
        %v1501 = vadd.f32 0.0, %v1500
        %v1502 = vpop.f32.mrb[0].mxu0
        %v1503 = vadd.f32 0.0, %v1502
        %v1504 = vpop.f32.mrb[0].mxu0
        %v1505 = vadd.f32 0.0, %v1504
        %v1506 = vpop.f32.mrb[0].mxu0
        %v1507 = vadd.f32 0.0, %v1506
        %1508 = vdwg.mxu0
        %v1509 = vadd.f32 %v1050, %v1351
        %v1510 = vadd.f32 %v1052, %v1353
        %v1511 = vadd.f32 %v1054, %v1355
        %v1512 = vadd.f32 %v1056, %v1357
        %v1513 = vadd.f32 %v1060, %v1361
        %v1514 = vadd.f32 %v1062, %v1363
        %v1515 = vadd.f32 %v1064, %v1365
        %v1516 = vadd.f32 %v1066, %v1367
        %v1517 = vadd.f32 %v1070, %v1371
        %v1518 = vadd.f32 %v1072, %v1373
        %v1519 = vadd.f32 %v1074, %v1375
        %v1520 = vadd.f32 %v1076, %v1377
        %v1521 = vadd.f32 %v1080, %v1381
        %v1522 = vadd.f32 %v1082, %v1383
        %v1523 = vadd.f32 %v1084, %v1385
        %v1524 = vadd.f32 %v1086, %v1387
        %v1525 = vadd.f32 %v1090, %v1391
        %v1526 = vadd.f32 %v1092, %v1393
        %v1527 = vadd.f32 %v1094, %v1395
        %v1528 = vadd.f32 %v1096, %v1397
        %v1529 = vadd.f32 %v1100, %v1401
        %v1530 = vadd.f32 %v1102, %v1403
        %v1531 = vadd.f32 %v1104, %v1405
        %v1532 = vadd.f32 %v1106, %v1407
        %v1533 = vadd.f32 %v1110, %v1411
        %v1534 = vadd.f32 %v1112, %v1413
        %v1535 = vadd.f32 %v1114, %v1415
        %v1536 = vadd.f32 %v1116, %v1417
        %v1537 = vadd.f32 %v1120, %v1421
        %v1538 = vadd.f32 %v1122, %v1423
        %v1539 = vadd.f32 %v1124, %v1425
        %v1540 = vadd.f32 %v1126, %v1427
        %v1541 = vadd.f32 %v1130, %v1431
        %v1542 = vadd.f32 %v1132, %v1433
        %v1543 = vadd.f32 %v1134, %v1435
        %v1544 = vadd.f32 %v1136, %v1437
        %v1545 = vadd.f32 %v1140, %v1441
        %v1546 = vadd.f32 %v1142, %v1443
        %v1547 = vadd.f32 %v1144, %v1445
        %v1548 = vadd.f32 %v1146, %v1447
        %v1549 = vadd.f32 %v1150, %v1451
        %v1550 = vadd.f32 %v1152, %v1453
        %v1551 = vadd.f32 %v1154, %v1455
        %v1552 = vadd.f32 %v1156, %v1457
        %v1553 = vadd.f32 %v1160, %v1461
        %v1554 = vadd.f32 %v1162, %v1463
        %v1555 = vadd.f32 %v1164, %v1465
        %v1556 = vadd.f32 %v1166, %v1467
        %v1557 = vadd.f32 %v1170, %v1471
        %v1558 = vadd.f32 %v1172, %v1473
        %v1559 = vadd.f32 %v1174, %v1475
        %v1560 = vadd.f32 %v1176, %v1477
        %v1561 = vadd.f32 %v1180, %v1481
        %v1562 = vadd.f32 %v1182, %v1483
        %v1563 = vadd.f32 %v1184, %v1485
        %v1564 = vadd.f32 %v1186, %v1487
        %v1565 = vadd.f32 %v1190, %v1491
        %v1566 = vadd.f32 %v1192, %v1493
        %v1567 = vadd.f32 %v1194, %v1495
        %v1568 = vadd.f32 %v1196, %v1497
        %v1569 = vadd.f32 %v1200, %v1501
        %v1570 = vadd.f32 %v1202, %v1503
        %v1571 = vadd.f32 %v1204, %v1505
        %v1572 = vadd.f32 %v1206, %v1507
        %s1573 = scalar_lea.vmem [#allocation2], 96
        %v1574 = vld [vmem:[%s1573] sm:$0xff]
        %v1575 = vld [vmem:[%s1573 + $0x8] sm:$0xff]
        %v1576 = vld [vmem:[%s1573 + $0x10] sm:$0xff]
        %v1577 = vld [vmem:[%s1573 + $0x18] sm:$0xff]
        %vm1578 = vsmask.f32 6400
        %v1579 = vrot.slane %v570, 1
        %v1580 = vrot.slane %v572, 2
        %v1581 = vor.u32 %v1579, %v1580
        %v1582 = vrot.slane %v581, 1
        %v1583 = vrot.slane %v577, 2
        %v1584 = vor.u32 %v1582, %v1583
        %v1585 = vsel %vm1578, %v1581, %v1584
        %v1586 = vrot.slane %v589, 1
        %v1587 = vrot.slane %v585, 2
        %v1588 = vor.u32 %v1586, %v1587
        %v1589 = vsel %vm1578, %v1584, %v1588
        %v1590 = vrot.slane %v597, 1
        %v1591 = vrot.slane %v593, 2
        %v1592 = vor.u32 %v1590, %v1591
        %v1593 = vsel %vm1578, %v1588, %v1592
        %v1594 = vrot.slane %v605, 1
        %v1595 = vrot.slane %v601, 2
        %v1596 = vor.u32 %v1594, %v1595
        %v1597 = vsel %vm1578, %v1592, %v1596
        %v1598 = vrot.slane %v613, 1
        %v1599 = vrot.slane %v609, 2
        %v1600 = vor.u32 %v1598, %v1599
        %v1601 = vsel %vm1578, %v1596, %v1600
        %v1602 = vrot.slane %v621, 1
        %v1603 = vrot.slane %v617, 2
        %v1604 = vor.u32 %v1602, %v1603
        %v1605 = vsel %vm1578, %v1600, %v1604
        %v1606 = vrot.slane %v629, 1
        %v1607 = vrot.slane %v625, 2
        %v1608 = vor.u32 %v1606, %v1607
        %v1609 = vsel %vm1578, %v1604, %v1608
        %v1610 = vrot.slane %v637, 1
        %v1611 = vrot.slane %v633, 2
        %v1612 = vor.u32 %v1610, %v1611
        %v1613 = vsel %vm1578, %v1608, %v1612
        %v1614 = vrot.slane %v645, 1
        %v1615 = vrot.slane %v641, 2
        %v1616 = vor.u32 %v1614, %v1615
        %v1617 = vsel %vm1578, %v1612, %v1616
        %v1618 = vrot.slane %v653, 1
        %v1619 = vrot.slane %v649, 2
        %v1620 = vor.u32 %v1618, %v1619
        %v1621 = vsel %vm1578, %v1616, %v1620
        %v1622 = vrot.slane %v661, 1
        %v1623 = vrot.slane %v657, 2
        %v1624 = vor.u32 %v1622, %v1623
        %v1625 = vsel %vm1578, %v1620, %v1624
        %v1626 = vrot.slane %v669, 1
        %v1627 = vrot.slane %v665, 2
        %v1628 = vor.u32 %v1626, %v1627
        %v1629 = vsel %vm1578, %v1624, %v1628
        %v1630 = vrot.slane %v677, 1
        %v1631 = vrot.slane %v673, 2
        %v1632 = vor.u32 %v1630, %v1631
        %v1633 = vsel %vm1578, %v1628, %v1632
        %v1634 = vrot.slane %v685, 1
        %v1635 = vrot.slane %v681, 2
        %v1636 = vor.u32 %v1634, %v1635
        %v1637 = vsel %vm1578, %v1632, %v1636
        %v1638 = vrot.slane %v693, 1
        %v1639 = vrot.slane %v689, 2
        %v1640 = vor.u32 %v1638, %v1639
        %v1641 = vsel %vm1578, %v1636, %v1640
        %v1642 = vshrl.u32 0, 16
        %v1644 = vrot.slane %v1642, 1
        %v1645 = vrot.slane %v697, 2
        %v1646 = vor.u32 %v1644, %v1645
        %v1647 = vsel %vm1578, %v1640, %v1646
        %v1652 = vunpack.c.l.b16 %v1574
        %v1653 = vunpack.c.h.b16 %v1574
        %v1654 = vunpack.c.l.b16 %v1575
        %v1655 = vunpack.c.h.b16 %v1575
        %v1656 = vunpack.c.l.b16 %v1576
        %v1657 = vunpack.c.h.b16 %v1576
        %v1658 = vunpack.c.l.b16 %v1577
        %v1659 = vunpack.c.h.b16 %v1577
        %v1660 = vpack.c.b16 %v1654, %v1652
        %v1661 = vpack.c.b16 %v1655, %v1653
        %v1662 = vpack.c.b16 %v1658, %v1656
        %v1663 = vpack.c.b16 %v1659, %v1657
        %v1669 = vsel %vm721, %v1585, 0
        %v1672 = vsel %vm721, %v1589, 0
        %v1675 = vsel %vm721, %v1593, 0
        %v1678 = vsel %vm721, %v1597, 0
        %v1681 = vsel %vm721, %v1601, 0
        %v1684 = vsel %vm721, %v1605, 0
        %v1687 = vsel %vm721, %v1609, 0
        %v1690 = vsel %vm721, %v1613, 0
        %v1693 = vsel %vm721, %v1617, 0
        %v1696 = vsel %vm721, %v1621, 0
        %v1699 = vsel %vm721, %v1625, 0
        %v1702 = vsel %vm721, %v1629, 0
        %v1705 = vsel %vm721, %v1633, 0
        %v1708 = vsel %vm721, %v1637, 0
        %v1711 = vsel %vm721, %v1641, 0
        %v1714 = vsel %vm721, %v1647, 0
        %1716 = vmatprep.subr.bf16.mxu0 %v1661
        %1717 = vmatpush1.bf16.msra.mxu0 %v1660
        %1718 = vmatprep.subr.bf16.mxu0 %v1663
        %1719 = vmatpush1.bf16.msra.mxu0 %v1662
        %1720 = vmatprep.subr.bf16.mxu0 0
        %1721 = vmatpush1.bf16.msra.mxu0 0
        %1722 = vmatprep.subr.bf16.mxu0 0
        %1723 = vmatpush1.bf16.msra.mxu0 0
        %1724 = vmatprep.subr.bf16.mxu0 0
        %1725 = vmatpush1.bf16.msra.mxu0 0
        %1726 = vmatprep.subr.bf16.mxu0 0
        %1727 = vmatpush1.bf16.msra.mxu0 0
        %1728 = vmatprep.subr.bf16.mxu0 0
        %1729 = vmatpush1.bf16.msra.mxu0 0
        %1730 = vmatprep.subr.bf16.mxu0 0
        %1731 = vmatpush1.bf16.msra.mxu0 0
        %1732 = vmatprep.subr.bf16.mxu0 0
        %1733 = vmatpush1.bf16.msra.mxu0 0
        %1734 = vmatprep.subr.bf16.mxu0 0
        %1735 = vmatpush1.bf16.msra.mxu0 0
        %1736 = vmatprep.subr.bf16.mxu0 0
        %1737 = vmatpush1.bf16.msra.mxu0 0
        %1738 = vmatprep.subr.bf16.mxu0 0
        %1739 = vmatpush1.bf16.msra.mxu0 0
        %1740 = vmatprep.subr.bf16.mxu0 0
        %1741 = vmatpush1.bf16.msra.mxu0 0
        %1742 = vmatprep.subr.bf16.mxu0 0
        %1743 = vmatpush1.bf16.msra.mxu0 0
        %1744 = vmatprep.subr.bf16.mxu0 0
        %1745 = vmatpush1.bf16.msra.mxu0 0
        %1746 = vmatprep.subr.bf16.mxu0 0
        %1747 = vmatpush1.bf16.msra.mxu0 0
        %1748 = vmatprep.mubr.bf16.mxu0 0
        %1749 = vmatmul.mubr.bf16.gmra.mrb[0].mxu0 %v1669
        %v1750 = vpop.f32.mrb[0].mxu0
        %v1751 = vadd.f32 0.0, %v1750
        %v1752 = vpop.f32.mrb[0].mxu0
        %v1753 = vadd.f32 0.0, %v1752
        %v1754 = vpop.f32.mrb[0].mxu0
        %v1755 = vadd.f32 0.0, %v1754
        %v1756 = vpop.f32.mrb[0].mxu0
        %v1757 = vadd.f32 0.0, %v1756
        %1758 = vmatprep.mubr.bf16.mxu0 0
        %1759 = vmatmul.mubr.bf16.gmra.mrb[0].mxu0 %v1672
        %v1760 = vpop.f32.mrb[0].mxu0
        %v1761 = vadd.f32 0.0, %v1760
        %v1762 = vpop.f32.mrb[0].mxu0
        %v1763 = vadd.f32 0.0, %v1762
        %v1764 = vpop.f32.mrb[0].mxu0
        %v1765 = vadd.f32 0.0, %v1764
        %v1766 = vpop.f32.mrb[0].mxu0
        %v1767 = vadd.f32 0.0, %v1766
        %1768 = vmatprep.mubr.bf16.mxu0 0
        %1769 = vmatmul.mubr.bf16.gmra.mrb[0].mxu0 %v1675
        %v1770 = vpop.f32.mrb[0].mxu0
        %v1771 = vadd.f32 0.0, %v1770
        %v1772 = vpop.f32.mrb[0].mxu0
        %v1773 = vadd.f32 0.0, %v1772
        %v1774 = vpop.f32.mrb[0].mxu0
        %v1775 = vadd.f32 0.0, %v1774
        %v1776 = vpop.f32.mrb[0].mxu0
        %v1777 = vadd.f32 0.0, %v1776
        %1778 = vmatprep.mubr.bf16.mxu0 0
        %1779 = vmatmul.mubr.bf16.gmra.mrb[0].mxu0 %v1678
        %v1780 = vpop.f32.mrb[0].mxu0
        %v1781 = vadd.f32 0.0, %v1780
        %v1782 = vpop.f32.mrb[0].mxu0
        %v1783 = vadd.f32 0.0, %v1782
        %v1784 = vpop.f32.mrb[0].mxu0
        %v1785 = vadd.f32 0.0, %v1784
        %v1786 = vpop.f32.mrb[0].mxu0
        %v1787 = vadd.f32 0.0, %v1786
        %1788 = vmatprep.mubr.bf16.mxu0 0
        %1789 = vmatmul.mubr.bf16.gmra.mrb[0].mxu0 %v1681
        %v1790 = vpop.f32.mrb[0].mxu0
        %v1791 = vadd.f32 0.0, %v1790
        %v1792 = vpop.f32.mrb[0].mxu0
        %v1793 = vadd.f32 0.0, %v1792
        %v1794 = vpop.f32.mrb[0].mxu0
        %v1795 = vadd.f32 0.0, %v1794
        %v1796 = vpop.f32.mrb[0].mxu0
        %v1797 = vadd.f32 0.0, %v1796
        %1798 = vmatprep.mubr.bf16.mxu0 0
        %1799 = vmatmul.mubr.bf16.gmra.mrb[0].mxu0 %v1684
        %v1800 = vpop.f32.mrb[0].mxu0
        %v1801 = vadd.f32 0.0, %v1800
        %v1802 = vpop.f32.mrb[0].mxu0
        %v1803 = vadd.f32 0.0, %v1802
        %v1804 = vpop.f32.mrb[0].mxu0
        %v1805 = vadd.f32 0.0, %v1804
        %v1806 = vpop.f32.mrb[0].mxu0
        %v1807 = vadd.f32 0.0, %v1806
        %1808 = vmatprep.mubr.bf16.mxu0 0
        %1809 = vmatmul.mubr.bf16.gmra.mrb[0].mxu0 %v1687
        %v1810 = vpop.f32.mrb[0].mxu0
        %v1811 = vadd.f32 0.0, %v1810
        %v1812 = vpop.f32.mrb[0].mxu0
        %v1813 = vadd.f32 0.0, %v1812
        %v1814 = vpop.f32.mrb[0].mxu0
        %v1815 = vadd.f32 0.0, %v1814
        %v1816 = vpop.f32.mrb[0].mxu0
        %v1817 = vadd.f32 0.0, %v1816
        %1818 = vmatprep.mubr.bf16.mxu0 0
        %1819 = vmatmul.mubr.bf16.gmra.mrb[0].mxu0 %v1690
        %v1820 = vpop.f32.mrb[0].mxu0
        %v1821 = vadd.f32 0.0, %v1820
        %v1822 = vpop.f32.mrb[0].mxu0
        %v1823 = vadd.f32 0.0, %v1822
        %v1824 = vpop.f32.mrb[0].mxu0
        %v1825 = vadd.f32 0.0, %v1824
        %v1826 = vpop.f32.mrb[0].mxu0
        %v1827 = vadd.f32 0.0, %v1826
        %1828 = vmatprep.mubr.bf16.mxu0 0
        %1829 = vmatmul.mubr.bf16.gmra.mrb[0].mxu0 %v1693
        %v1830 = vpop.f32.mrb[0].mxu0
        %v1831 = vadd.f32 0.0, %v1830
        %v1832 = vpop.f32.mrb[0].mxu0
        %v1833 = vadd.f32 0.0, %v1832
        %v1834 = vpop.f32.mrb[0].mxu0
        %v1835 = vadd.f32 0.0, %v1834
        %v1836 = vpop.f32.mrb[0].mxu0
        %v1837 = vadd.f32 0.0, %v1836
        %1838 = vmatprep.mubr.bf16.mxu0 0
        %1839 = vmatmul.mubr.bf16.gmra.mrb[0].mxu0 %v1696
        %v1840 = vpop.f32.mrb[0].mxu0
        %v1841 = vadd.f32 0.0, %v1840
        %v1842 = vpop.f32.mrb[0].mxu0
        %v1843 = vadd.f32 0.0, %v1842
        %v1844 = vpop.f32.mrb[0].mxu0
        %v1845 = vadd.f32 0.0, %v1844
        %v1846 = vpop.f32.mrb[0].mxu0
        %v1847 = vadd.f32 0.0, %v1846
        %1848 = vmatprep.mubr.bf16.mxu0 0
        %1849 = vmatmul.mubr.bf16.gmra.mrb[0].mxu0 %v1699
        %v1850 = vpop.f32.mrb[0].mxu0
        %v1851 = vadd.f32 0.0, %v1850
        %v1852 = vpop.f32.mrb[0].mxu0
        %v1853 = vadd.f32 0.0, %v1852
        %v1854 = vpop.f32.mrb[0].mxu0
        %v1855 = vadd.f32 0.0, %v1854
        %v1856 = vpop.f32.mrb[0].mxu0
        %v1857 = vadd.f32 0.0, %v1856
        %1858 = vmatprep.mubr.bf16.mxu0 0
        %1859 = vmatmul.mubr.bf16.gmra.mrb[0].mxu0 %v1702
        %v1860 = vpop.f32.mrb[0].mxu0
        %v1861 = vadd.f32 0.0, %v1860
        %v1862 = vpop.f32.mrb[0].mxu0
        %v1863 = vadd.f32 0.0, %v1862
        %v1864 = vpop.f32.mrb[0].mxu0
        %v1865 = vadd.f32 0.0, %v1864
        %v1866 = vpop.f32.mrb[0].mxu0
        %v1867 = vadd.f32 0.0, %v1866
        %1868 = vmatprep.mubr.bf16.mxu0 0
        %1869 = vmatmul.mubr.bf16.gmra.mrb[0].mxu0 %v1705
        %v1870 = vpop.f32.mrb[0].mxu0
        %v1871 = vadd.f32 0.0, %v1870
        %v1872 = vpop.f32.mrb[0].mxu0
        %v1873 = vadd.f32 0.0, %v1872
        %v1874 = vpop.f32.mrb[0].mxu0
        %v1875 = vadd.f32 0.0, %v1874
        %v1876 = vpop.f32.mrb[0].mxu0
        %v1877 = vadd.f32 0.0, %v1876
        %1878 = vmatprep.mubr.bf16.mxu0 0
        %1879 = vmatmul.mubr.bf16.gmra.mrb[0].mxu0 %v1708
        %v1880 = vpop.f32.mrb[0].mxu0
        %v1881 = vadd.f32 0.0, %v1880
        %v1882 = vpop.f32.mrb[0].mxu0
        %v1883 = vadd.f32 0.0, %v1882
        %v1884 = vpop.f32.mrb[0].mxu0
        %v1885 = vadd.f32 0.0, %v1884
        %v1886 = vpop.f32.mrb[0].mxu0
        %v1887 = vadd.f32 0.0, %v1886
        %1888 = vmatprep.mubr.bf16.mxu0 0
        %1889 = vmatmul.mubr.bf16.gmra.mrb[0].mxu0 %v1711
        %v1890 = vpop.f32.mrb[0].mxu0
        %v1891 = vadd.f32 0.0, %v1890
        %v1892 = vpop.f32.mrb[0].mxu0
        %v1893 = vadd.f32 0.0, %v1892
        %v1894 = vpop.f32.mrb[0].mxu0
        %v1895 = vadd.f32 0.0, %v1894
        %v1896 = vpop.f32.mrb[0].mxu0
        %v1897 = vadd.f32 0.0, %v1896
        %1898 = vmatprep.mubr.bf16.mxu0 0
        %1899 = vmatmul.mubr.bf16.gmra.mrb[0].mxu0 %v1714
        %v1900 = vpop.f32.mrb[0].mxu0
        %v1901 = vadd.f32 0.0, %v1900
        %v1902 = vpop.f32.mrb[0].mxu0
        %v1903 = vadd.f32 0.0, %v1902
        %v1904 = vpop.f32.mrb[0].mxu0
        %v1905 = vadd.f32 0.0, %v1904
        %v1906 = vpop.f32.mrb[0].mxu0
        %v1907 = vadd.f32 0.0, %v1906
        %1908 = vdwg.mxu0
        %v1909 = vadd.f32 %v1509, %v1751
        %v1910 = vadd.f32 %v1510, %v1753
        %v1911 = vadd.f32 %v1511, %v1755
        %v1912 = vadd.f32 %v1512, %v1757
        %v1913 = vadd.f32 %v1513, %v1761
        %v1914 = vadd.f32 %v1514, %v1763
        %v1915 = vadd.f32 %v1515, %v1765
        %v1916 = vadd.f32 %v1516, %v1767
        %v1917 = vadd.f32 %v1517, %v1771
        %v1918 = vadd.f32 %v1518, %v1773
        %v1919 = vadd.f32 %v1519, %v1775
        %v1920 = vadd.f32 %v1520, %v1777
        %v1921 = vadd.f32 %v1521, %v1781
        %v1922 = vadd.f32 %v1522, %v1783
        %v1923 = vadd.f32 %v1523, %v1785
        %v1924 = vadd.f32 %v1524, %v1787
        %v1925 = vadd.f32 %v1525, %v1791
        %v1926 = vadd.f32 %v1526, %v1793
        %v1927 = vadd.f32 %v1527, %v1795
        %v1928 = vadd.f32 %v1528, %v1797
        %v1929 = vadd.f32 %v1529, %v1801
        %v1930 = vadd.f32 %v1530, %v1803
        %v1931 = vadd.f32 %v1531, %v1805
        %v1932 = vadd.f32 %v1532, %v1807
        %v1933 = vadd.f32 %v1533, %v1811
        %v1934 = vadd.f32 %v1534, %v1813
        %v1935 = vadd.f32 %v1535, %v1815
        %v1936 = vadd.f32 %v1536, %v1817
        %v1937 = vadd.f32 %v1537, %v1821
        %v1938 = vadd.f32 %v1538, %v1823
        %v1939 = vadd.f32 %v1539, %v1825
        %v1940 = vadd.f32 %v1540, %v1827
        %v1941 = vadd.f32 %v1541, %v1831
        %v1942 = vadd.f32 %v1542, %v1833
        %v1943 = vadd.f32 %v1543, %v1835
        %v1944 = vadd.f32 %v1544, %v1837
        %v1945 = vadd.f32 %v1545, %v1841
        %v1946 = vadd.f32 %v1546, %v1843
        %v1947 = vadd.f32 %v1547, %v1845
        %v1948 = vadd.f32 %v1548, %v1847
        %v1949 = vadd.f32 %v1549, %v1851
        %v1950 = vadd.f32 %v1550, %v1853
        %v1951 = vadd.f32 %v1551, %v1855
        %v1952 = vadd.f32 %v1552, %v1857
        %v1953 = vadd.f32 %v1553, %v1861
        %v1954 = vadd.f32 %v1554, %v1863
        %v1955 = vadd.f32 %v1555, %v1865
        %v1956 = vadd.f32 %v1556, %v1867
        %v1957 = vadd.f32 %v1557, %v1871
        %v1958 = vadd.f32 %v1558, %v1873
        %v1959 = vadd.f32 %v1559, %v1875
        %v1960 = vadd.f32 %v1560, %v1877
        %v1961 = vadd.f32 %v1561, %v1881
        %v1962 = vadd.f32 %v1562, %v1883
        %v1963 = vadd.f32 %v1563, %v1885
        %v1964 = vadd.f32 %v1564, %v1887
        %v1965 = vadd.f32 %v1565, %v1891
        %v1966 = vadd.f32 %v1566, %v1893
        %v1967 = vadd.f32 %v1567, %v1895
        %v1968 = vadd.f32 %v1568, %v1897
        %v1969 = vadd.f32 %v1569, %v1901
        %v1970 = vadd.f32 %v1570, %v1903
        %v1971 = vadd.f32 %v1571, %v1905
        %v1972 = vadd.f32 %v1572, %v1907
        %s1973 = scalar_lea.vmem [#allocation2], 128
        %v1974 = vld [vmem:[%s1973] sm:$0xff]
        %v1975 = vld [vmem:[%s1973 + $0x8] sm:$0xff]
        %v1976 = vld [vmem:[%s1973 + $0x10] sm:$0xff]
        %v1977 = vld [vmem:[%s1973 + $0x18] sm:$0xff]
        %vm1978 = vcmask 1045504
        %v1979 = vrot.slane %v543, 2
        %v1980 = vrot.slane %v544, 2
        %v1981 = vsel %vm1978, %v1979, %v1980
        %v1982 = vrot.slane %v545, 2
        %v1983 = vsel %vm1978, %v1980, %v1982
        %v1984 = vrot.slane %v546, 2
        %v1985 = vsel %vm1978, %v1982, %v1984
        %v1986 = vrot.slane %v547, 2
        %v1987 = vsel %vm1978, %v1984, %v1986
        %v1988 = vrot.slane %v548, 2
        %v1989 = vsel %vm1978, %v1986, %v1988
        %v1990 = vrot.slane %v549, 2
        %v1991 = vsel %vm1978, %v1988, %v1990
        %v1992 = vrot.slane %v550, 2
        %v1993 = vsel %vm1978, %v1990, %v1992
        %v1994 = vrot.slane %v551, 2
        %v1995 = vsel %vm1978, %v1992, %v1994
        %v1996 = vrot.slane %v552, 2
        %v1997 = vsel %vm1978, %v1994, %v1996
        %v1998 = vrot.slane %v553, 2
        %v1999 = vsel %vm1978, %v1996, %v1998
        %v2000 = vrot.slane %v554, 2
        %v2001 = vsel %vm1978, %v1998, %v2000
        %v2002 = vrot.slane %v555, 2
        %v2003 = vsel %vm1978, %v2000, %v2002
        %v2004 = vrot.slane %v556, 2
        %v2005 = vsel %vm1978, %v2002, %v2004
        %v2006 = vrot.slane %v557, 2
        %v2007 = vsel %vm1978, %v2004, %v2006
        %v2008 = vrot.slane %v558, 2
        %v2009 = vsel %vm1978, %v2006, %v2008
        %v2010 = vrot.slane 0, 2
        %v2011 = vsel %vm1978, %v2008, %v2010
        %v2016 = vunpack.c.l.b16 %v1974
        %v2017 = vunpack.c.h.b16 %v1974
        %v2018 = vunpack.c.l.b16 %v1975
        %v2019 = vunpack.c.h.b16 %v1975
        %v2020 = vunpack.c.l.b16 %v1976
        %v2021 = vunpack.c.h.b16 %v1976
        %v2022 = vunpack.c.l.b16 %v1977
        %v2023 = vunpack.c.h.b16 %v1977
        %v2024 = vpack.c.b16 %v2018, %v2016
        %v2025 = vpack.c.b16 %v2019, %v2017
        %v2026 = vpack.c.b16 %v2022, %v2020
        %v2027 = vpack.c.b16 %v2023, %v2021
        %v2033 = vsel %vm721, %v1981, 0
        %v2036 = vsel %vm721, %v1983, 0
        %v2039 = vsel %vm721, %v1985, 0
        %v2042 = vsel %vm721, %v1987, 0
        %v2045 = vsel %vm721, %v1989, 0
        %v2048 = vsel %vm721, %v1991, 0
        %v2051 = vsel %vm721, %v1993, 0
        %v2054 = vsel %vm721, %v1995, 0
        %v2057 = vsel %vm721, %v1997, 0
        %v2060 = vsel %vm721, %v1999, 0
        %v2063 = vsel %vm721, %v2001, 0
        %v2066 = vsel %vm721, %v2003, 0
        %v2069 = vsel %vm721, %v2005, 0
        %v2072 = vsel %vm721, %v2007, 0
        %v2075 = vsel %vm721, %v2009, 0
        %v2078 = vsel %vm721, %v2011, 0
        %2080 = vmatprep.subr.bf16.mxu0 %v2025
        %2081 = vmatpush1.bf16.msra.mxu0 %v2024
        %2082 = vmatprep.subr.bf16.mxu0 %v2027
        %2083 = vmatpush1.bf16.msra.mxu0 %v2026
        %2084 = vmatprep.subr.bf16.mxu0 0
        %2085 = vmatpush1.bf16.msra.mxu0 0
        %2086 = vmatprep.subr.bf16.mxu0 0
        %2087 = vmatpush1.bf16.msra.mxu0 0
        %2088 = vmatprep.subr.bf16.mxu0 0
        %2089 = vmatpush1.bf16.msra.mxu0 0
        %2090 = vmatprep.subr.bf16.mxu0 0
        %2091 = vmatpush1.bf16.msra.mxu0 0
        %2092 = vmatprep.subr.bf16.mxu0 0
        %2093 = vmatpush1.bf16.msra.mxu0 0
        %2094 = vmatprep.subr.bf16.mxu0 0
        %2095 = vmatpush1.bf16.msra.mxu0 0
        %2096 = vmatprep.subr.bf16.mxu0 0
        %2097 = vmatpush1.bf16.msra.mxu0 0
        %2098 = vmatprep.subr.bf16.mxu0 0
        %2099 = vmatpush1.bf16.msra.mxu0 0
        %2100 = vmatprep.subr.bf16.mxu0 0
        %2101 = vmatpush1.bf16.msra.mxu0 0
        %2102 = vmatprep.subr.bf16.mxu0 0
        %2103 = vmatpush1.bf16.msra.mxu0 0
        %2104 = vmatprep.subr.bf16.mxu0 0
        %2105 = vmatpush1.bf16.msra.mxu0 0
        %2106 = vmatprep.subr.bf16.mxu0 0
        %2107 = vmatpush1.bf16.msra.mxu0 0
        %2108 = vmatprep.subr.bf16.mxu0 0
        %2109 = vmatpush1.bf16.msra.mxu0 0
        %2110 = vmatprep.subr.bf16.mxu0 0
        %2111 = vmatpush1.bf16.msra.mxu0 0
        %2112 = vmatprep.mubr.bf16.mxu0 0
        %2113 = vmatmul.mubr.bf16.gmra.mrb[0].mxu0 %v2033
        %v2114 = vpop.f32.mrb[0].mxu0
        %v2115 = vadd.f32 0.0, %v2114
        %v2116 = vpop.f32.mrb[0].mxu0
        %v2117 = vadd.f32 0.0, %v2116
        %v2118 = vpop.f32.mrb[0].mxu0
        %v2119 = vadd.f32 0.0, %v2118
        %v2120 = vpop.f32.mrb[0].mxu0
        %v2121 = vadd.f32 0.0, %v2120
        %2122 = vmatprep.mubr.bf16.mxu0 0
        %2123 = vmatmul.mubr.bf16.gmra.mrb[0].mxu0 %v2036
        %v2124 = vpop.f32.mrb[0].mxu0
        %v2125 = vadd.f32 0.0, %v2124
        %v2126 = vpop.f32.mrb[0].mxu0
        %v2127 = vadd.f32 0.0, %v2126
        %v2128 = vpop.f32.mrb[0].mxu0
        %v2129 = vadd.f32 0.0, %v2128
        %v2130 = vpop.f32.mrb[0].mxu0
        %v2131 = vadd.f32 0.0, %v2130
        %2132 = vmatprep.mubr.bf16.mxu0 0
        %2133 = vmatmul.mubr.bf16.gmra.mrb[0].mxu0 %v2039
        %v2134 = vpop.f32.mrb[0].mxu0
        %v2135 = vadd.f32 0.0, %v2134
        %v2136 = vpop.f32.mrb[0].mxu0
        %v2137 = vadd.f32 0.0, %v2136
        %v2138 = vpop.f32.mrb[0].mxu0
        %v2139 = vadd.f32 0.0, %v2138
        %v2140 = vpop.f32.mrb[0].mxu0
        %v2141 = vadd.f32 0.0, %v2140
        %2142 = vmatprep.mubr.bf16.mxu0 0
        %2143 = vmatmul.mubr.bf16.gmra.mrb[0].mxu0 %v2042
        %v2144 = vpop.f32.mrb[0].mxu0
        %v2145 = vadd.f32 0.0, %v2144
        %v2146 = vpop.f32.mrb[0].mxu0
        %v2147 = vadd.f32 0.0, %v2146
        %v2148 = vpop.f32.mrb[0].mxu0
        %v2149 = vadd.f32 0.0, %v2148
        %v2150 = vpop.f32.mrb[0].mxu0
        %v2151 = vadd.f32 0.0, %v2150
        %2152 = vmatprep.mubr.bf16.mxu0 0
        %2153 = vmatmul.mubr.bf16.gmra.mrb[0].mxu0 %v2045
        %v2154 = vpop.f32.mrb[0].mxu0
        %v2155 = vadd.f32 0.0, %v2154
        %v2156 = vpop.f32.mrb[0].mxu0
        %v2157 = vadd.f32 0.0, %v2156
        %v2158 = vpop.f32.mrb[0].mxu0
        %v2159 = vadd.f32 0.0, %v2158
        %v2160 = vpop.f32.mrb[0].mxu0
        %v2161 = vadd.f32 0.0, %v2160
        %2162 = vmatprep.mubr.bf16.mxu0 0
        %2163 = vmatmul.mubr.bf16.gmra.mrb[0].mxu0 %v2048
        %v2164 = vpop.f32.mrb[0].mxu0
        %v2165 = vadd.f32 0.0, %v2164
        %v2166 = vpop.f32.mrb[0].mxu0
        %v2167 = vadd.f32 0.0, %v2166
        %v2168 = vpop.f32.mrb[0].mxu0
        %v2169 = vadd.f32 0.0, %v2168
        %v2170 = vpop.f32.mrb[0].mxu0
        %v2171 = vadd.f32 0.0, %v2170
        %2172 = vmatprep.mubr.bf16.mxu0 0
        %2173 = vmatmul.mubr.bf16.gmra.mrb[0].mxu0 %v2051
        %v2174 = vpop.f32.mrb[0].mxu0
        %v2175 = vadd.f32 0.0, %v2174
        %v2176 = vpop.f32.mrb[0].mxu0
        %v2177 = vadd.f32 0.0, %v2176
        %v2178 = vpop.f32.mrb[0].mxu0
        %v2179 = vadd.f32 0.0, %v2178
        %v2180 = vpop.f32.mrb[0].mxu0
        %v2181 = vadd.f32 0.0, %v2180
        %2182 = vmatprep.mubr.bf16.mxu0 0
        %2183 = vmatmul.mubr.bf16.gmra.mrb[0].mxu0 %v2054
        %v2184 = vpop.f32.mrb[0].mxu0
        %v2185 = vadd.f32 0.0, %v2184
        %v2186 = vpop.f32.mrb[0].mxu0
        %v2187 = vadd.f32 0.0, %v2186
        %v2188 = vpop.f32.mrb[0].mxu0
        %v2189 = vadd.f32 0.0, %v2188
        %v2190 = vpop.f32.mrb[0].mxu0
        %v2191 = vadd.f32 0.0, %v2190
        %2192 = vmatprep.mubr.bf16.mxu0 0
        %2193 = vmatmul.mubr.bf16.gmra.mrb[0].mxu0 %v2057
        %v2194 = vpop.f32.mrb[0].mxu0
        %v2195 = vadd.f32 0.0, %v2194
        %v2196 = vpop.f32.mrb[0].mxu0
        %v2197 = vadd.f32 0.0, %v2196
        %v2198 = vpop.f32.mrb[0].mxu0
        %v2199 = vadd.f32 0.0, %v2198
        %v2200 = vpop.f32.mrb[0].mxu0
        %v2201 = vadd.f32 0.0, %v2200
        %2202 = vmatprep.mubr.bf16.mxu0 0
        %2203 = vmatmul.mubr.bf16.gmra.mrb[0].mxu0 %v2060
        %v2204 = vpop.f32.mrb[0].mxu0
        %v2205 = vadd.f32 0.0, %v2204
        %v2206 = vpop.f32.mrb[0].mxu0
        %v2207 = vadd.f32 0.0, %v2206
        %v2208 = vpop.f32.mrb[0].mxu0
        %v2209 = vadd.f32 0.0, %v2208
        %v2210 = vpop.f32.mrb[0].mxu0
        %v2211 = vadd.f32 0.0, %v2210
        %2212 = vmatprep.mubr.bf16.mxu0 0
        %2213 = vmatmul.mubr.bf16.gmra.mrb[0].mxu0 %v2063
        %v2214 = vpop.f32.mrb[0].mxu0
        %v2215 = vadd.f32 0.0, %v2214
        %v2216 = vpop.f32.mrb[0].mxu0
        %v2217 = vadd.f32 0.0, %v2216
        %v2218 = vpop.f32.mrb[0].mxu0
        %v2219 = vadd.f32 0.0, %v2218
        %v2220 = vpop.f32.mrb[0].mxu0
        %v2221 = vadd.f32 0.0, %v2220
        %2222 = vmatprep.mubr.bf16.mxu0 0
        %2223 = vmatmul.mubr.bf16.gmra.mrb[0].mxu0 %v2066
        %v2224 = vpop.f32.mrb[0].mxu0
        %v2225 = vadd.f32 0.0, %v2224
        %v2226 = vpop.f32.mrb[0].mxu0
        %v2227 = vadd.f32 0.0, %v2226
        %v2228 = vpop.f32.mrb[0].mxu0
        %v2229 = vadd.f32 0.0, %v2228
        %v2230 = vpop.f32.mrb[0].mxu0
        %v2231 = vadd.f32 0.0, %v2230
        %2232 = vmatprep.mubr.bf16.mxu0 0
        %2233 = vmatmul.mubr.bf16.gmra.mrb[0].mxu0 %v2069
        %v2234 = vpop.f32.mrb[0].mxu0
        %v2235 = vadd.f32 0.0, %v2234
        %v2236 = vpop.f32.mrb[0].mxu0
        %v2237 = vadd.f32 0.0, %v2236
        %v2238 = vpop.f32.mrb[0].mxu0
        %v2239 = vadd.f32 0.0, %v2238
        %v2240 = vpop.f32.mrb[0].mxu0
        %v2241 = vadd.f32 0.0, %v2240
        %2242 = vmatprep.mubr.bf16.mxu0 0
        %2243 = vmatmul.mubr.bf16.gmra.mrb[0].mxu0 %v2072
        %v2244 = vpop.f32.mrb[0].mxu0
        %v2245 = vadd.f32 0.0, %v2244
        %v2246 = vpop.f32.mrb[0].mxu0
        %v2247 = vadd.f32 0.0, %v2246
        %v2248 = vpop.f32.mrb[0].mxu0
        %v2249 = vadd.f32 0.0, %v2248
        %v2250 = vpop.f32.mrb[0].mxu0
        %v2251 = vadd.f32 0.0, %v2250
        %2252 = vmatprep.mubr.bf16.mxu0 0
        %2253 = vmatmul.mubr.bf16.gmra.mrb[0].mxu0 %v2075
        %v2254 = vpop.f32.mrb[0].mxu0
        %v2255 = vadd.f32 0.0, %v2254
        %v2256 = vpop.f32.mrb[0].mxu0
        %v2257 = vadd.f32 0.0, %v2256
        %v2258 = vpop.f32.mrb[0].mxu0
        %v2259 = vadd.f32 0.0, %v2258
        %v2260 = vpop.f32.mrb[0].mxu0
        %v2261 = vadd.f32 0.0, %v2260
        %2262 = vmatprep.mubr.bf16.mxu0 0
        %2263 = vmatmul.mubr.bf16.gmra.mrb[0].mxu0 %v2078
        %v2264 = vpop.f32.mrb[0].mxu0
        %v2265 = vadd.f32 0.0, %v2264
        %v2266 = vpop.f32.mrb[0].mxu0
        %v2267 = vadd.f32 0.0, %v2266
        %v2268 = vpop.f32.mrb[0].mxu0
        %v2269 = vadd.f32 0.0, %v2268
        %v2270 = vpop.f32.mrb[0].mxu0
        %v2271 = vadd.f32 0.0, %v2270
        %2272 = vdwg.mxu0
        %v2273 = vadd.f32 %v1909, %v2115
        %v2274 = vadd.f32 %v1910, %v2117
        %v2275 = vadd.f32 %v1911, %v2119
        %v2276 = vadd.f32 %v1912, %v2121
        %v2277 = vadd.f32 %v1913, %v2125
        %v2278 = vadd.f32 %v1914, %v2127
        %v2279 = vadd.f32 %v1915, %v2129
        %v2280 = vadd.f32 %v1916, %v2131
        %v2281 = vadd.f32 %v1917, %v2135
        %v2282 = vadd.f32 %v1918, %v2137
        %v2283 = vadd.f32 %v1919, %v2139
        %v2284 = vadd.f32 %v1920, %v2141
        %v2285 = vadd.f32 %v1921, %v2145
        %v2286 = vadd.f32 %v1922, %v2147
        %v2287 = vadd.f32 %v1923, %v2149
        %v2288 = vadd.f32 %v1924, %v2151
        %v2289 = vadd.f32 %v1925, %v2155
        %v2290 = vadd.f32 %v1926, %v2157
        %v2291 = vadd.f32 %v1927, %v2159
        %v2292 = vadd.f32 %v1928, %v2161
        %v2293 = vadd.f32 %v1929, %v2165
        %v2294 = vadd.f32 %v1930, %v2167
        %v2295 = vadd.f32 %v1931, %v2169
        %v2296 = vadd.f32 %v1932, %v2171
        %v2297 = vadd.f32 %v1933, %v2175
        %v2298 = vadd.f32 %v1934, %v2177
        %v2299 = vadd.f32 %v1935, %v2179
        %v2300 = vadd.f32 %v1936, %v2181
        %v2301 = vadd.f32 %v1937, %v2185
        %v2302 = vadd.f32 %v1938, %v2187
        %v2303 = vadd.f32 %v1939, %v2189
        %v2304 = vadd.f32 %v1940, %v2191
        %v2305 = vadd.f32 %v1941, %v2195
        %v2306 = vadd.f32 %v1942, %v2197
        %v2307 = vadd.f32 %v1943, %v2199
        %v2308 = vadd.f32 %v1944, %v2201
        %v2309 = vadd.f32 %v1945, %v2205
        %v2310 = vadd.f32 %v1946, %v2207
        %v2311 = vadd.f32 %v1947, %v2209
        %v2312 = vadd.f32 %v1948, %v2211
        %v2313 = vadd.f32 %v1949, %v2215
        %v2314 = vadd.f32 %v1950, %v2217
        %v2315 = vadd.f32 %v1951, %v2219
        %v2316 = vadd.f32 %v1952, %v2221
        %v2317 = vadd.f32 %v1953, %v2225
        %v2318 = vadd.f32 %v1954, %v2227
        %v2319 = vadd.f32 %v1955, %v2229
        %v2320 = vadd.f32 %v1956, %v2231
        %v2321 = vadd.f32 %v1957, %v2235
        %v2322 = vadd.f32 %v1958, %v2237
        %v2323 = vadd.f32 %v1959, %v2239
        %v2324 = vadd.f32 %v1960, %v2241
        %v2325 = vadd.f32 %v1961, %v2245
        %v2326 = vadd.f32 %v1962, %v2247
        %v2327 = vadd.f32 %v1963, %v2249
        %v2328 = vadd.f32 %v1964, %v2251
        %v2329 = vadd.f32 %v1965, %v2255
        %v2330 = vadd.f32 %v1966, %v2257
        %v2331 = vadd.f32 %v1967, %v2259
        %v2332 = vadd.f32 %v1968, %v2261
        %v2333 = vadd.f32 %v1969, %v2265
        %v2334 = vadd.f32 %v1970, %v2267
        %v2335 = vadd.f32 %v1971, %v2269
        %v2336 = vadd.f32 %v1972, %v2271
        %v2337 = vmax.f32 %v2273, %v2274
        %v2338 = vmax.f32 %v2275, %v2276
        %v2339 = vmax.f32 %v2277, %v2278
        %v2340 = vmax.f32 %v2279, %v2280
        %v2341 = vmax.f32 %v2281, %v2282
        %v2342 = vmax.f32 %v2283, %v2284
        %v2343 = vmax.f32 %v2285, %v2286
        %v2344 = vmax.f32 %v2287, %v2288
        %v2345 = vmax.f32 %v2289, %v2290
        %v2346 = vmax.f32 %v2291, %v2292
        %v2347 = vmax.f32 %v2293, %v2294
        %v2348 = vmax.f32 %v2295, %v2296
        %v2349 = vmax.f32 %v2297, %v2298
        %v2350 = vmax.f32 %v2299, %v2300
        %v2351 = vmax.f32 %v2301, %v2302
        %v2352 = vmax.f32 %v2303, %v2304
        %v2353 = vmax.f32 %v2305, %v2306
        %v2354 = vmax.f32 %v2307, %v2308
        %v2355 = vmax.f32 %v2309, %v2310
        %v2356 = vmax.f32 %v2311, %v2312
        %v2357 = vmax.f32 %v2313, %v2314
        %v2358 = vmax.f32 %v2315, %v2316
        %v2359 = vmax.f32 %v2317, %v2318
        %v2360 = vmax.f32 %v2319, %v2320
        %v2361 = vmax.f32 %v2321, %v2322
        %v2362 = vmax.f32 %v2323, %v2324
        %v2363 = vmax.f32 %v2325, %v2326
        %v2364 = vmax.f32 %v2327, %v2328
        %v2365 = vmax.f32 %v2329, %v2330
        %v2366 = vmax.f32 %v2331, %v2332
        %v2367 = vmax.f32 %v2333, %v2334
        %v2368 = vmax.f32 %v2335, %v2336
        %v2369 = vld [vmem:[%s2] sm:$0x1]
        %v2371 = vlaneseq
        %v2372 = vshrl.u32 %v2371, 7
        %v2373 = vsub.s32 0, %v2372
        %v2374 = vrot.slane %v2369, %v2373
        %v2376 = vadd.f32 %v2337, %v2374
        %v2377 = vadd.f32 %v2338, %v2374
        %v2378 = vadd.f32 %v2339, %v2374
        %v2379 = vadd.f32 %v2340, %v2374
        %v2380 = vadd.f32 %v2341, %v2374
        %v2381 = vadd.f32 %v2342, %v2374
        %v2382 = vadd.f32 %v2343, %v2374
        %v2383 = vadd.f32 %v2344, %v2374
        %v2384 = vadd.f32 %v2345, %v2374
        %v2385 = vadd.f32 %v2346, %v2374
        %v2386 = vadd.f32 %v2347, %v2374
        %v2387 = vadd.f32 %v2348, %v2374
        %v2388 = vadd.f32 %v2349, %v2374
        %v2389 = vadd.f32 %v2350, %v2374
        %v2390 = vadd.f32 %v2351, %v2374
        %v2391 = vadd.f32 %v2352, %v2374
        %v2392 = vadd.f32 %v2353, %v2374
        %v2393 = vadd.f32 %v2354, %v2374
        %v2394 = vadd.f32 %v2355, %v2374
        %v2395 = vadd.f32 %v2356, %v2374
        %v2396 = vadd.f32 %v2357, %v2374
        %v2397 = vadd.f32 %v2358, %v2374
        %v2398 = vadd.f32 %v2359, %v2374
        %v2399 = vadd.f32 %v2360, %v2374
        %v2400 = vadd.f32 %v2361, %v2374
        %v2401 = vadd.f32 %v2362, %v2374
        %v2402 = vadd.f32 %v2363, %v2374
        %v2403 = vadd.f32 %v2364, %v2374
        %v2404 = vadd.f32 %v2365, %v2374
        %v2405 = vadd.f32 %v2366, %v2374
        %v2406 = vadd.f32 %v2367, %v2374
        %v2407 = vadd.f32 %v2368, %v2374
        %v2408 = vmax.f32 %v2376, 0.0
        %v2409 = vmax.f32 %v2377, 0.0
        %v2410 = vmax.f32 %v2378, 0.0
        %v2411 = vmax.f32 %v2379, 0.0
        %v2412 = vmax.f32 %v2380, 0.0
        %v2413 = vmax.f32 %v2381, 0.0
        %v2414 = vmax.f32 %v2382, 0.0
        %v2415 = vmax.f32 %v2383, 0.0
        %v2416 = vmax.f32 %v2384, 0.0
        %v2417 = vmax.f32 %v2385, 0.0
        %v2418 = vmax.f32 %v2386, 0.0
        %v2419 = vmax.f32 %v2387, 0.0
        %v2420 = vmax.f32 %v2388, 0.0
        %v2421 = vmax.f32 %v2389, 0.0
        %v2422 = vmax.f32 %v2390, 0.0
        %v2423 = vmax.f32 %v2391, 0.0
        %v2424 = vmax.f32 %v2392, 0.0
        %v2425 = vmax.f32 %v2393, 0.0
        %v2426 = vmax.f32 %v2394, 0.0
        %v2427 = vmax.f32 %v2395, 0.0
        %v2428 = vmax.f32 %v2396, 0.0
        %v2429 = vmax.f32 %v2397, 0.0
        %v2430 = vmax.f32 %v2398, 0.0
        %v2431 = vmax.f32 %v2399, 0.0
        %v2432 = vmax.f32 %v2400, 0.0
        %v2433 = vmax.f32 %v2401, 0.0
        %v2434 = vmax.f32 %v2402, 0.0
        %v2435 = vmax.f32 %v2403, 0.0
        %v2436 = vmax.f32 %v2404, 0.0
        %v2437 = vmax.f32 %v2405, 0.0
        %v2438 = vmax.f32 %v2406, 0.0
        %v2439 = vmax.f32 %v2407, 0.0
        %v2441 = vunpack.c.l.s4 1966171168
        %v2442 = vunpack.c.0.s8 %v2441
        %v2443 = vlaneseq
        %v2444 = vshrl.u32 %v2443, 7
        %v2445 = vsub.s32 %v2442, %v2444
        %v2446 = vrot.slane %v2408, %v2445
        %v2448 = vunpack.c.l.s4 1966171168
        %v2449 = vunpack.c.0.s8 %v2448
        %v2450 = vlaneseq
        %v2451 = vshrl.u32 %v2450, 7
        %v2452 = vsub.s32 %v2449, %v2451
        %v2453 = vrot.slane %v2409, %v2452
        %v2455 = vunpack.c.l.s4 1966171168
        %v2456 = vunpack.c.0.s8 %v2455
        %v2457 = vlaneseq
        %v2458 = vshrl.u32 %v2457, 7
        %v2459 = vsub.s32 %v2456, %v2458
        %v2460 = vrot.slane %v2410, %v2459
        %v2462 = vunpack.c.l.s4 1966171168
        %v2463 = vunpack.c.0.s8 %v2462
        %v2464 = vlaneseq
        %v2465 = vshrl.u32 %v2464, 7
        %v2466 = vsub.s32 %v2463, %v2465
        %v2467 = vrot.slane %v2411, %v2466
        %v2469 = vunpack.c.l.s4 1966171168
        %v2470 = vunpack.c.0.s8 %v2469
        %v2471 = vlaneseq
        %v2472 = vshrl.u32 %v2471, 7
        %v2473 = vsub.s32 %v2470, %v2472
        %v2474 = vrot.slane %v2412, %v2473
        %v2476 = vunpack.c.l.s4 1966171168
        %v2477 = vunpack.c.0.s8 %v2476
        %v2478 = vlaneseq
        %v2479 = vshrl.u32 %v2478, 7
        %v2480 = vsub.s32 %v2477, %v2479
        %v2481 = vrot.slane %v2413, %v2480
        %v2483 = vunpack.c.l.s4 1966171168
        %v2484 = vunpack.c.0.s8 %v2483
        %v2485 = vlaneseq
        %v2486 = vshrl.u32 %v2485, 7
        %v2487 = vsub.s32 %v2484, %v2486
        %v2488 = vrot.slane %v2414, %v2487
        %v2490 = vunpack.c.l.s4 1966171168
        %v2491 = vunpack.c.0.s8 %v2490
        %v2492 = vlaneseq
        %v2493 = vshrl.u32 %v2492, 7
        %v2494 = vsub.s32 %v2491, %v2493
        %v2495 = vrot.slane %v2415, %v2494
        %v2497 = vunpack.c.l.s4 1966171168
        %v2498 = vunpack.c.0.s8 %v2497
        %v2499 = vlaneseq
        %v2500 = vshrl.u32 %v2499, 7
        %v2501 = vsub.s32 %v2498, %v2500
        %v2502 = vrot.slane %v2416, %v2501
        %v2504 = vunpack.c.l.s4 1966171168
        %v2505 = vunpack.c.0.s8 %v2504
        %v2506 = vlaneseq
        %v2507 = vshrl.u32 %v2506, 7
        %v2508 = vsub.s32 %v2505, %v2507
        %v2509 = vrot.slane %v2417, %v2508
        %v2511 = vunpack.c.l.s4 1966171168
        %v2512 = vunpack.c.0.s8 %v2511
        %v2513 = vlaneseq
        %v2514 = vshrl.u32 %v2513, 7
        %v2515 = vsub.s32 %v2512, %v2514
        %v2516 = vrot.slane %v2418, %v2515
        %v2518 = vunpack.c.l.s4 1966171168
        %v2519 = vunpack.c.0.s8 %v2518
        %v2520 = vlaneseq
        %v2521 = vshrl.u32 %v2520, 7
        %v2522 = vsub.s32 %v2519, %v2521
        %v2523 = vrot.slane %v2419, %v2522
        %v2525 = vunpack.c.l.s4 1966171168
        %v2526 = vunpack.c.0.s8 %v2525
        %v2527 = vlaneseq
        %v2528 = vshrl.u32 %v2527, 7
        %v2529 = vsub.s32 %v2526, %v2528
        %v2530 = vrot.slane %v2420, %v2529
        %v2532 = vunpack.c.l.s4 1966171168
        %v2533 = vunpack.c.0.s8 %v2532
        %v2534 = vlaneseq
        %v2535 = vshrl.u32 %v2534, 7
        %v2536 = vsub.s32 %v2533, %v2535
        %v2537 = vrot.slane %v2421, %v2536
        %v2539 = vunpack.c.l.s4 1966171168
        %v2540 = vunpack.c.0.s8 %v2539
        %v2541 = vlaneseq
        %v2542 = vshrl.u32 %v2541, 7
        %v2543 = vsub.s32 %v2540, %v2542
        %v2544 = vrot.slane %v2422, %v2543
        %v2546 = vunpack.c.l.s4 1966171168
        %v2547 = vunpack.c.0.s8 %v2546
        %v2548 = vlaneseq
        %v2549 = vshrl.u32 %v2548, 7
        %v2550 = vsub.s32 %v2547, %v2549
        %v2551 = vrot.slane %v2423, %v2550
        %v2553 = vunpack.c.l.s4 1966171168
        %v2554 = vunpack.c.0.s8 %v2553
        %v2555 = vlaneseq
        %v2556 = vshrl.u32 %v2555, 7
        %v2557 = vsub.s32 %v2554, %v2556
        %v2558 = vrot.slane %v2424, %v2557
        %v2560 = vunpack.c.l.s4 1966171168
        %v2561 = vunpack.c.0.s8 %v2560
        %v2562 = vlaneseq
        %v2563 = vshrl.u32 %v2562, 7
        %v2564 = vsub.s32 %v2561, %v2563
        %v2565 = vrot.slane %v2425, %v2564
        %v2567 = vunpack.c.l.s4 1966171168
        %v2568 = vunpack.c.0.s8 %v2567
        %v2569 = vlaneseq
        %v2570 = vshrl.u32 %v2569, 7
        %v2571 = vsub.s32 %v2568, %v2570
        %v2572 = vrot.slane %v2426, %v2571
        %v2574 = vunpack.c.l.s4 1966171168
        %v2575 = vunpack.c.0.s8 %v2574
        %v2576 = vlaneseq
        %v2577 = vshrl.u32 %v2576, 7
        %v2578 = vsub.s32 %v2575, %v2577
        %v2579 = vrot.slane %v2427, %v2578
        %v2581 = vunpack.c.l.s4 1966171168
        %v2582 = vunpack.c.0.s8 %v2581
        %v2583 = vlaneseq
        %v2584 = vshrl.u32 %v2583, 7
        %v2585 = vsub.s32 %v2582, %v2584
        %v2586 = vrot.slane %v2428, %v2585
        %v2588 = vunpack.c.l.s4 1966171168
        %v2589 = vunpack.c.0.s8 %v2588
        %v2590 = vlaneseq
        %v2591 = vshrl.u32 %v2590, 7
        %v2592 = vsub.s32 %v2589, %v2591
        %v2593 = vrot.slane %v2429, %v2592
        %v2595 = vunpack.c.l.s4 1966171168
        %v2596 = vunpack.c.0.s8 %v2595
        %v2597 = vlaneseq
        %v2598 = vshrl.u32 %v2597, 7
        %v2599 = vsub.s32 %v2596, %v2598
        %v2600 = vrot.slane %v2430, %v2599
        %v2602 = vunpack.c.l.s4 1966171168
        %v2603 = vunpack.c.0.s8 %v2602
        %v2604 = vlaneseq
        %v2605 = vshrl.u32 %v2604, 7
        %v2606 = vsub.s32 %v2603, %v2605
        %v2607 = vrot.slane %v2431, %v2606
        %v2609 = vunpack.c.l.s4 1966171168
        %v2610 = vunpack.c.0.s8 %v2609
        %v2611 = vlaneseq
        %v2612 = vshrl.u32 %v2611, 7
        %v2613 = vsub.s32 %v2610, %v2612
        %v2614 = vrot.slane %v2432, %v2613
        %v2616 = vunpack.c.l.s4 1966171168
        %v2617 = vunpack.c.0.s8 %v2616
        %v2618 = vlaneseq
        %v2619 = vshrl.u32 %v2618, 7
        %v2620 = vsub.s32 %v2617, %v2619
        %v2621 = vrot.slane %v2433, %v2620
        %v2623 = vunpack.c.l.s4 1966171168
        %v2624 = vunpack.c.0.s8 %v2623
        %v2625 = vlaneseq
        %v2626 = vshrl.u32 %v2625, 7
        %v2627 = vsub.s32 %v2624, %v2626
        %v2628 = vrot.slane %v2434, %v2627
        %v2630 = vunpack.c.l.s4 1966171168
        %v2631 = vunpack.c.0.s8 %v2630
        %v2632 = vlaneseq
        %v2633 = vshrl.u32 %v2632, 7
        %v2634 = vsub.s32 %v2631, %v2633
        %v2635 = vrot.slane %v2435, %v2634
        %v2637 = vunpack.c.l.s4 1966171168
        %v2638 = vunpack.c.0.s8 %v2637
        %v2639 = vlaneseq
        %v2640 = vshrl.u32 %v2639, 7
        %v2641 = vsub.s32 %v2638, %v2640
        %v2642 = vrot.slane %v2436, %v2641
        %v2644 = vunpack.c.l.s4 1966171168
        %v2645 = vunpack.c.0.s8 %v2644
        %v2646 = vlaneseq
        %v2647 = vshrl.u32 %v2646, 7
        %v2648 = vsub.s32 %v2645, %v2647
        %v2649 = vrot.slane %v2437, %v2648
        %v2651 = vunpack.c.l.s4 1966171168
        %v2652 = vunpack.c.0.s8 %v2651
        %v2653 = vlaneseq
        %v2654 = vshrl.u32 %v2653, 7
        %v2655 = vsub.s32 %v2652, %v2654
        %v2656 = vrot.slane %v2438, %v2655
        %v2658 = vunpack.c.l.s4 1966171168
        %v2659 = vunpack.c.0.s8 %v2658
        %v2660 = vlaneseq
        %v2661 = vshrl.u32 %v2660, 7
        %v2662 = vsub.s32 %v2659, %v2661
        %v2663 = vrot.slane %v2439, %v2662
        %v2696 = vrot.slane %v2446, 4
        %v2697 = vrot.slane %v2453, 4
        %v2698 = vrot.slane %v2460, 4
        %v2699 = vrot.slane %v2467, 4
        %v2700 = vrot.slane %v2474, 4
        %v2701 = vrot.slane %v2481, 4
        %v2702 = vrot.slane %v2488, 4
        %v2703 = vrot.slane %v2495, 4
        %v2704 = vrot.slane %v2502, 4
        %v2705 = vrot.slane %v2509, 4
        %v2706 = vrot.slane %v2516, 4
        %v2707 = vrot.slane %v2523, 4
        %v2708 = vrot.slane %v2530, 4
        %v2709 = vrot.slane %v2537, 4
        %v2710 = vrot.slane %v2544, 4
        %v2711 = vrot.slane %v2551, 4
        %v2712 = vrot.slane %v2558, 4
        %v2713 = vrot.slane %v2565, 4
        %v2714 = vrot.slane %v2572, 4
        %v2715 = vrot.slane %v2579, 4
        %v2716 = vrot.slane %v2586, 4
        %v2717 = vrot.slane %v2593, 4
        %v2718 = vrot.slane %v2600, 4
        %v2719 = vrot.slane %v2607, 4
        %v2720 = vrot.slane %v2614, 4
        %v2721 = vrot.slane %v2621, 4
        %v2722 = vrot.slane %v2628, 4
        %v2723 = vrot.slane %v2635, 4
        %v2724 = vrot.slane %v2642, 4
        %v2725 = vrot.slane %v2649, 4
        %v2726 = vrot.slane %v2656, 4
        %v2727 = vrot.slane %v2663, 4
        %v2760 = vmax.f32 %v2446, %v2696
        %v2761 = vmax.f32 %v2453, %v2697
        %v2762 = vmax.f32 %v2460, %v2698
        %v2763 = vmax.f32 %v2467, %v2699
        %v2764 = vmax.f32 %v2474, %v2700
        %v2765 = vmax.f32 %v2481, %v2701
        %v2766 = vmax.f32 %v2488, %v2702
        %v2767 = vmax.f32 %v2495, %v2703
        %v2768 = vmax.f32 %v2502, %v2704
        %v2769 = vmax.f32 %v2509, %v2705
        %v2770 = vmax.f32 %v2516, %v2706
        %v2771 = vmax.f32 %v2523, %v2707
        %v2772 = vmax.f32 %v2530, %v2708
        %v2773 = vmax.f32 %v2537, %v2709
        %v2774 = vmax.f32 %v2544, %v2710
        %v2775 = vmax.f32 %v2551, %v2711
        %v2776 = vmax.f32 %v2558, %v2712
        %v2777 = vmax.f32 %v2565, %v2713
        %v2778 = vmax.f32 %v2572, %v2714
        %v2779 = vmax.f32 %v2579, %v2715
        %v2780 = vmax.f32 %v2586, %v2716
        %v2781 = vmax.f32 %v2593, %v2717
        %v2782 = vmax.f32 %v2600, %v2718
        %v2783 = vmax.f32 %v2607, %v2719
        %v2784 = vmax.f32 %v2614, %v2720
        %v2785 = vmax.f32 %v2621, %v2721
        %v2786 = vmax.f32 %v2628, %v2722
        %v2787 = vmax.f32 %v2635, %v2723
        %v2788 = vmax.f32 %v2642, %v2724
        %v2789 = vmax.f32 %v2649, %v2725
        %v2790 = vmax.f32 %v2656, %v2726
        %v2791 = vmax.f32 %v2663, %v2727
        %v2824 = vcombine.low %v2760, %v2761
        %v2825 = vcombine.low %v2762, %v2763
        %v2826 = vcombine.low %v2764, %v2765
        %v2827 = vcombine.low %v2766, %v2767
        %v2828 = vcombine.low %v2768, %v2769
        %v2829 = vcombine.low %v2770, %v2771
        %v2830 = vcombine.low %v2772, %v2773
        %v2831 = vcombine.low %v2774, %v2775
        %v2832 = vcombine.low %v2776, %v2777
        %v2833 = vcombine.low %v2778, %v2779
        %v2834 = vcombine.low %v2780, %v2781
        %v2835 = vcombine.low %v2782, %v2783
        %v2836 = vcombine.low %v2784, %v2785
        %v2837 = vcombine.low %v2786, %v2787
        %v2838 = vcombine.low %v2788, %v2789
        %v2839 = vcombine.low %v2790, %v2791
        %v2856 = vpack.c.bf16 %v2825, %v2824
        %v2857 = vpack.c.bf16 %v2827, %v2826
        %v2858 = vpack.c.bf16 %v2829, %v2828
        %v2859 = vpack.c.bf16 %v2831, %v2830
        %v2860 = vpack.c.bf16 %v2833, %v2832
        %v2861 = vpack.c.bf16 %v2835, %v2834
        %v2862 = vpack.c.bf16 %v2837, %v2836
        %v2863 = vpack.c.bf16 %v2839, %v2838
        %v2864 = vld [vmem:[#allocation4] sm:$0xff]
        %v2865 = vld [vmem:[#allocation4 + $0x8] sm:$0xff]
        %v2866 = vld [vmem:[#allocation4 + $0x10] sm:$0xff]
        %v2867 = vld [vmem:[#allocation4 + $0x18] sm:$0xff]
        %v2868 = vld [vmem:[#allocation4 + $0x20] sm:$0xff]
        %v2869 = vld [vmem:[#allocation4 + $0x28] sm:$0xff]
        %v2870 = vld [vmem:[#allocation4 + $0x30] sm:$0xff]
        %v2871 = vld [vmem:[#allocation4 + $0x38] sm:$0xff]
        %v2872 = vld [vmem:[#allocation4 + $0x40] sm:$0xff]
        %v2873 = vld [vmem:[#allocation4 + $0x48] sm:$0xff]
        %v2874 = vld [vmem:[#allocation4 + $0x50] sm:$0xff]
        %v2875 = vld [vmem:[#allocation4 + $0x58] sm:$0xff]
        %v2876 = vld [vmem:[#allocation4 + $0x60] sm:$0xff]
        %v2877 = vld [vmem:[#allocation4 + $0x68] sm:$0xff]
        %v2878 = vld [vmem:[#allocation4 + $0x70] sm:$0xff]
        %v2879 = vld [vmem:[#allocation4 + $0x78] sm:$0xff]
        %s2880 = scalar_lea.vmem [#allocation4], 128
        %v2881 = vld [vmem:[%s2880] sm:$0xff]
        %v2882 = vld [vmem:[%s2880 + $0x8] sm:$0xff]
        %v2883 = vld [vmem:[%s2880 + $0x10] sm:$0xff]
        %v2884 = vld [vmem:[%s2880 + $0x18] sm:$0xff]
        %v2885 = vld [vmem:[%s2880 + $0x20] sm:$0xff]
        %v2886 = vld [vmem:[%s2880 + $0x28] sm:$0xff]
        %v2887 = vld [vmem:[%s2880 + $0x30] sm:$0xff]
        %v2888 = vld [vmem:[%s2880 + $0x38] sm:$0xff]
        %v2889 = vld [vmem:[%s2880 + $0x40] sm:$0xff]
        %v2890 = vld [vmem:[%s2880 + $0x48] sm:$0xff]
        %v2891 = vld [vmem:[%s2880 + $0x50] sm:$0xff]
        %v2892 = vld [vmem:[%s2880 + $0x58] sm:$0xff]
        %v2893 = vld [vmem:[%s2880 + $0x60] sm:$0xff]
        %v2894 = vld [vmem:[%s2880 + $0x68] sm:$0xff]
        %v2895 = vld [vmem:[%s2880 + $0x70] sm:$0xff]
        %v2896 = vld [vmem:[%s2880 + $0x78] sm:$0xff]
        %v2898 = vshrl.u32 %v2856, 16
        %v2900 = vshll.u32 %v2856, 16
        %v2902 = vrot.slane %v2900, 1
        %v2903 = vor.u32 %v2898, %v2902
        %v2905 = vshll.u32 %v2857, 16
        %v2907 = vrot.slane %v2905, 1
        %v2908 = vsel %vm568, %v2903, %v2907
        %v2909 = vshrl.u32 %v2857, 16
        %v2911 = vor.u32 %v2909, %v2907
        %v2913 = vshll.u32 %v2858, 16
        %v2915 = vrot.slane %v2913, 1
        %v2916 = vsel %vm568, %v2911, %v2915
        %v2917 = vshrl.u32 %v2858, 16
        %v2919 = vor.u32 %v2917, %v2915
        %v2921 = vshll.u32 %v2859, 16
        %v2923 = vrot.slane %v2921, 1
        %v2924 = vsel %vm568, %v2919, %v2923
        %v2925 = vshrl.u32 %v2859, 16
        %v2927 = vor.u32 %v2925, %v2923
        %v2929 = vshll.u32 %v2860, 16
        %v2931 = vrot.slane %v2929, 1
        %v2932 = vsel %vm568, %v2927, %v2931
        %v2933 = vshrl.u32 %v2860, 16
        %v2935 = vor.u32 %v2933, %v2931
        %v2937 = vshll.u32 %v2861, 16
        %v2939 = vrot.slane %v2937, 1
        %v2940 = vsel %vm568, %v2935, %v2939
        %v2941 = vshrl.u32 %v2861, 16
        %v2943 = vor.u32 %v2941, %v2939
        %v2945 = vshll.u32 %v2862, 16
        %v2947 = vrot.slane %v2945, 1
        %v2948 = vsel %vm568, %v2943, %v2947
        %v2949 = vshrl.u32 %v2862, 16
        %v2951 = vor.u32 %v2949, %v2947
        %v2953 = vshll.u32 %v2863, 16
        %v2955 = vrot.slane %v2953, 1
        %v2956 = vsel %vm568, %v2951, %v2955
        %v2957 = vshrl.u32 %v2863, 16
        %v2959 = vor.u32 %v2957, %v2955
        %v2960 = vsel %vm568, %v2959, %v699
        %v2985 = vunpack.c.l.b16 %v2881
        %v2986 = vunpack.c.h.b16 %v2881
        %v2987 = vunpack.c.l.b16 %v2882
        %v2988 = vunpack.c.h.b16 %v2882
        %v2989 = vunpack.c.l.b16 %v2883
        %v2990 = vunpack.c.h.b16 %v2883
        %v2991 = vunpack.c.l.b16 %v2884
        %v2992 = vunpack.c.h.b16 %v2884
        %v2993 = vunpack.c.l.b16 %v2885
        %v2994 = vunpack.c.h.b16 %v2885
        %v2995 = vunpack.c.l.b16 %v2886
        %v2996 = vunpack.c.h.b16 %v2886
        %v2997 = vunpack.c.l.b16 %v2887
        %v2998 = vunpack.c.h.b16 %v2887
        %v2999 = vunpack.c.l.b16 %v2888
        %v3000 = vunpack.c.h.b16 %v2888
        %v3001 = vunpack.c.l.b16 %v2889
        %v3002 = vunpack.c.h.b16 %v2889
        %v3003 = vunpack.c.l.b16 %v2890
        %v3004 = vunpack.c.h.b16 %v2890
        %v3005 = vunpack.c.l.b16 %v2891
        %v3006 = vunpack.c.h.b16 %v2891
        %v3007 = vunpack.c.l.b16 %v2892
        %v3008 = vunpack.c.h.b16 %v2892
        %v3009 = vunpack.c.l.b16 %v2893
        %v3010 = vunpack.c.h.b16 %v2893
        %v3011 = vunpack.c.l.b16 %v2894
        %v3012 = vunpack.c.h.b16 %v2894
        %v3013 = vunpack.c.l.b16 %v2895
        %v3014 = vunpack.c.h.b16 %v2895
        %v3015 = vunpack.c.l.b16 %v2896
        %v3016 = vunpack.c.h.b16 %v2896
        %v3017 = vpack.c.b16 %v2987, %v2985
        %v3018 = vpack.c.b16 %v2988, %v2986
        %v3019 = vpack.c.b16 %v2991, %v2989
        %v3020 = vpack.c.b16 %v2992, %v2990
        %v3021 = vpack.c.b16 %v2995, %v2993
        %v3022 = vpack.c.b16 %v2996, %v2994
        %v3023 = vpack.c.b16 %v2999, %v2997
        %v3024 = vpack.c.b16 %v3000, %v2998
        %v3025 = vpack.c.b16 %v3003, %v3001
        %v3026 = vpack.c.b16 %v3004, %v3002
        %v3027 = vpack.c.b16 %v3007, %v3005
        %v3028 = vpack.c.b16 %v3008, %v3006
        %v3029 = vpack.c.b16 %v3011, %v3009
        %v3030 = vpack.c.b16 %v3012, %v3010
        %v3031 = vpack.c.b16 %v3015, %v3013
        %v3032 = vpack.c.b16 %v3016, %v3014
        %3049 = vmatprep.subr.bf16.mxu0 %v3018
        %3050 = vmatpush1.bf16.msra.mxu0 %v3017
        %3051 = vmatprep.subr.bf16.mxu0 %v3020
        %3052 = vmatpush1.bf16.msra.mxu0 %v3019
        %3053 = vmatprep.subr.bf16.mxu0 %v3022
        %3054 = vmatpush1.bf16.msra.mxu0 %v3021
        %3055 = vmatprep.subr.bf16.mxu0 %v3024
        %3056 = vmatpush1.bf16.msra.mxu0 %v3023
        %3057 = vmatprep.subr.bf16.mxu0 %v3026
        %3058 = vmatpush1.bf16.msra.mxu0 %v3025
        %3059 = vmatprep.subr.bf16.mxu0 %v3028
        %3060 = vmatpush1.bf16.msra.mxu0 %v3027
        %3061 = vmatprep.subr.bf16.mxu0 %v3030
        %3062 = vmatpush1.bf16.msra.mxu0 %v3029
        %3063 = vmatprep.subr.bf16.mxu0 %v3032
        %3064 = vmatpush1.bf16.msra.mxu0 %v3031
        %3065 = vmatprep.subr.bf16.mxu0 0
        %3066 = vmatpush1.bf16.msra.mxu0 0
        %3067 = vmatprep.subr.bf16.mxu0 0
        %3068 = vmatpush1.bf16.msra.mxu0 0
        %3069 = vmatprep.subr.bf16.mxu0 0
        %3070 = vmatpush1.bf16.msra.mxu0 0
        %3071 = vmatprep.subr.bf16.mxu0 0
        %3072 = vmatpush1.bf16.msra.mxu0 0
        %3073 = vmatprep.subr.bf16.mxu0 0
        %3074 = vmatpush1.bf16.msra.mxu0 0
        %3075 = vmatprep.subr.bf16.mxu0 0
        %3076 = vmatpush1.bf16.msra.mxu0 0
        %3077 = vmatprep.subr.bf16.mxu0 0
        %3078 = vmatpush1.bf16.msra.mxu0 0
        %3079 = vmatprep.subr.bf16.mxu0 0
        %3080 = vmatpush1.bf16.msra.mxu0 0
        %3081 = vmatprep.mubr.bf16.mxu0 0
        %3082 = vmatmul.mubr.bf16.gmra.mrb[0].mxu0 %v2908
        %v3083 = vpop.f32.mrb[0].mxu0
        %v3084 = vadd.f32 0.0, %v3083
        %v3085 = vpop.f32.mrb[0].mxu0
        %v3086 = vadd.f32 0.0, %v3085
        %v3087 = vpop.f32.mrb[0].mxu0
        %v3088 = vadd.f32 0.0, %v3087
        %v3089 = vpop.f32.mrb[0].mxu0
        %v3090 = vadd.f32 0.0, %v3089
        %3091 = vmatprep.mubr.bf16.mxu0 0
        %3092 = vmatmul.mubr.bf16.gmra.mrb[0].mxu0 %v2916
        %v3093 = vpop.f32.mrb[0].mxu0
        %v3094 = vadd.f32 0.0, %v3093
        %v3095 = vpop.f32.mrb[0].mxu0
        %v3096 = vadd.f32 0.0, %v3095
        %v3097 = vpop.f32.mrb[0].mxu0
        %v3098 = vadd.f32 0.0, %v3097
        %v3099 = vpop.f32.mrb[0].mxu0
        %v3100 = vadd.f32 0.0, %v3099
        %3101 = vmatprep.mubr.bf16.mxu0 0
        %3102 = vmatmul.mubr.bf16.gmra.mrb[0].mxu0 %v2924
        %v3103 = vpop.f32.mrb[0].mxu0
        %v3104 = vadd.f32 0.0, %v3103
        %v3105 = vpop.f32.mrb[0].mxu0
        %v3106 = vadd.f32 0.0, %v3105
        %v3107 = vpop.f32.mrb[0].mxu0
        %v3108 = vadd.f32 0.0, %v3107
        %v3109 = vpop.f32.mrb[0].mxu0
        %v3110 = vadd.f32 0.0, %v3109
        %3111 = vmatprep.mubr.bf16.mxu0 0
        %3112 = vmatmul.mubr.bf16.gmra.mrb[0].mxu0 %v2932
        %v3113 = vpop.f32.mrb[0].mxu0
        %v3114 = vadd.f32 0.0, %v3113
        %v3115 = vpop.f32.mrb[0].mxu0
        %v3116 = vadd.f32 0.0, %v3115
        %v3117 = vpop.f32.mrb[0].mxu0
        %v3118 = vadd.f32 0.0, %v3117
        %v3119 = vpop.f32.mrb[0].mxu0
        %v3120 = vadd.f32 0.0, %v3119
        %3121 = vmatprep.mubr.bf16.mxu0 0
        %3122 = vmatmul.mubr.bf16.gmra.mrb[0].mxu0 %v2940
        %v3123 = vpop.f32.mrb[0].mxu0
        %v3124 = vadd.f32 0.0, %v3123
        %v3125 = vpop.f32.mrb[0].mxu0
        %v3126 = vadd.f32 0.0, %v3125
        %v3127 = vpop.f32.mrb[0].mxu0
        %v3128 = vadd.f32 0.0, %v3127
        %v3129 = vpop.f32.mrb[0].mxu0
        %v3130 = vadd.f32 0.0, %v3129
        %3131 = vmatprep.mubr.bf16.mxu0 0
        %3132 = vmatmul.mubr.bf16.gmra.mrb[0].mxu0 %v2948
        %v3133 = vpop.f32.mrb[0].mxu0
        %v3134 = vadd.f32 0.0, %v3133
        %v3135 = vpop.f32.mrb[0].mxu0
        %v3136 = vadd.f32 0.0, %v3135
        %v3137 = vpop.f32.mrb[0].mxu0
        %v3138 = vadd.f32 0.0, %v3137
        %v3139 = vpop.f32.mrb[0].mxu0
        %v3140 = vadd.f32 0.0, %v3139
        %3141 = vmatprep.mubr.bf16.mxu0 0
        %3142 = vmatmul.mubr.bf16.gmra.mrb[0].mxu0 %v2956
        %v3143 = vpop.f32.mrb[0].mxu0
        %v3144 = vadd.f32 0.0, %v3143
        %v3145 = vpop.f32.mrb[0].mxu0
        %v3146 = vadd.f32 0.0, %v3145
        %v3147 = vpop.f32.mrb[0].mxu0
        %v3148 = vadd.f32 0.0, %v3147
        %v3149 = vpop.f32.mrb[0].mxu0
        %v3150 = vadd.f32 0.0, %v3149
        %3151 = vmatprep.mubr.bf16.mxu0 0
        %3152 = vmatmul.mubr.bf16.gmra.mrb[0].mxu0 %v2960
        %v3153 = vpop.f32.mrb[0].mxu0
        %v3154 = vadd.f32 0.0, %v3153
        %v3155 = vpop.f32.mrb[0].mxu0
        %v3156 = vadd.f32 0.0, %v3155
        %v3157 = vpop.f32.mrb[0].mxu0
        %v3158 = vadd.f32 0.0, %v3157
        %v3159 = vpop.f32.mrb[0].mxu0
        %v3160 = vadd.f32 0.0, %v3159
        %3161 = vdwg.mxu0
        %v3178 = vunpack.c.l.b16 %v2864
        %v3179 = vunpack.c.h.b16 %v2864
        %v3180 = vunpack.c.l.b16 %v2865
        %v3181 = vunpack.c.h.b16 %v2865
        %v3182 = vunpack.c.l.b16 %v2866
        %v3183 = vunpack.c.h.b16 %v2866
        %v3184 = vunpack.c.l.b16 %v2867
        %v3185 = vunpack.c.h.b16 %v2867
        %v3186 = vunpack.c.l.b16 %v2868
        %v3187 = vunpack.c.h.b16 %v2868
        %v3188 = vunpack.c.l.b16 %v2869
        %v3189 = vunpack.c.h.b16 %v2869
        %v3190 = vunpack.c.l.b16 %v2870
        %v3191 = vunpack.c.h.b16 %v2870
        %v3192 = vunpack.c.l.b16 %v2871
        %v3193 = vunpack.c.h.b16 %v2871
        %v3194 = vunpack.c.l.b16 %v2872
        %v3195 = vunpack.c.h.b16 %v2872
        %v3196 = vunpack.c.l.b16 %v2873
        %v3197 = vunpack.c.h.b16 %v2873
        %v3198 = vunpack.c.l.b16 %v2874
        %v3199 = vunpack.c.h.b16 %v2874
        %v3200 = vunpack.c.l.b16 %v2875
        %v3201 = vunpack.c.h.b16 %v2875
        %v3202 = vunpack.c.l.b16 %v2876
        %v3203 = vunpack.c.h.b16 %v2876
        %v3204 = vunpack.c.l.b16 %v2877
        %v3205 = vunpack.c.h.b16 %v2877
        %v3206 = vunpack.c.l.b16 %v2878
        %v3207 = vunpack.c.h.b16 %v2878
        %v3208 = vunpack.c.l.b16 %v2879
        %v3209 = vunpack.c.h.b16 %v2879
        %v3210 = vpack.c.b16 %v3180, %v3178
        %v3211 = vpack.c.b16 %v3181, %v3179
        %v3212 = vpack.c.b16 %v3184, %v3182
        %v3213 = vpack.c.b16 %v3185, %v3183
        %v3214 = vpack.c.b16 %v3188, %v3186
        %v3215 = vpack.c.b16 %v3189, %v3187
        %v3216 = vpack.c.b16 %v3192, %v3190
        %v3217 = vpack.c.b16 %v3193, %v3191
        %v3218 = vpack.c.b16 %v3196, %v3194
        %v3219 = vpack.c.b16 %v3197, %v3195
        %v3220 = vpack.c.b16 %v3200, %v3198
        %v3221 = vpack.c.b16 %v3201, %v3199
        %v3222 = vpack.c.b16 %v3204, %v3202
        %v3223 = vpack.c.b16 %v3205, %v3203
        %v3224 = vpack.c.b16 %v3208, %v3206
        %v3225 = vpack.c.b16 %v3209, %v3207
        %3242 = vmatprep.subr.bf16.mxu0 %v3211
        %3243 = vmatpush1.bf16.msra.mxu0 %v3210
        %3244 = vmatprep.subr.bf16.mxu0 %v3213
        %3245 = vmatpush1.bf16.msra.mxu0 %v3212
        %3246 = vmatprep.subr.bf16.mxu0 %v3215
        %3247 = vmatpush1.bf16.msra.mxu0 %v3214
        %3248 = vmatprep.subr.bf16.mxu0 %v3217
        %3249 = vmatpush1.bf16.msra.mxu0 %v3216
        %3250 = vmatprep.subr.bf16.mxu0 %v3219
        %3251 = vmatpush1.bf16.msra.mxu0 %v3218
        %3252 = vmatprep.subr.bf16.mxu0 %v3221
        %3253 = vmatpush1.bf16.msra.mxu0 %v3220
        %3254 = vmatprep.subr.bf16.mxu0 %v3223
        %3255 = vmatpush1.bf16.msra.mxu0 %v3222
        %3256 = vmatprep.subr.bf16.mxu0 %v3225
        %3257 = vmatpush1.bf16.msra.mxu0 %v3224
        %3258 = vmatprep.subr.bf16.mxu0 0
        %3259 = vmatpush1.bf16.msra.mxu0 0
        %3260 = vmatprep.subr.bf16.mxu0 0
        %3261 = vmatpush1.bf16.msra.mxu0 0
        %3262 = vmatprep.subr.bf16.mxu0 0
        %3263 = vmatpush1.bf16.msra.mxu0 0
        %3264 = vmatprep.subr.bf16.mxu0 0
        %3265 = vmatpush1.bf16.msra.mxu0 0
        %3266 = vmatprep.subr.bf16.mxu0 0
        %3267 = vmatpush1.bf16.msra.mxu0 0
        %3268 = vmatprep.subr.bf16.mxu0 0
        %3269 = vmatpush1.bf16.msra.mxu0 0
        %3270 = vmatprep.subr.bf16.mxu0 0
        %3271 = vmatpush1.bf16.msra.mxu0 0
        %3272 = vmatprep.subr.bf16.mxu0 0
        %3273 = vmatpush1.bf16.msra.mxu0 0
        %3274 = vmatprep.mubr.bf16.mxu0 0
        %3275 = vmatmul.mubr.bf16.gmra.mrb[0].mxu0 %v2856
        %v3276 = vpop.f32.mrb[0].mxu0
        %v3277 = vadd.f32 %v3084, %v3276
        %v3278 = vpop.f32.mrb[0].mxu0
        %v3279 = vadd.f32 %v3086, %v3278
        %v3280 = vpop.f32.mrb[0].mxu0
        %v3281 = vadd.f32 %v3088, %v3280
        %v3282 = vpop.f32.mrb[0].mxu0
        %v3283 = vadd.f32 %v3090, %v3282
        %3284 = vmatprep.mubr.bf16.mxu0 0
        %3285 = vmatmul.mubr.bf16.gmra.mrb[0].mxu0 %v2857
        %v3286 = vpop.f32.mrb[0].mxu0
        %v3287 = vadd.f32 %v3094, %v3286
        %v3288 = vpop.f32.mrb[0].mxu0
        %v3289 = vadd.f32 %v3096, %v3288
        %v3290 = vpop.f32.mrb[0].mxu0
        %v3291 = vadd.f32 %v3098, %v3290
        %v3292 = vpop.f32.mrb[0].mxu0
        %v3293 = vadd.f32 %v3100, %v3292
        %3294 = vmatprep.mubr.bf16.mxu0 0
        %3295 = vmatmul.mubr.bf16.gmra.mrb[0].mxu0 %v2858
        %v3296 = vpop.f32.mrb[0].mxu0
        %v3297 = vadd.f32 %v3104, %v3296
        %v3298 = vpop.f32.mrb[0].mxu0
        %v3299 = vadd.f32 %v3106, %v3298
        %v3300 = vpop.f32.mrb[0].mxu0
        %v3301 = vadd.f32 %v3108, %v3300
        %v3302 = vpop.f32.mrb[0].mxu0
        %v3303 = vadd.f32 %v3110, %v3302
        %3304 = vmatprep.mubr.bf16.mxu0 0
        %3305 = vmatmul.mubr.bf16.gmra.mrb[0].mxu0 %v2859
        %v3306 = vpop.f32.mrb[0].mxu0
        %v3307 = vadd.f32 %v3114, %v3306
        %v3308 = vpop.f32.mrb[0].mxu0
        %v3309 = vadd.f32 %v3116, %v3308
        %v3310 = vpop.f32.mrb[0].mxu0
        %v3311 = vadd.f32 %v3118, %v3310
        %v3312 = vpop.f32.mrb[0].mxu0
        %v3313 = vadd.f32 %v3120, %v3312
        %3314 = vmatprep.mubr.bf16.mxu0 0
        %3315 = vmatmul.mubr.bf16.gmra.mrb[0].mxu0 %v2860
        %v3316 = vpop.f32.mrb[0].mxu0
        %v3317 = vadd.f32 %v3124, %v3316
        %v3318 = vpop.f32.mrb[0].mxu0
        %v3319 = vadd.f32 %v3126, %v3318
        %v3320 = vpop.f32.mrb[0].mxu0
        %v3321 = vadd.f32 %v3128, %v3320
        %v3322 = vpop.f32.mrb[0].mxu0
        %v3323 = vadd.f32 %v3130, %v3322
        %3324 = vmatprep.mubr.bf16.mxu0 0
        %3325 = vmatmul.mubr.bf16.gmra.mrb[0].mxu0 %v2861
        %v3326 = vpop.f32.mrb[0].mxu0
        %v3327 = vadd.f32 %v3134, %v3326
        %v3328 = vpop.f32.mrb[0].mxu0
        %v3329 = vadd.f32 %v3136, %v3328
        %v3330 = vpop.f32.mrb[0].mxu0
        %v3331 = vadd.f32 %v3138, %v3330
        %v3332 = vpop.f32.mrb[0].mxu0
        %v3333 = vadd.f32 %v3140, %v3332
        %3334 = vmatprep.mubr.bf16.mxu0 0
        %3335 = vmatmul.mubr.bf16.gmra.mrb[0].mxu0 %v2862
        %v3336 = vpop.f32.mrb[0].mxu0
        %v3337 = vadd.f32 %v3144, %v3336
        %v3338 = vpop.f32.mrb[0].mxu0
        %v3339 = vadd.f32 %v3146, %v3338
        %v3340 = vpop.f32.mrb[0].mxu0
        %v3341 = vadd.f32 %v3148, %v3340
        %v3342 = vpop.f32.mrb[0].mxu0
        %v3343 = vadd.f32 %v3150, %v3342
        %3344 = vmatprep.mubr.bf16.mxu0 0
        %3345 = vmatmul.mubr.bf16.gmra.mrb[0].mxu0 %v2863
        %v3346 = vpop.f32.mrb[0].mxu0
        %v3347 = vadd.f32 %v3154, %v3346
        %v3348 = vpop.f32.mrb[0].mxu0
        %v3349 = vadd.f32 %v3156, %v3348
        %v3350 = vpop.f32.mrb[0].mxu0
        %v3351 = vadd.f32 %v3158, %v3350
        %v3352 = vpop.f32.mrb[0].mxu0
        %v3353 = vadd.f32 %v3160, %v3352
        %3354 = vdwg.mxu0
        %s3355 = scalar_lea.vmem [#allocation4], 256
        %v3356 = vld [vmem:[%s3355] sm:$0xff]
        %v3357 = vld [vmem:[%s3355 + $0x8] sm:$0xff]
        %v3358 = vld [vmem:[%s3355 + $0x10] sm:$0xff]
        %v3359 = vld [vmem:[%s3355 + $0x18] sm:$0xff]
        %v3360 = vld [vmem:[%s3355 + $0x20] sm:$0xff]
        %v3361 = vld [vmem:[%s3355 + $0x28] sm:$0xff]
        %v3362 = vld [vmem:[%s3355 + $0x30] sm:$0xff]
        %v3363 = vld [vmem:[%s3355 + $0x38] sm:$0xff]
        %v3364 = vld [vmem:[%s3355 + $0x40] sm:$0xff]
        %v3365 = vld [vmem:[%s3355 + $0x48] sm:$0xff]
        %v3366 = vld [vmem:[%s3355 + $0x50] sm:$0xff]
        %v3367 = vld [vmem:[%s3355 + $0x58] sm:$0xff]
        %v3368 = vld [vmem:[%s3355 + $0x60] sm:$0xff]
        %v3369 = vld [vmem:[%s3355 + $0x68] sm:$0xff]
        %v3370 = vld [vmem:[%s3355 + $0x70] sm:$0xff]
        %v3371 = vld [vmem:[%s3355 + $0x78] sm:$0xff]
        %v3380 = vrot.slane %v2856, 1
        %v3381 = vrot.slane %v2857, 1
        %v3382 = vsel %vm1214, %v3380, %v3381
        %v3383 = vrot.slane %v2858, 1
        %v3384 = vsel %vm1214, %v3381, %v3383
        %v3385 = vrot.slane %v2859, 1
        %v3386 = vsel %vm1214, %v3383, %v3385
        %v3387 = vrot.slane %v2860, 1
        %v3388 = vsel %vm1214, %v3385, %v3387
        %v3389 = vrot.slane %v2861, 1
        %v3390 = vsel %vm1214, %v3387, %v3389
        %v3391 = vrot.slane %v2862, 1
        %v3392 = vsel %vm1214, %v3389, %v3391
        %v3393 = vrot.slane %v2863, 1
        %v3394 = vsel %vm1214, %v3391, %v3393
        %v3395 = vsel %vm1214, %v3393, %v1246
        %v3420 = vunpack.c.l.b16 %v3356
        %v3421 = vunpack.c.h.b16 %v3356
        %v3422 = vunpack.c.l.b16 %v3357
        %v3423 = vunpack.c.h.b16 %v3357
        %v3424 = vunpack.c.l.b16 %v3358
        %v3425 = vunpack.c.h.b16 %v3358
        %v3426 = vunpack.c.l.b16 %v3359
        %v3427 = vunpack.c.h.b16 %v3359
        %v3428 = vunpack.c.l.b16 %v3360
        %v3429 = vunpack.c.h.b16 %v3360
        %v3430 = vunpack.c.l.b16 %v3361
        %v3431 = vunpack.c.h.b16 %v3361
        %v3432 = vunpack.c.l.b16 %v3362
        %v3433 = vunpack.c.h.b16 %v3362
        %v3434 = vunpack.c.l.b16 %v3363
        %v3435 = vunpack.c.h.b16 %v3363
        %v3436 = vunpack.c.l.b16 %v3364
        %v3437 = vunpack.c.h.b16 %v3364
        %v3438 = vunpack.c.l.b16 %v3365
        %v3439 = vunpack.c.h.b16 %v3365
        %v3440 = vunpack.c.l.b16 %v3366
        %v3441 = vunpack.c.h.b16 %v3366
        %v3442 = vunpack.c.l.b16 %v3367
        %v3443 = vunpack.c.h.b16 %v3367
        %v3444 = vunpack.c.l.b16 %v3368
        %v3445 = vunpack.c.h.b16 %v3368
        %v3446 = vunpack.c.l.b16 %v3369
        %v3447 = vunpack.c.h.b16 %v3369
        %v3448 = vunpack.c.l.b16 %v3370
        %v3449 = vunpack.c.h.b16 %v3370
        %v3450 = vunpack.c.l.b16 %v3371
        %v3451 = vunpack.c.h.b16 %v3371
        %v3452 = vpack.c.b16 %v3422, %v3420
        %v3453 = vpack.c.b16 %v3423, %v3421
        %v3454 = vpack.c.b16 %v3426, %v3424
        %v3455 = vpack.c.b16 %v3427, %v3425
        %v3456 = vpack.c.b16 %v3430, %v3428
        %v3457 = vpack.c.b16 %v3431, %v3429
        %v3458 = vpack.c.b16 %v3434, %v3432
        %v3459 = vpack.c.b16 %v3435, %v3433
        %v3460 = vpack.c.b16 %v3438, %v3436
        %v3461 = vpack.c.b16 %v3439, %v3437
        %v3462 = vpack.c.b16 %v3442, %v3440
        %v3463 = vpack.c.b16 %v3443, %v3441
        %v3464 = vpack.c.b16 %v3446, %v3444
        %v3465 = vpack.c.b16 %v3447, %v3445
        %v3466 = vpack.c.b16 %v3450, %v3448
        %v3467 = vpack.c.b16 %v3451, %v3449
        %3484 = vmatprep.subr.bf16.mxu0 %v3453
        %3485 = vmatpush1.bf16.msra.mxu0 %v3452
        %3486 = vmatprep.subr.bf16.mxu0 %v3455
        %3487 = vmatpush1.bf16.msra.mxu0 %v3454
        %3488 = vmatprep.subr.bf16.mxu0 %v3457
        %3489 = vmatpush1.bf16.msra.mxu0 %v3456
        %3490 = vmatprep.subr.bf16.mxu0 %v3459
        %3491 = vmatpush1.bf16.msra.mxu0 %v3458
        %3492 = vmatprep.subr.bf16.mxu0 %v3461
        %3493 = vmatpush1.bf16.msra.mxu0 %v3460
        %3494 = vmatprep.subr.bf16.mxu0 %v3463
        %3495 = vmatpush1.bf16.msra.mxu0 %v3462
        %3496 = vmatprep.subr.bf16.mxu0 %v3465
        %3497 = vmatpush1.bf16.msra.mxu0 %v3464
        %3498 = vmatprep.subr.bf16.mxu0 %v3467
        %3499 = vmatpush1.bf16.msra.mxu0 %v3466
        %3500 = vmatprep.subr.bf16.mxu0 0
        %3501 = vmatpush1.bf16.msra.mxu0 0
        %3502 = vmatprep.subr.bf16.mxu0 0
        %3503 = vmatpush1.bf16.msra.mxu0 0
        %3504 = vmatprep.subr.bf16.mxu0 0
        %3505 = vmatpush1.bf16.msra.mxu0 0
        %3506 = vmatprep.subr.bf16.mxu0 0
        %3507 = vmatpush1.bf16.msra.mxu0 0
        %3508 = vmatprep.subr.bf16.mxu0 0
        %3509 = vmatpush1.bf16.msra.mxu0 0
        %3510 = vmatprep.subr.bf16.mxu0 0
        %3511 = vmatpush1.bf16.msra.mxu0 0
        %3512 = vmatprep.subr.bf16.mxu0 0
        %3513 = vmatpush1.bf16.msra.mxu0 0
        %3514 = vmatprep.subr.bf16.mxu0 0
        %3515 = vmatpush1.bf16.msra.mxu0 0
        %3516 = vmatprep.mubr.bf16.mxu0 0
        %3517 = vmatmul.mubr.bf16.gmra.mrb[0].mxu0 %v3382
        %v3518 = vpop.f32.mrb[0].mxu0
        %v3519 = vadd.f32 0.0, %v3518
        %v3520 = vpop.f32.mrb[0].mxu0
        %v3521 = vadd.f32 0.0, %v3520
        %v3522 = vpop.f32.mrb[0].mxu0
        %v3523 = vadd.f32 0.0, %v3522
        %v3524 = vpop.f32.mrb[0].mxu0
        %v3525 = vadd.f32 0.0, %v3524
        %3526 = vmatprep.mubr.bf16.mxu0 0
        %3527 = vmatmul.mubr.bf16.gmra.mrb[0].mxu0 %v3384
        %v3528 = vpop.f32.mrb[0].mxu0
        %v3529 = vadd.f32 0.0, %v3528
        %v3530 = vpop.f32.mrb[0].mxu0
        %v3531 = vadd.f32 0.0, %v3530
        %v3532 = vpop.f32.mrb[0].mxu0
        %v3533 = vadd.f32 0.0, %v3532
        %v3534 = vpop.f32.mrb[0].mxu0
        %v3535 = vadd.f32 0.0, %v3534
        %3536 = vmatprep.mubr.bf16.mxu0 0
        %3537 = vmatmul.mubr.bf16.gmra.mrb[0].mxu0 %v3386
        %v3538 = vpop.f32.mrb[0].mxu0
        %v3539 = vadd.f32 0.0, %v3538
        %v3540 = vpop.f32.mrb[0].mxu0
        %v3541 = vadd.f32 0.0, %v3540
        %v3542 = vpop.f32.mrb[0].mxu0
        %v3543 = vadd.f32 0.0, %v3542
        %v3544 = vpop.f32.mrb[0].mxu0
        %v3545 = vadd.f32 0.0, %v3544
        %3546 = vmatprep.mubr.bf16.mxu0 0
        %3547 = vmatmul.mubr.bf16.gmra.mrb[0].mxu0 %v3388
        %v3548 = vpop.f32.mrb[0].mxu0
        %v3549 = vadd.f32 0.0, %v3548
        %v3550 = vpop.f32.mrb[0].mxu0
        %v3551 = vadd.f32 0.0, %v3550
        %v3552 = vpop.f32.mrb[0].mxu0
        %v3553 = vadd.f32 0.0, %v3552
        %v3554 = vpop.f32.mrb[0].mxu0
        %v3555 = vadd.f32 0.0, %v3554
        %3556 = vmatprep.mubr.bf16.mxu0 0
        %3557 = vmatmul.mubr.bf16.gmra.mrb[0].mxu0 %v3390
        %v3558 = vpop.f32.mrb[0].mxu0
        %v3559 = vadd.f32 0.0, %v3558
        %v3560 = vpop.f32.mrb[0].mxu0
        %v3561 = vadd.f32 0.0, %v3560
        %v3562 = vpop.f32.mrb[0].mxu0
        %v3563 = vadd.f32 0.0, %v3562
        %v3564 = vpop.f32.mrb[0].mxu0
        %v3565 = vadd.f32 0.0, %v3564
        %3566 = vmatprep.mubr.bf16.mxu0 0
        %3567 = vmatmul.mubr.bf16.gmra.mrb[0].mxu0 %v3392
        %v3568 = vpop.f32.mrb[0].mxu0
        %v3569 = vadd.f32 0.0, %v3568
        %v3570 = vpop.f32.mrb[0].mxu0
        %v3571 = vadd.f32 0.0, %v3570
        %v3572 = vpop.f32.mrb[0].mxu0
        %v3573 = vadd.f32 0.0, %v3572
        %v3574 = vpop.f32.mrb[0].mxu0
        %v3575 = vadd.f32 0.0, %v3574
        %3576 = vmatprep.mubr.bf16.mxu0 0
        %3577 = vmatmul.mubr.bf16.gmra.mrb[0].mxu0 %v3394
        %v3578 = vpop.f32.mrb[0].mxu0
        %v3579 = vadd.f32 0.0, %v3578
        %v3580 = vpop.f32.mrb[0].mxu0
        %v3581 = vadd.f32 0.0, %v3580
        %v3582 = vpop.f32.mrb[0].mxu0
        %v3583 = vadd.f32 0.0, %v3582
        %v3584 = vpop.f32.mrb[0].mxu0
        %v3585 = vadd.f32 0.0, %v3584
        %3586 = vmatprep.mubr.bf16.mxu0 0
        %3587 = vmatmul.mubr.bf16.gmra.mrb[0].mxu0 %v3395
        %v3588 = vpop.f32.mrb[0].mxu0
        %v3589 = vadd.f32 0.0, %v3588
        %v3590 = vpop.f32.mrb[0].mxu0
        %v3591 = vadd.f32 0.0, %v3590
        %v3592 = vpop.f32.mrb[0].mxu0
        %v3593 = vadd.f32 0.0, %v3592
        %v3594 = vpop.f32.mrb[0].mxu0
        %v3595 = vadd.f32 0.0, %v3594
        %3596 = vdwg.mxu0
        %v3597 = vadd.f32 %v3277, %v3519
        %v3598 = vadd.f32 %v3279, %v3521
        %v3599 = vadd.f32 %v3281, %v3523
        %v3600 = vadd.f32 %v3283, %v3525
        %v3601 = vadd.f32 %v3287, %v3529
        %v3602 = vadd.f32 %v3289, %v3531
        %v3603 = vadd.f32 %v3291, %v3533
        %v3604 = vadd.f32 %v3293, %v3535
        %v3605 = vadd.f32 %v3297, %v3539
        %v3606 = vadd.f32 %v3299, %v3541
        %v3607 = vadd.f32 %v3301, %v3543
        %v3608 = vadd.f32 %v3303, %v3545
        %v3609 = vadd.f32 %v3307, %v3549
        %v3610 = vadd.f32 %v3309, %v3551
        %v3611 = vadd.f32 %v3311, %v3553
        %v3612 = vadd.f32 %v3313, %v3555
        %v3613 = vadd.f32 %v3317, %v3559
        %v3614 = vadd.f32 %v3319, %v3561
        %v3615 = vadd.f32 %v3321, %v3563
        %v3616 = vadd.f32 %v3323, %v3565
        %v3617 = vadd.f32 %v3327, %v3569
        %v3618 = vadd.f32 %v3329, %v3571
        %v3619 = vadd.f32 %v3331, %v3573
        %v3620 = vadd.f32 %v3333, %v3575
        %v3621 = vadd.f32 %v3337, %v3579
        %v3622 = vadd.f32 %v3339, %v3581
        %v3623 = vadd.f32 %v3341, %v3583
        %v3624 = vadd.f32 %v3343, %v3585
        %v3625 = vadd.f32 %v3347, %v3589
        %v3626 = vadd.f32 %v3349, %v3591
        %v3627 = vadd.f32 %v3351, %v3593
        %v3628 = vadd.f32 %v3353, %v3595
        %s3629 = scalar_lea.vmem [#allocation4], 384
        %v3630 = vld [vmem:[%s3629] sm:$0xff]
        %v3631 = vld [vmem:[%s3629 + $0x8] sm:$0xff]
        %v3632 = vld [vmem:[%s3629 + $0x10] sm:$0xff]
        %v3633 = vld [vmem:[%s3629 + $0x18] sm:$0xff]
        %v3634 = vld [vmem:[%s3629 + $0x20] sm:$0xff]
        %v3635 = vld [vmem:[%s3629 + $0x28] sm:$0xff]
        %v3636 = vld [vmem:[%s3629 + $0x30] sm:$0xff]
        %v3637 = vld [vmem:[%s3629 + $0x38] sm:$0xff]
        %v3638 = vld [vmem:[%s3629 + $0x40] sm:$0xff]
        %v3639 = vld [vmem:[%s3629 + $0x48] sm:$0xff]
        %v3640 = vld [vmem:[%s3629 + $0x50] sm:$0xff]
        %v3641 = vld [vmem:[%s3629 + $0x58] sm:$0xff]
        %v3642 = vld [vmem:[%s3629 + $0x60] sm:$0xff]
        %v3643 = vld [vmem:[%s3629 + $0x68] sm:$0xff]
        %v3644 = vld [vmem:[%s3629 + $0x70] sm:$0xff]
        %v3645 = vld [vmem:[%s3629 + $0x78] sm:$0xff]
        %v3646 = vrot.slane %v2898, 1
        %v3647 = vrot.slane %v2900, 2
        %v3648 = vor.u32 %v3646, %v3647
        %v3649 = vrot.slane %v2909, 1
        %v3650 = vrot.slane %v2905, 2
        %v3651 = vor.u32 %v3649, %v3650
        %v3652 = vsel %vm1578, %v3648, %v3651
        %v3653 = vrot.slane %v2917, 1
        %v3654 = vrot.slane %v2913, 2
        %v3655 = vor.u32 %v3653, %v3654
        %v3656 = vsel %vm1578, %v3651, %v3655
        %v3657 = vrot.slane %v2925, 1
        %v3658 = vrot.slane %v2921, 2
        %v3659 = vor.u32 %v3657, %v3658
        %v3660 = vsel %vm1578, %v3655, %v3659
        %v3661 = vrot.slane %v2933, 1
        %v3662 = vrot.slane %v2929, 2
        %v3663 = vor.u32 %v3661, %v3662
        %v3664 = vsel %vm1578, %v3659, %v3663
        %v3665 = vrot.slane %v2941, 1
        %v3666 = vrot.slane %v2937, 2
        %v3667 = vor.u32 %v3665, %v3666
        %v3668 = vsel %vm1578, %v3663, %v3667
        %v3669 = vrot.slane %v2949, 1
        %v3670 = vrot.slane %v2945, 2
        %v3671 = vor.u32 %v3669, %v3670
        %v3672 = vsel %vm1578, %v3667, %v3671
        %v3673 = vrot.slane %v2957, 1
        %v3674 = vrot.slane %v2953, 2
        %v3675 = vor.u32 %v3673, %v3674
        %v3676 = vsel %vm1578, %v3671, %v3675
        %v3677 = vsel %vm1578, %v3675, %v1646
        %v3702 = vunpack.c.l.b16 %v3630
        %v3703 = vunpack.c.h.b16 %v3630
        %v3704 = vunpack.c.l.b16 %v3631
        %v3705 = vunpack.c.h.b16 %v3631
        %v3706 = vunpack.c.l.b16 %v3632
        %v3707 = vunpack.c.h.b16 %v3632
        %v3708 = vunpack.c.l.b16 %v3633
        %v3709 = vunpack.c.h.b16 %v3633
        %v3710 = vunpack.c.l.b16 %v3634
        %v3711 = vunpack.c.h.b16 %v3634
        %v3712 = vunpack.c.l.b16 %v3635
        %v3713 = vunpack.c.h.b16 %v3635
        %v3714 = vunpack.c.l.b16 %v3636
        %v3715 = vunpack.c.h.b16 %v3636
        %v3716 = vunpack.c.l.b16 %v3637
        %v3717 = vunpack.c.h.b16 %v3637
        %v3718 = vunpack.c.l.b16 %v3638
        %v3719 = vunpack.c.h.b16 %v3638
        %v3720 = vunpack.c.l.b16 %v3639
        %v3721 = vunpack.c.h.b16 %v3639
        %v3722 = vunpack.c.l.b16 %v3640
        %v3723 = vunpack.c.h.b16 %v3640
        %v3724 = vunpack.c.l.b16 %v3641
        %v3725 = vunpack.c.h.b16 %v3641
        %v3726 = vunpack.c.l.b16 %v3642
        %v3727 = vunpack.c.h.b16 %v3642
        %v3728 = vunpack.c.l.b16 %v3643
        %v3729 = vunpack.c.h.b16 %v3643
        %v3730 = vunpack.c.l.b16 %v3644
        %v3731 = vunpack.c.h.b16 %v3644
        %v3732 = vunpack.c.l.b16 %v3645
        %v3733 = vunpack.c.h.b16 %v3645
        %v3734 = vpack.c.b16 %v3704, %v3702
        %v3735 = vpack.c.b16 %v3705, %v3703
        %v3736 = vpack.c.b16 %v3708, %v3706
        %v3737 = vpack.c.b16 %v3709, %v3707
        %v3738 = vpack.c.b16 %v3712, %v3710
        %v3739 = vpack.c.b16 %v3713, %v3711
        %v3740 = vpack.c.b16 %v3716, %v3714
        %v3741 = vpack.c.b16 %v3717, %v3715
        %v3742 = vpack.c.b16 %v3720, %v3718
        %v3743 = vpack.c.b16 %v3721, %v3719
        %v3744 = vpack.c.b16 %v3724, %v3722
        %v3745 = vpack.c.b16 %v3725, %v3723
        %v3746 = vpack.c.b16 %v3728, %v3726
        %v3747 = vpack.c.b16 %v3729, %v3727
        %v3748 = vpack.c.b16 %v3732, %v3730
        %v3749 = vpack.c.b16 %v3733, %v3731
        %3766 = vmatprep.subr.bf16.mxu0 %v3735
        %3767 = vmatpush1.bf16.msra.mxu0 %v3734
        %3768 = vmatprep.subr.bf16.mxu0 %v3737
        %3769 = vmatpush1.bf16.msra.mxu0 %v3736
        %3770 = vmatprep.subr.bf16.mxu0 %v3739
        %3771 = vmatpush1.bf16.msra.mxu0 %v3738
        %3772 = vmatprep.subr.bf16.mxu0 %v3741
        %3773 = vmatpush1.bf16.msra.mxu0 %v3740
        %3774 = vmatprep.subr.bf16.mxu0 %v3743
        %3775 = vmatpush1.bf16.msra.mxu0 %v3742
        %3776 = vmatprep.subr.bf16.mxu0 %v3745
        %3777 = vmatpush1.bf16.msra.mxu0 %v3744
        %3778 = vmatprep.subr.bf16.mxu0 %v3747
        %3779 = vmatpush1.bf16.msra.mxu0 %v3746
        %3780 = vmatprep.subr.bf16.mxu0 %v3749
        %3781 = vmatpush1.bf16.msra.mxu0 %v3748
        %3782 = vmatprep.subr.bf16.mxu0 0
        %3783 = vmatpush1.bf16.msra.mxu0 0
        %3784 = vmatprep.subr.bf16.mxu0 0
        %3785 = vmatpush1.bf16.msra.mxu0 0
        %3786 = vmatprep.subr.bf16.mxu0 0
        %3787 = vmatpush1.bf16.msra.mxu0 0
        %3788 = vmatprep.subr.bf16.mxu0 0
        %3789 = vmatpush1.bf16.msra.mxu0 0
        %3790 = vmatprep.subr.bf16.mxu0 0
        %3791 = vmatpush1.bf16.msra.mxu0 0
        %3792 = vmatprep.subr.bf16.mxu0 0
        %3793 = vmatpush1.bf16.msra.mxu0 0
        %3794 = vmatprep.subr.bf16.mxu0 0
        %3795 = vmatpush1.bf16.msra.mxu0 0
        %3796 = vmatprep.subr.bf16.mxu0 0
        %3797 = vmatpush1.bf16.msra.mxu0 0
        %3798 = vmatprep.mubr.bf16.mxu0 0
        %3799 = vmatmul.mubr.bf16.gmra.mrb[0].mxu0 %v3652
        %v3800 = vpop.f32.mrb[0].mxu0
        %v3801 = vadd.f32 0.0, %v3800
        %v3802 = vpop.f32.mrb[0].mxu0
        %v3803 = vadd.f32 0.0, %v3802
        %v3804 = vpop.f32.mrb[0].mxu0
        %v3805 = vadd.f32 0.0, %v3804
        %v3806 = vpop.f32.mrb[0].mxu0
        %v3807 = vadd.f32 0.0, %v3806
        %3808 = vmatprep.mubr.bf16.mxu0 0
        %3809 = vmatmul.mubr.bf16.gmra.mrb[0].mxu0 %v3656
        %v3810 = vpop.f32.mrb[0].mxu0
        %v3811 = vadd.f32 0.0, %v3810
        %v3812 = vpop.f32.mrb[0].mxu0
        %v3813 = vadd.f32 0.0, %v3812
        %v3814 = vpop.f32.mrb[0].mxu0
        %v3815 = vadd.f32 0.0, %v3814
        %v3816 = vpop.f32.mrb[0].mxu0
        %v3817 = vadd.f32 0.0, %v3816
        %3818 = vmatprep.mubr.bf16.mxu0 0
        %3819 = vmatmul.mubr.bf16.gmra.mrb[0].mxu0 %v3660
        %v3820 = vpop.f32.mrb[0].mxu0
        %v3821 = vadd.f32 0.0, %v3820
        %v3822 = vpop.f32.mrb[0].mxu0
        %v3823 = vadd.f32 0.0, %v3822
        %v3824 = vpop.f32.mrb[0].mxu0
        %v3825 = vadd.f32 0.0, %v3824
        %v3826 = vpop.f32.mrb[0].mxu0
        %v3827 = vadd.f32 0.0, %v3826
        %3828 = vmatprep.mubr.bf16.mxu0 0
        %3829 = vmatmul.mubr.bf16.gmra.mrb[0].mxu0 %v3664
        %v3830 = vpop.f32.mrb[0].mxu0
        %v3831 = vadd.f32 0.0, %v3830
        %v3832 = vpop.f32.mrb[0].mxu0
        %v3833 = vadd.f32 0.0, %v3832
        %v3834 = vpop.f32.mrb[0].mxu0
        %v3835 = vadd.f32 0.0, %v3834
        %v3836 = vpop.f32.mrb[0].mxu0
        %v3837 = vadd.f32 0.0, %v3836
        %3838 = vmatprep.mubr.bf16.mxu0 0
        %3839 = vmatmul.mubr.bf16.gmra.mrb[0].mxu0 %v3668
        %v3840 = vpop.f32.mrb[0].mxu0
        %v3841 = vadd.f32 0.0, %v3840
        %v3842 = vpop.f32.mrb[0].mxu0
        %v3843 = vadd.f32 0.0, %v3842
        %v3844 = vpop.f32.mrb[0].mxu0
        %v3845 = vadd.f32 0.0, %v3844
        %v3846 = vpop.f32.mrb[0].mxu0
        %v3847 = vadd.f32 0.0, %v3846
        %3848 = vmatprep.mubr.bf16.mxu0 0
        %3849 = vmatmul.mubr.bf16.gmra.mrb[0].mxu0 %v3672
        %v3850 = vpop.f32.mrb[0].mxu0
        %v3851 = vadd.f32 0.0, %v3850
        %v3852 = vpop.f32.mrb[0].mxu0
        %v3853 = vadd.f32 0.0, %v3852
        %v3854 = vpop.f32.mrb[0].mxu0
        %v3855 = vadd.f32 0.0, %v3854
        %v3856 = vpop.f32.mrb[0].mxu0
        %v3857 = vadd.f32 0.0, %v3856
        %3858 = vmatprep.mubr.bf16.mxu0 0
        %3859 = vmatmul.mubr.bf16.gmra.mrb[0].mxu0 %v3676
        %v3860 = vpop.f32.mrb[0].mxu0
        %v3861 = vadd.f32 0.0, %v3860
        %v3862 = vpop.f32.mrb[0].mxu0
        %v3863 = vadd.f32 0.0, %v3862
        %v3864 = vpop.f32.mrb[0].mxu0
        %v3865 = vadd.f32 0.0, %v3864
        %v3866 = vpop.f32.mrb[0].mxu0
        %v3867 = vadd.f32 0.0, %v3866
        %3868 = vmatprep.mubr.bf16.mxu0 0
        %3869 = vmatmul.mubr.bf16.gmra.mrb[0].mxu0 %v3677
        %v3870 = vpop.f32.mrb[0].mxu0
        %v3871 = vadd.f32 0.0, %v3870
        %v3872 = vpop.f32.mrb[0].mxu0
        %v3873 = vadd.f32 0.0, %v3872
        %v3874 = vpop.f32.mrb[0].mxu0
        %v3875 = vadd.f32 0.0, %v3874
        %v3876 = vpop.f32.mrb[0].mxu0
        %v3877 = vadd.f32 0.0, %v3876
        %3878 = vdwg.mxu0
        %v3879 = vadd.f32 %v3597, %v3801
        %v3880 = vadd.f32 %v3598, %v3803
        %v3881 = vadd.f32 %v3599, %v3805
        %v3882 = vadd.f32 %v3600, %v3807
        %v3883 = vadd.f32 %v3601, %v3811
        %v3884 = vadd.f32 %v3602, %v3813
        %v3885 = vadd.f32 %v3603, %v3815
        %v3886 = vadd.f32 %v3604, %v3817
        %v3887 = vadd.f32 %v3605, %v3821
        %v3888 = vadd.f32 %v3606, %v3823
        %v3889 = vadd.f32 %v3607, %v3825
        %v3890 = vadd.f32 %v3608, %v3827
        %v3891 = vadd.f32 %v3609, %v3831
        %v3892 = vadd.f32 %v3610, %v3833
        %v3893 = vadd.f32 %v3611, %v3835
        %v3894 = vadd.f32 %v3612, %v3837
        %v3895 = vadd.f32 %v3613, %v3841
        %v3896 = vadd.f32 %v3614, %v3843
        %v3897 = vadd.f32 %v3615, %v3845
        %v3898 = vadd.f32 %v3616, %v3847
        %v3899 = vadd.f32 %v3617, %v3851
        %v3900 = vadd.f32 %v3618, %v3853
        %v3901 = vadd.f32 %v3619, %v3855
        %v3902 = vadd.f32 %v3620, %v3857
        %v3903 = vadd.f32 %v3621, %v3861
        %v3904 = vadd.f32 %v3622, %v3863
        %v3905 = vadd.f32 %v3623, %v3865
        %v3906 = vadd.f32 %v3624, %v3867
        %v3907 = vadd.f32 %v3625, %v3871
        %v3908 = vadd.f32 %v3626, %v3873
        %v3909 = vadd.f32 %v3627, %v3875
        %v3910 = vadd.f32 %v3628, %v3877
        %s3911 = scalar_lea.vmem [#allocation4], 512
        %v3912 = vld [vmem:[%s3911] sm:$0xff]
        %v3913 = vld [vmem:[%s3911 + $0x8] sm:$0xff]
        %v3914 = vld [vmem:[%s3911 + $0x10] sm:$0xff]
        %v3915 = vld [vmem:[%s3911 + $0x18] sm:$0xff]
        %v3916 = vld [vmem:[%s3911 + $0x20] sm:$0xff]
        %v3917 = vld [vmem:[%s3911 + $0x28] sm:$0xff]
        %v3918 = vld [vmem:[%s3911 + $0x30] sm:$0xff]
        %v3919 = vld [vmem:[%s3911 + $0x38] sm:$0xff]
        %v3920 = vld [vmem:[%s3911 + $0x40] sm:$0xff]
        %v3921 = vld [vmem:[%s3911 + $0x48] sm:$0xff]
        %v3922 = vld [vmem:[%s3911 + $0x50] sm:$0xff]
        %v3923 = vld [vmem:[%s3911 + $0x58] sm:$0xff]
        %v3924 = vld [vmem:[%s3911 + $0x60] sm:$0xff]
        %v3925 = vld [vmem:[%s3911 + $0x68] sm:$0xff]
        %v3926 = vld [vmem:[%s3911 + $0x70] sm:$0xff]
        %v3927 = vld [vmem:[%s3911 + $0x78] sm:$0xff]
        %v3928 = vrot.slane %v2856, 2
        %v3929 = vrot.slane %v2857, 2
        %v3930 = vsel %vm1978, %v3928, %v3929
        %v3931 = vrot.slane %v2858, 2
        %v3932 = vsel %vm1978, %v3929, %v3931
        %v3933 = vrot.slane %v2859, 2
        %v3934 = vsel %vm1978, %v3931, %v3933
        %v3935 = vrot.slane %v2860, 2
        %v3936 = vsel %vm1978, %v3933, %v3935
        %v3937 = vrot.slane %v2861, 2
        %v3938 = vsel %vm1978, %v3935, %v3937
        %v3939 = vrot.slane %v2862, 2
        %v3940 = vsel %vm1978, %v3937, %v3939
        %v3941 = vrot.slane %v2863, 2
        %v3942 = vsel %vm1978, %v3939, %v3941
        %v3943 = vsel %vm1978, %v3941, %v2010
        %v3968 = vunpack.c.l.b16 %v3912
        %v3969 = vunpack.c.h.b16 %v3912
        %v3970 = vunpack.c.l.b16 %v3913
        %v3971 = vunpack.c.h.b16 %v3913
        %v3972 = vunpack.c.l.b16 %v3914
        %v3973 = vunpack.c.h.b16 %v3914
        %v3974 = vunpack.c.l.b16 %v3915
        %v3975 = vunpack.c.h.b16 %v3915
        %v3976 = vunpack.c.l.b16 %v3916
        %v3977 = vunpack.c.h.b16 %v3916
        %v3978 = vunpack.c.l.b16 %v3917
        %v3979 = vunpack.c.h.b16 %v3917
        %v3980 = vunpack.c.l.b16 %v3918
        %v3981 = vunpack.c.h.b16 %v3918
        %v3982 = vunpack.c.l.b16 %v3919
        %v3983 = vunpack.c.h.b16 %v3919
        %v3984 = vunpack.c.l.b16 %v3920
        %v3985 = vunpack.c.h.b16 %v3920
        %v3986 = vunpack.c.l.b16 %v3921
        %v3987 = vunpack.c.h.b16 %v3921
        %v3988 = vunpack.c.l.b16 %v3922
        %v3989 = vunpack.c.h.b16 %v3922
        %v3990 = vunpack.c.l.b16 %v3923
        %v3991 = vunpack.c.h.b16 %v3923
        %v3992 = vunpack.c.l.b16 %v3924
        %v3993 = vunpack.c.h.b16 %v3924
        %v3994 = vunpack.c.l.b16 %v3925
        %v3995 = vunpack.c.h.b16 %v3925
        %v3996 = vunpack.c.l.b16 %v3926
        %v3997 = vunpack.c.h.b16 %v3926
        %v3998 = vunpack.c.l.b16 %v3927
        %v3999 = vunpack.c.h.b16 %v3927
        %v4000 = vpack.c.b16 %v3970, %v3968
        %v4001 = vpack.c.b16 %v3971, %v3969
        %v4002 = vpack.c.b16 %v3974, %v3972
        %v4003 = vpack.c.b16 %v3975, %v3973
        %v4004 = vpack.c.b16 %v3978, %v3976
        %v4005 = vpack.c.b16 %v3979, %v3977
        %v4006 = vpack.c.b16 %v3982, %v3980
        %v4007 = vpack.c.b16 %v3983, %v3981
        %v4008 = vpack.c.b16 %v3986, %v3984
        %v4009 = vpack.c.b16 %v3987, %v3985
        %v4010 = vpack.c.b16 %v3990, %v3988
        %v4011 = vpack.c.b16 %v3991, %v3989
        %v4012 = vpack.c.b16 %v3994, %v3992
        %v4013 = vpack.c.b16 %v3995, %v3993
        %v4014 = vpack.c.b16 %v3998, %v3996
        %v4015 = vpack.c.b16 %v3999, %v3997
        %4032 = vmatprep.subr.bf16.mxu0 %v4001
        %4033 = vmatpush1.bf16.msra.mxu0 %v4000
        %4034 = vmatprep.subr.bf16.mxu0 %v4003
        %4035 = vmatpush1.bf16.msra.mxu0 %v4002
        %4036 = vmatprep.subr.bf16.mxu0 %v4005
        %4037 = vmatpush1.bf16.msra.mxu0 %v4004
        %4038 = vmatprep.subr.bf16.mxu0 %v4007
        %4039 = vmatpush1.bf16.msra.mxu0 %v4006
        %4040 = vmatprep.subr.bf16.mxu0 %v4009
        %4041 = vmatpush1.bf16.msra.mxu0 %v4008
        %4042 = vmatprep.subr.bf16.mxu0 %v4011
        %4043 = vmatpush1.bf16.msra.mxu0 %v4010
        %4044 = vmatprep.subr.bf16.mxu0 %v4013
        %4045 = vmatpush1.bf16.msra.mxu0 %v4012
        %4046 = vmatprep.subr.bf16.mxu0 %v4015
        %4047 = vmatpush1.bf16.msra.mxu0 %v4014
        %4048 = vmatprep.subr.bf16.mxu0 0
        %4049 = vmatpush1.bf16.msra.mxu0 0
        %4050 = vmatprep.subr.bf16.mxu0 0
        %4051 = vmatpush1.bf16.msra.mxu0 0
        %4052 = vmatprep.subr.bf16.mxu0 0
        %4053 = vmatpush1.bf16.msra.mxu0 0
        %4054 = vmatprep.subr.bf16.mxu0 0
        %4055 = vmatpush1.bf16.msra.mxu0 0
        %4056 = vmatprep.subr.bf16.mxu0 0
        %4057 = vmatpush1.bf16.msra.mxu0 0
        %4058 = vmatprep.subr.bf16.mxu0 0
        %4059 = vmatpush1.bf16.msra.mxu0 0
        %4060 = vmatprep.subr.bf16.mxu0 0
        %4061 = vmatpush1.bf16.msra.mxu0 0
        %4062 = vmatprep.subr.bf16.mxu0 0
        %4063 = vmatpush1.bf16.msra.mxu0 0
        %4064 = vmatprep.mubr.bf16.mxu0 0
        %4065 = vmatmul.mubr.bf16.gmra.mrb[0].mxu0 %v3930
        %v4066 = vpop.f32.mrb[0].mxu0
        %v4067 = vadd.f32 0.0, %v4066
        %v4068 = vpop.f32.mrb[0].mxu0
        %v4069 = vadd.f32 0.0, %v4068
        %v4070 = vpop.f32.mrb[0].mxu0
        %v4071 = vadd.f32 0.0, %v4070
        %v4072 = vpop.f32.mrb[0].mxu0
        %v4073 = vadd.f32 0.0, %v4072
        %4074 = vmatprep.mubr.bf16.mxu0 0
        %4075 = vmatmul.mubr.bf16.gmra.mrb[0].mxu0 %v3932
        %v4076 = vpop.f32.mrb[0].mxu0
        %v4077 = vadd.f32 0.0, %v4076
        %v4078 = vpop.f32.mrb[0].mxu0
        %v4079 = vadd.f32 0.0, %v4078
        %v4080 = vpop.f32.mrb[0].mxu0
        %v4081 = vadd.f32 0.0, %v4080
        %v4082 = vpop.f32.mrb[0].mxu0
        %v4083 = vadd.f32 0.0, %v4082
        %4084 = vmatprep.mubr.bf16.mxu0 0
        %4085 = vmatmul.mubr.bf16.gmra.mrb[0].mxu0 %v3934
        %v4086 = vpop.f32.mrb[0].mxu0
        %v4087 = vadd.f32 0.0, %v4086
        %v4088 = vpop.f32.mrb[0].mxu0
        %v4089 = vadd.f32 0.0, %v4088
        %v4090 = vpop.f32.mrb[0].mxu0
        %v4091 = vadd.f32 0.0, %v4090
        %v4092 = vpop.f32.mrb[0].mxu0
        %v4093 = vadd.f32 0.0, %v4092
        %4094 = vmatprep.mubr.bf16.mxu0 0
        %4095 = vmatmul.mubr.bf16.gmra.mrb[0].mxu0 %v3936
        %v4096 = vpop.f32.mrb[0].mxu0
        %v4097 = vadd.f32 0.0, %v4096
        %v4098 = vpop.f32.mrb[0].mxu0
        %v4099 = vadd.f32 0.0, %v4098
        %v4100 = vpop.f32.mrb[0].mxu0
        %v4101 = vadd.f32 0.0, %v4100
        %v4102 = vpop.f32.mrb[0].mxu0
        %v4103 = vadd.f32 0.0, %v4102
        %4104 = vmatprep.mubr.bf16.mxu0 0
        %4105 = vmatmul.mubr.bf16.gmra.mrb[0].mxu0 %v3938
        %v4106 = vpop.f32.mrb[0].mxu0
        %v4107 = vadd.f32 0.0, %v4106
        %v4108 = vpop.f32.mrb[0].mxu0
        %v4109 = vadd.f32 0.0, %v4108
        %v4110 = vpop.f32.mrb[0].mxu0
        %v4111 = vadd.f32 0.0, %v4110
        %v4112 = vpop.f32.mrb[0].mxu0
        %v4113 = vadd.f32 0.0, %v4112
        %4114 = vmatprep.mubr.bf16.mxu0 0
        %4115 = vmatmul.mubr.bf16.gmra.mrb[0].mxu0 %v3940
        %v4116 = vpop.f32.mrb[0].mxu0
        %v4117 = vadd.f32 0.0, %v4116
        %v4118 = vpop.f32.mrb[0].mxu0
        %v4119 = vadd.f32 0.0, %v4118
        %v4120 = vpop.f32.mrb[0].mxu0
        %v4121 = vadd.f32 0.0, %v4120
        %v4122 = vpop.f32.mrb[0].mxu0
        %v4123 = vadd.f32 0.0, %v4122
        %4124 = vmatprep.mubr.bf16.mxu0 0
        %4125 = vmatmul.mubr.bf16.gmra.mrb[0].mxu0 %v3942
        %v4126 = vpop.f32.mrb[0].mxu0
        %v4127 = vadd.f32 0.0, %v4126
        %v4128 = vpop.f32.mrb[0].mxu0
        %v4129 = vadd.f32 0.0, %v4128
        %v4130 = vpop.f32.mrb[0].mxu0
        %v4131 = vadd.f32 0.0, %v4130
        %v4132 = vpop.f32.mrb[0].mxu0
        %v4133 = vadd.f32 0.0, %v4132
        %4134 = vmatprep.mubr.bf16.mxu0 0
        %4135 = vmatmul.mubr.bf16.gmra.mrb[0].mxu0 %v3943
        %v4136 = vpop.f32.mrb[0].mxu0
        %v4137 = vadd.f32 0.0, %v4136
        %v4138 = vpop.f32.mrb[0].mxu0
        %v4139 = vadd.f32 0.0, %v4138
        %v4140 = vpop.f32.mrb[0].mxu0
        %v4141 = vadd.f32 0.0, %v4140
        %v4142 = vpop.f32.mrb[0].mxu0
        %v4143 = vadd.f32 0.0, %v4142
        %4144 = vdwg.mxu0
        %v4145 = vadd.f32 %v3879, %v4067
        %v4146 = vadd.f32 %v3880, %v4069
        %v4147 = vadd.f32 %v3881, %v4071
        %v4148 = vadd.f32 %v3882, %v4073
        %v4149 = vadd.f32 %v3883, %v4077
        %v4150 = vadd.f32 %v3884, %v4079
        %v4151 = vadd.f32 %v3885, %v4081
        %v4152 = vadd.f32 %v3886, %v4083
        %v4153 = vadd.f32 %v3887, %v4087
        %v4154 = vadd.f32 %v3888, %v4089
        %v4155 = vadd.f32 %v3889, %v4091
        %v4156 = vadd.f32 %v3890, %v4093
        %v4157 = vadd.f32 %v3891, %v4097
        %v4158 = vadd.f32 %v3892, %v4099
        %v4159 = vadd.f32 %v3893, %v4101
        %v4160 = vadd.f32 %v3894, %v4103
        %v4161 = vadd.f32 %v3895, %v4107
        %v4162 = vadd.f32 %v3896, %v4109
        %v4163 = vadd.f32 %v3897, %v4111
        %v4164 = vadd.f32 %v3898, %v4113
        %v4165 = vadd.f32 %v3899, %v4117
        %v4166 = vadd.f32 %v3900, %v4119
        %v4167 = vadd.f32 %v3901, %v4121
        %v4168 = vadd.f32 %v3902, %v4123
        %v4169 = vadd.f32 %v3903, %v4127
        %v4170 = vadd.f32 %v3904, %v4129
        %v4171 = vadd.f32 %v3905, %v4131
        %v4172 = vadd.f32 %v3906, %v4133
        %v4173 = vadd.f32 %v3907, %v4137
        %v4174 = vadd.f32 %v3908, %v4139
        %v4175 = vadd.f32 %v3909, %v4141
        %v4176 = vadd.f32 %v3910, %v4143
        %v4177 = vmax.f32 %v4145, %v4146
        %v4178 = vmax.f32 %v4147, %v4148
        %v4179 = vmax.f32 %v4149, %v4150
        %v4180 = vmax.f32 %v4151, %v4152
        %v4181 = vmax.f32 %v4153, %v4154
        %v4182 = vmax.f32 %v4155, %v4156
        %v4183 = vmax.f32 %v4157, %v4158
        %v4184 = vmax.f32 %v4159, %v4160
        %v4185 = vmax.f32 %v4161, %v4162
        %v4186 = vmax.f32 %v4163, %v4164
        %v4187 = vmax.f32 %v4165, %v4166
        %v4188 = vmax.f32 %v4167, %v4168
        %v4189 = vmax.f32 %v4169, %v4170
        %v4190 = vmax.f32 %v4171, %v4172
        %v4191 = vmax.f32 %v4173, %v4174
        %v4192 = vmax.f32 %v4175, %v4176
        %v4193 = vld [vmem:[%s4] sm:$0x1]
        %v4195 = vlaneseq
        %v4196 = vshrl.u32 %v4195, 7
        %v4197 = vsub.s32 0, %v4196
        %v4198 = vrot.slane %v4193, %v4197
        %v4200 = vadd.f32 %v4177, %v4198
        %v4201 = vadd.f32 %v4178, %v4198
        %v4202 = vadd.f32 %v4179, %v4198
        %v4203 = vadd.f32 %v4180, %v4198
        %v4204 = vadd.f32 %v4181, %v4198
        %v4205 = vadd.f32 %v4182, %v4198
        %v4206 = vadd.f32 %v4183, %v4198
        %v4207 = vadd.f32 %v4184, %v4198
        %v4208 = vadd.f32 %v4185, %v4198
        %v4209 = vadd.f32 %v4186, %v4198
        %v4210 = vadd.f32 %v4187, %v4198
        %v4211 = vadd.f32 %v4188, %v4198
        %v4212 = vadd.f32 %v4189, %v4198
        %v4213 = vadd.f32 %v4190, %v4198
        %v4214 = vadd.f32 %v4191, %v4198
        %v4215 = vadd.f32 %v4192, %v4198
        %v4216 = vmax.f32 %v4200, 0.0
        %v4217 = vmax.f32 %v4201, 0.0
        %v4218 = vmax.f32 %v4202, 0.0
        %v4219 = vmax.f32 %v4203, 0.0
        %v4220 = vmax.f32 %v4204, 0.0
        %v4221 = vmax.f32 %v4205, 0.0
        %v4222 = vmax.f32 %v4206, 0.0
        %v4223 = vmax.f32 %v4207, 0.0
        %v4224 = vmax.f32 %v4208, 0.0
        %v4225 = vmax.f32 %v4209, 0.0
        %v4226 = vmax.f32 %v4210, 0.0
        %v4227 = vmax.f32 %v4211, 0.0
        %v4228 = vmax.f32 %v4212, 0.0
        %v4229 = vmax.f32 %v4213, 0.0
        %v4230 = vmax.f32 %v4214, 0.0
        %v4231 = vmax.f32 %v4215, 0.0
        %v4233 = vunpack.c.l.s4 1966171168
        %v4234 = vunpack.c.0.s8 %v4233
        %v4235 = vlaneseq
        %v4236 = vshrl.u32 %v4235, 7
        %v4237 = vsub.s32 %v4234, %v4236
        %v4238 = vrot.slane %v4216, %v4237
        %v4240 = vunpack.c.l.s4 1966171168
        %v4241 = vunpack.c.0.s8 %v4240
        %v4242 = vlaneseq
        %v4243 = vshrl.u32 %v4242, 7
        %v4244 = vsub.s32 %v4241, %v4243
        %v4245 = vrot.slane %v4217, %v4244
        %v4247 = vunpack.c.l.s4 1966171168
        %v4248 = vunpack.c.0.s8 %v4247
        %v4249 = vlaneseq
        %v4250 = vshrl.u32 %v4249, 7
        %v4251 = vsub.s32 %v4248, %v4250
        %v4252 = vrot.slane %v4218, %v4251
        %v4254 = vunpack.c.l.s4 1966171168
        %v4255 = vunpack.c.0.s8 %v4254
        %v4256 = vlaneseq
        %v4257 = vshrl.u32 %v4256, 7
        %v4258 = vsub.s32 %v4255, %v4257
        %v4259 = vrot.slane %v4219, %v4258
        %v4261 = vunpack.c.l.s4 1966171168
        %v4262 = vunpack.c.0.s8 %v4261
        %v4263 = vlaneseq
        %v4264 = vshrl.u32 %v4263, 7
        %v4265 = vsub.s32 %v4262, %v4264
        %v4266 = vrot.slane %v4220, %v4265
        %v4268 = vunpack.c.l.s4 1966171168
        %v4269 = vunpack.c.0.s8 %v4268
        %v4270 = vlaneseq
        %v4271 = vshrl.u32 %v4270, 7
        %v4272 = vsub.s32 %v4269, %v4271
        %v4273 = vrot.slane %v4221, %v4272
        %v4275 = vunpack.c.l.s4 1966171168
        %v4276 = vunpack.c.0.s8 %v4275
        %v4277 = vlaneseq
        %v4278 = vshrl.u32 %v4277, 7
        %v4279 = vsub.s32 %v4276, %v4278
        %v4280 = vrot.slane %v4222, %v4279
        %v4282 = vunpack.c.l.s4 1966171168
        %v4283 = vunpack.c.0.s8 %v4282
        %v4284 = vlaneseq
        %v4285 = vshrl.u32 %v4284, 7
        %v4286 = vsub.s32 %v4283, %v4285
        %v4287 = vrot.slane %v4223, %v4286
        %v4289 = vunpack.c.l.s4 1966171168
        %v4290 = vunpack.c.0.s8 %v4289
        %v4291 = vlaneseq
        %v4292 = vshrl.u32 %v4291, 7
        %v4293 = vsub.s32 %v4290, %v4292
        %v4294 = vrot.slane %v4224, %v4293
        %v4296 = vunpack.c.l.s4 1966171168
        %v4297 = vunpack.c.0.s8 %v4296
        %v4298 = vlaneseq
        %v4299 = vshrl.u32 %v4298, 7
        %v4300 = vsub.s32 %v4297, %v4299
        %v4301 = vrot.slane %v4225, %v4300
        %v4303 = vunpack.c.l.s4 1966171168
        %v4304 = vunpack.c.0.s8 %v4303
        %v4305 = vlaneseq
        %v4306 = vshrl.u32 %v4305, 7
        %v4307 = vsub.s32 %v4304, %v4306
        %v4308 = vrot.slane %v4226, %v4307
        %v4310 = vunpack.c.l.s4 1966171168
        %v4311 = vunpack.c.0.s8 %v4310
        %v4312 = vlaneseq
        %v4313 = vshrl.u32 %v4312, 7
        %v4314 = vsub.s32 %v4311, %v4313
        %v4315 = vrot.slane %v4227, %v4314
        %v4317 = vunpack.c.l.s4 1966171168
        %v4318 = vunpack.c.0.s8 %v4317
        %v4319 = vlaneseq
        %v4320 = vshrl.u32 %v4319, 7
        %v4321 = vsub.s32 %v4318, %v4320
        %v4322 = vrot.slane %v4228, %v4321
        %v4324 = vunpack.c.l.s4 1966171168
        %v4325 = vunpack.c.0.s8 %v4324
        %v4326 = vlaneseq
        %v4327 = vshrl.u32 %v4326, 7
        %v4328 = vsub.s32 %v4325, %v4327
        %v4329 = vrot.slane %v4229, %v4328
        %v4331 = vunpack.c.l.s4 1966171168
        %v4332 = vunpack.c.0.s8 %v4331
        %v4333 = vlaneseq
        %v4334 = vshrl.u32 %v4333, 7
        %v4335 = vsub.s32 %v4332, %v4334
        %v4336 = vrot.slane %v4230, %v4335
        %v4338 = vunpack.c.l.s4 1966171168
        %v4339 = vunpack.c.0.s8 %v4338
        %v4340 = vlaneseq
        %v4341 = vshrl.u32 %v4340, 7
        %v4342 = vsub.s32 %v4339, %v4341
        %v4343 = vrot.slane %v4231, %v4342
        %v4360 = vrot.slane %v4238, 4
        %v4361 = vrot.slane %v4245, 4
        %v4362 = vrot.slane %v4252, 4
        %v4363 = vrot.slane %v4259, 4
        %v4364 = vrot.slane %v4266, 4
        %v4365 = vrot.slane %v4273, 4
        %v4366 = vrot.slane %v4280, 4
        %v4367 = vrot.slane %v4287, 4
        %v4368 = vrot.slane %v4294, 4
        %v4369 = vrot.slane %v4301, 4
        %v4370 = vrot.slane %v4308, 4
        %v4371 = vrot.slane %v4315, 4
        %v4372 = vrot.slane %v4322, 4
        %v4373 = vrot.slane %v4329, 4
        %v4374 = vrot.slane %v4336, 4
        %v4375 = vrot.slane %v4343, 4
        %v4392 = vmax.f32 %v4238, %v4360
        %v4393 = vmax.f32 %v4245, %v4361
        %v4394 = vmax.f32 %v4252, %v4362
        %v4395 = vmax.f32 %v4259, %v4363
        %v4396 = vmax.f32 %v4266, %v4364
        %v4397 = vmax.f32 %v4273, %v4365
        %v4398 = vmax.f32 %v4280, %v4366
        %v4399 = vmax.f32 %v4287, %v4367
        %v4400 = vmax.f32 %v4294, %v4368
        %v4401 = vmax.f32 %v4301, %v4369
        %v4402 = vmax.f32 %v4308, %v4370
        %v4403 = vmax.f32 %v4315, %v4371
        %v4404 = vmax.f32 %v4322, %v4372
        %v4405 = vmax.f32 %v4329, %v4373
        %v4406 = vmax.f32 %v4336, %v4374
        %v4407 = vmax.f32 %v4343, %v4375
        %v4424 = vcombine.low %v4392, %v4393
        %v4425 = vcombine.low %v4394, %v4395
        %v4426 = vcombine.low %v4396, %v4397
        %v4427 = vcombine.low %v4398, %v4399
        %v4428 = vcombine.low %v4400, %v4401
        %v4429 = vcombine.low %v4402, %v4403
        %v4430 = vcombine.low %v4404, %v4405
        %v4431 = vcombine.low %v4406, %v4407
        %v4432 = vcombine.low %v4424, %v4425
        %v4433 = vcombine.high %v4424, %v4425
        %v4434 = vcombine.low %v4426, %v4427
        %v4435 = vcombine.high %v4426, %v4427
        %v4436 = vcombine.low %v4428, %v4429
        %v4437 = vcombine.high %v4428, %v4429
        %v4438 = vcombine.low %v4430, %v4431
        %v4439 = vcombine.high %v4430, %v4431
        %v4441 = vunpack.c.l.s4 1966171168
        %v4442 = vunpack.c.0.s8 %v4441
        %v4443 = vlaneseq
        %v4444 = vshrl.u32 %v4443, 7
        %v4445 = vsub.s32 %v4442, %v4444
        %v4446 = vrot.slane %v4432, %v4445
        %v4448 = vunpack.c.l.s4 1966171168
        %v4449 = vunpack.c.0.s8 %v4448
        %v4450 = vlaneseq
        %v4451 = vshrl.u32 %v4450, 7
        %v4452 = vsub.s32 %v4449, %v4451
        %v4453 = vrot.slane %v4433, %v4452
        %v4455 = vunpack.c.l.s4 1966171168
        %v4456 = vunpack.c.0.s8 %v4455
        %v4457 = vlaneseq
        %v4458 = vshrl.u32 %v4457, 7
        %v4459 = vsub.s32 %v4456, %v4458
        %v4460 = vrot.slane %v4434, %v4459
        %v4462 = vunpack.c.l.s4 1966171168
        %v4463 = vunpack.c.0.s8 %v4462
        %v4464 = vlaneseq
        %v4465 = vshrl.u32 %v4464, 7
        %v4466 = vsub.s32 %v4463, %v4465
        %v4467 = vrot.slane %v4435, %v4466
        %v4469 = vunpack.c.l.s4 1966171168
        %v4470 = vunpack.c.0.s8 %v4469
        %v4471 = vlaneseq
        %v4472 = vshrl.u32 %v4471, 7
        %v4473 = vsub.s32 %v4470, %v4472
        %v4474 = vrot.slane %v4436, %v4473
        %v4476 = vunpack.c.l.s4 1966171168
        %v4477 = vunpack.c.0.s8 %v4476
        %v4478 = vlaneseq
        %v4479 = vshrl.u32 %v4478, 7
        %v4480 = vsub.s32 %v4477, %v4479
        %v4481 = vrot.slane %v4437, %v4480
        %v4483 = vunpack.c.l.s4 1966171168
        %v4484 = vunpack.c.0.s8 %v4483
        %v4485 = vlaneseq
        %v4486 = vshrl.u32 %v4485, 7
        %v4487 = vsub.s32 %v4484, %v4486
        %v4488 = vrot.slane %v4438, %v4487
        %v4490 = vunpack.c.l.s4 1966171168
        %v4491 = vunpack.c.0.s8 %v4490
        %v4492 = vlaneseq
        %v4493 = vshrl.u32 %v4492, 7
        %v4494 = vsub.s32 %v4491, %v4493
        %v4495 = vrot.slane %v4439, %v4494
        %v4496 = vcombine.low %v4446, %v4460
        %v4497 = vcombine.high %v4446, %v4460
        %v4498 = vcombine.low %v4453, %v4467
        %v4499 = vcombine.high %v4453, %v4467
        %v4500 = vcombine.low %v4474, %v4488
        %v4501 = vcombine.high %v4474, %v4488
        %v4502 = vcombine.low %v4481, %v4495
        %v4503 = vcombine.high %v4481, %v4495
        %v4505 = vunpack.c.l.s4 1966171168
        %v4506 = vunpack.c.0.s8 %v4505
        %v4507 = vlaneseq
        %v4508 = vshrl.u32 %v4507, 7
        %v4509 = vsub.s32 %v4506, %v4508
        %v4510 = vrot.slane %v4496, %v4509
        %v4512 = vunpack.c.l.s4 1966171168
        %v4513 = vunpack.c.0.s8 %v4512
        %v4514 = vlaneseq
        %v4515 = vshrl.u32 %v4514, 7
        %v4516 = vsub.s32 %v4513, %v4515
        %v4517 = vrot.slane %v4498, %v4516
        %v4519 = vunpack.c.l.s4 1966171168
        %v4520 = vunpack.c.0.s8 %v4519
        %v4521 = vlaneseq
        %v4522 = vshrl.u32 %v4521, 7
        %v4523 = vsub.s32 %v4520, %v4522
        %v4524 = vrot.slane %v4497, %v4523
        %v4526 = vunpack.c.l.s4 1966171168
        %v4527 = vunpack.c.0.s8 %v4526
        %v4528 = vlaneseq
        %v4529 = vshrl.u32 %v4528, 7
        %v4530 = vsub.s32 %v4527, %v4529
        %v4531 = vrot.slane %v4499, %v4530
        %v4533 = vunpack.c.l.s4 1966171168
        %v4534 = vunpack.c.0.s8 %v4533
        %v4535 = vlaneseq
        %v4536 = vshrl.u32 %v4535, 7
        %v4537 = vsub.s32 %v4534, %v4536
        %v4538 = vrot.slane %v4500, %v4537
        %v4540 = vunpack.c.l.s4 1966171168
        %v4541 = vunpack.c.0.s8 %v4540
        %v4542 = vlaneseq
        %v4543 = vshrl.u32 %v4542, 7
        %v4544 = vsub.s32 %v4541, %v4543
        %v4545 = vrot.slane %v4502, %v4544
        %v4547 = vunpack.c.l.s4 1966171168
        %v4548 = vunpack.c.0.s8 %v4547
        %v4549 = vlaneseq
        %v4550 = vshrl.u32 %v4549, 7
        %v4551 = vsub.s32 %v4548, %v4550
        %v4552 = vrot.slane %v4501, %v4551
        %v4554 = vunpack.c.l.s4 1966171168
        %v4555 = vunpack.c.0.s8 %v4554
        %v4556 = vlaneseq
        %v4557 = vshrl.u32 %v4556, 7
        %v4558 = vsub.s32 %v4555, %v4557
        %v4559 = vrot.slane %v4503, %v4558
        %v4560 = vcombine.low %v4510, %v4538
        %v4561 = vcombine.high %v4510, %v4538
        %v4562 = vcombine.low %v4517, %v4545
        %v4563 = vcombine.high %v4517, %v4545
        %v4564 = vcombine.low %v4524, %v4552
        %v4565 = vcombine.high %v4524, %v4552
        %v4566 = vcombine.low %v4531, %v4559
        %v4567 = vcombine.high %v4531, %v4559
        %v4576 = vpack.c.bf16 %v4560, %v4560
        %v4577 = vpack.c.bf16 %v4564, %v4564
        %v4578 = vpack.c.bf16 %v4561, %v4561
        %v4579 = vpack.c.bf16 %v4565, %v4565
        %v4580 = vpack.c.bf16 %v4562, %v4562
        %v4581 = vpack.c.bf16 %v4566, %v4566
        %v4582 = vpack.c.bf16 %v4563, %v4563
        %v4583 = vpack.c.bf16 %v4567, %v4567
        %v4584 = vld [vmem:[%s5] sm:$0xf]
        %v4585 = vld [vmem:[%s5 + $0x4] sm:$0xf]
        %v4586 = vld [vmem:[%s5 + $0x8] sm:$0xf]
        %v4587 = vld [vmem:[%s5 + $0xc] sm:$0xf]
        %v4588 = vld [vmem:[%s5 + $0x10] sm:$0xf]
        %v4589 = vld [vmem:[%s5 + $0x14] sm:$0xf]
        %v4590 = vld [vmem:[%s5 + $0x18] sm:$0xf]
        %v4591 = vld [vmem:[%s5 + $0x1c] sm:$0xf]
        %v4592 = vld [vmem:[%s5 + $0x20] sm:$0xf]
        %v4593 = vld [vmem:[%s5 + $0x24] sm:$0xf]
        %v4594 = vld [vmem:[%s5 + $0x28] sm:$0xf]
        %v4595 = vld [vmem:[%s5 + $0x2c] sm:$0xf]
        %v4596 = vld [vmem:[%s5 + $0x30] sm:$0xf]
        %v4597 = vld [vmem:[%s5 + $0x34] sm:$0xf]
        %v4598 = vld [vmem:[%s5 + $0x38] sm:$0xf]
        %v4599 = vld [vmem:[%s5 + $0x3c] sm:$0xf]
        %v4600 = vld [vmem:[%s5 + $0x40] sm:$0xf]
        %v4601 = vld [vmem:[%s5 + $0x44] sm:$0xf]
        %v4602 = vld [vmem:[%s5 + $0x48] sm:$0xf]
        %v4603 = vld [vmem:[%s5 + $0x4c] sm:$0xf]
        %v4604 = vld [vmem:[%s5 + $0x50] sm:$0xf]
        %v4605 = vld [vmem:[%s5 + $0x54] sm:$0xf]
        %v4606 = vld [vmem:[%s5 + $0x58] sm:$0xf]
        %v4607 = vld [vmem:[%s5 + $0x5c] sm:$0xf]
        %v4608 = vld [vmem:[%s5 + $0x60] sm:$0xf]
        %v4609 = vld [vmem:[%s5 + $0x64] sm:$0xf]
        %v4610 = vld [vmem:[%s5 + $0x68] sm:$0xf]
        %v4611 = vld [vmem:[%s5 + $0x6c] sm:$0xf]
        %v4612 = vld [vmem:[%s5 + $0x70] sm:$0xf]
        %v4613 = vld [vmem:[%s5 + $0x74] sm:$0xf]
        %v4614 = vld [vmem:[%s5 + $0x78] sm:$0xf]
        %v4615 = vld [vmem:[%s5 + $0x7c] sm:$0xf]
        %v4616 = vld [vmem:[%s5 + $0x80] sm:$0xf]
        %v4617 = vld [vmem:[%s5 + $0x84] sm:$0xf]
        %v4618 = vld [vmem:[%s5 + $0x88] sm:$0xf]
        %v4619 = vld [vmem:[%s5 + $0x8c] sm:$0xf]
        %v4620 = vld [vmem:[%s5 + $0x90] sm:$0xf]
        %v4621 = vld [vmem:[%s5 + $0x94] sm:$0xf]
        %v4622 = vld [vmem:[%s5 + $0x98] sm:$0xf]
        %v4623 = vld [vmem:[%s5 + $0x9c] sm:$0xf]
        %v4624 = vld [vmem:[%s5 + $0xa0] sm:$0xf]
        %v4625 = vld [vmem:[%s5 + $0xa4] sm:$0xf]
        %v4626 = vld [vmem:[%s5 + $0xa8] sm:$0xf]
        %v4627 = vld [vmem:[%s5 + $0xac] sm:$0xf]
        %v4628 = vld [vmem:[%s5 + $0xb0] sm:$0xf]
        %v4629 = vld [vmem:[%s5 + $0xb4] sm:$0xf]
        %v4630 = vld [vmem:[%s5 + $0xb8] sm:$0xf]
        %v4631 = vld [vmem:[%s5 + $0xbc] sm:$0xf]
        %v4632 = vld [vmem:[%s5 + $0xc0] sm:$0xf]
        %v4633 = vld [vmem:[%s5 + $0xc4] sm:$0xf]
        %v4634 = vld [vmem:[%s5 + $0xc8] sm:$0xf]
        %v4635 = vld [vmem:[%s5 + $0xcc] sm:$0xf]
        %v4636 = vld [vmem:[%s5 + $0xd0] sm:$0xf]
        %v4637 = vld [vmem:[%s5 + $0xd4] sm:$0xf]
        %v4638 = vld [vmem:[%s5 + $0xd8] sm:$0xf]
        %v4639 = vld [vmem:[%s5 + $0xdc] sm:$0xf]
        %v4640 = vld [vmem:[%s5 + $0xe0] sm:$0xf]
        %v4641 = vld [vmem:[%s5 + $0xe4] sm:$0xf]
        %v4642 = vld [vmem:[%s5 + $0xe8] sm:$0xf]
        %v4643 = vld [vmem:[%s5 + $0xec] sm:$0xf]
        %v4644 = vld [vmem:[%s5 + $0xf0] sm:$0xf]
        %v4645 = vld [vmem:[%s5 + $0xf4] sm:$0xf]
        %v4646 = vld [vmem:[%s5 + $0xf8] sm:$0xf]
        %v4647 = vld [vmem:[%s5 + $0xfc] sm:$0xf]
        %v4648 = vld [vmem:[%s5 + $0x100] sm:$0xf]
        %v4649 = vld [vmem:[%s5 + $0x104] sm:$0xf]
        %v4650 = vld [vmem:[%s5 + $0x108] sm:$0xf]
        %v4651 = vld [vmem:[%s5 + $0x10c] sm:$0xf]
        %v4652 = vld [vmem:[%s5 + $0x110] sm:$0xf]
        %v4653 = vld [vmem:[%s5 + $0x114] sm:$0xf]
        %v4654 = vld [vmem:[%s5 + $0x118] sm:$0xf]
        %v4655 = vld [vmem:[%s5 + $0x11c] sm:$0xf]
        %v4656 = vld [vmem:[%s5 + $0x120] sm:$0xf]
        %v4657 = vld [vmem:[%s5 + $0x124] sm:$0xf]
        %v4658 = vld [vmem:[%s5 + $0x128] sm:$0xf]
        %v4659 = vld [vmem:[%s5 + $0x12c] sm:$0xf]
        %v4660 = vld [vmem:[%s5 + $0x130] sm:$0xf]
        %v4661 = vld [vmem:[%s5 + $0x134] sm:$0xf]
        %v4662 = vld [vmem:[%s5 + $0x138] sm:$0xf]
        %v4663 = vld [vmem:[%s5 + $0x13c] sm:$0xf]
        %v4664 = vld [vmem:[%s5 + $0x140] sm:$0xf]
        %v4665 = vld [vmem:[%s5 + $0x144] sm:$0xf]
        %v4666 = vld [vmem:[%s5 + $0x148] sm:$0xf]
        %v4667 = vld [vmem:[%s5 + $0x14c] sm:$0xf]
        %v4668 = vld [vmem:[%s5 + $0x150] sm:$0xf]
        %v4669 = vld [vmem:[%s5 + $0x154] sm:$0xf]
        %v4670 = vld [vmem:[%s5 + $0x158] sm:$0xf]
        %v4671 = vld [vmem:[%s5 + $0x15c] sm:$0xf]
        %v4672 = vld [vmem:[%s5 + $0x160] sm:$0xf]
        %v4673 = vld [vmem:[%s5 + $0x164] sm:$0xf]
        %v4674 = vld [vmem:[%s5 + $0x168] sm:$0xf]
        %v4675 = vld [vmem:[%s5 + $0x16c] sm:$0xf]
        %v4676 = vld [vmem:[%s5 + $0x170] sm:$0xf]
        %v4677 = vld [vmem:[%s5 + $0x174] sm:$0xf]
        %v4678 = vld [vmem:[%s5 + $0x178] sm:$0xf]
        %v4679 = vld [vmem:[%s5 + $0x17c] sm:$0xf]
        %v4680 = vld [vmem:[%s5 + $0x180] sm:$0xf]
        %v4681 = vld [vmem:[%s5 + $0x184] sm:$0xf]
        %v4682 = vld [vmem:[%s5 + $0x188] sm:$0xf]
        %v4683 = vld [vmem:[%s5 + $0x18c] sm:$0xf]
        %v4684 = vld [vmem:[%s5 + $0x190] sm:$0xf]
        %v4685 = vld [vmem:[%s5 + $0x194] sm:$0xf]
        %v4686 = vld [vmem:[%s5 + $0x198] sm:$0xf]
        %v4687 = vld [vmem:[%s5 + $0x19c] sm:$0xf]
        %v4688 = vld [vmem:[%s5 + $0x1a0] sm:$0xf]
        %v4689 = vld [vmem:[%s5 + $0x1a4] sm:$0xf]
        %v4690 = vld [vmem:[%s5 + $0x1a8] sm:$0xf]
        %v4691 = vld [vmem:[%s5 + $0x1ac] sm:$0xf]
        %v4692 = vld [vmem:[%s5 + $0x1b0] sm:$0xf]
        %v4693 = vld [vmem:[%s5 + $0x1b4] sm:$0xf]
        %v4694 = vld [vmem:[%s5 + $0x1b8] sm:$0xf]
        %v4695 = vld [vmem:[%s5 + $0x1bc] sm:$0xf]
        %v4696 = vld [vmem:[%s5 + $0x1c0] sm:$0xf]
        %v4697 = vld [vmem:[%s5 + $0x1c4] sm:$0xf]
        %v4698 = vld [vmem:[%s5 + $0x1c8] sm:$0xf]
        %v4699 = vld [vmem:[%s5 + $0x1cc] sm:$0xf]
        %v4700 = vld [vmem:[%s5 + $0x1d0] sm:$0xf]
        %v4701 = vld [vmem:[%s5 + $0x1d4] sm:$0xf]
        %v4702 = vld [vmem:[%s5 + $0x1d8] sm:$0xf]
        %v4703 = vld [vmem:[%s5 + $0x1dc] sm:$0xf]
        %v4704 = vld [vmem:[%s5 + $0x1e0] sm:$0xf]
        %v4705 = vld [vmem:[%s5 + $0x1e4] sm:$0xf]
        %v4706 = vld [vmem:[%s5 + $0x1e8] sm:$0xf]
        %v4707 = vld [vmem:[%s5 + $0x1ec] sm:$0xf]
        %v4708 = vld [vmem:[%s5 + $0x1f0] sm:$0xf]
        %v4709 = vld [vmem:[%s5 + $0x1f4] sm:$0xf]
        %v4710 = vld [vmem:[%s5 + $0x1f8] sm:$0xf]
        %v4711 = vld [vmem:[%s5 + $0x1fc] sm:$0xf]
        %v4712 = vld [vmem:[%s6] sm:$0x1]
        %v4714 = vlaneseq
        %v4715 = vshrl.u32 %v4714, 7
        %v4716 = vsub.s32 0, %v4715
        %v4717 = vrot.slane %v4712, %v4716
        %v4847 = vunpack.c.l.b16 %v4584
        %v4848 = vunpack.c.l.b16 %v4585
        %v4849 = vunpack.c.l.b16 %v4586
        %v4850 = vunpack.c.l.b16 %v4587
        %v4851 = vunpack.c.l.b16 %v4588
        %v4852 = vunpack.c.l.b16 %v4589
        %v4853 = vunpack.c.l.b16 %v4590
        %v4854 = vunpack.c.l.b16 %v4591
        %v4855 = vunpack.c.l.b16 %v4592
        %v4856 = vunpack.c.l.b16 %v4593
        %v4857 = vunpack.c.l.b16 %v4594
        %v4858 = vunpack.c.l.b16 %v4595
        %v4859 = vunpack.c.l.b16 %v4596
        %v4860 = vunpack.c.l.b16 %v4597
        %v4861 = vunpack.c.l.b16 %v4598
        %v4862 = vunpack.c.l.b16 %v4599
        %v4863 = vunpack.c.l.b16 %v4600
        %v4864 = vunpack.c.l.b16 %v4601
        %v4865 = vunpack.c.l.b16 %v4602
        %v4866 = vunpack.c.l.b16 %v4603
        %v4867 = vunpack.c.l.b16 %v4604
        %v4868 = vunpack.c.l.b16 %v4605
        %v4869 = vunpack.c.l.b16 %v4606
        %v4870 = vunpack.c.l.b16 %v4607
        %v4871 = vunpack.c.l.b16 %v4608
        %v4872 = vunpack.c.l.b16 %v4609
        %v4873 = vunpack.c.l.b16 %v4610
        %v4874 = vunpack.c.l.b16 %v4611
        %v4875 = vunpack.c.l.b16 %v4612
        %v4876 = vunpack.c.l.b16 %v4613
        %v4877 = vunpack.c.l.b16 %v4614
        %v4878 = vunpack.c.l.b16 %v4615
        %v4879 = vunpack.c.l.b16 %v4616
        %v4880 = vunpack.c.l.b16 %v4617
        %v4881 = vunpack.c.l.b16 %v4618
        %v4882 = vunpack.c.l.b16 %v4619
        %v4883 = vunpack.c.l.b16 %v4620
        %v4884 = vunpack.c.l.b16 %v4621
        %v4885 = vunpack.c.l.b16 %v4622
        %v4886 = vunpack.c.l.b16 %v4623
        %v4887 = vunpack.c.l.b16 %v4624
        %v4888 = vunpack.c.l.b16 %v4625
        %v4889 = vunpack.c.l.b16 %v4626
        %v4890 = vunpack.c.l.b16 %v4627
        %v4891 = vunpack.c.l.b16 %v4628
        %v4892 = vunpack.c.l.b16 %v4629
        %v4893 = vunpack.c.l.b16 %v4630
        %v4894 = vunpack.c.l.b16 %v4631
        %v4895 = vunpack.c.l.b16 %v4632
        %v4896 = vunpack.c.l.b16 %v4633
        %v4897 = vunpack.c.l.b16 %v4634
        %v4898 = vunpack.c.l.b16 %v4635
        %v4899 = vunpack.c.l.b16 %v4636
        %v4900 = vunpack.c.l.b16 %v4637
        %v4901 = vunpack.c.l.b16 %v4638
        %v4902 = vunpack.c.l.b16 %v4639
        %v4903 = vunpack.c.l.b16 %v4640
        %v4904 = vunpack.c.l.b16 %v4641
        %v4905 = vunpack.c.l.b16 %v4642
        %v4906 = vunpack.c.l.b16 %v4643
        %v4907 = vunpack.c.l.b16 %v4644
        %v4908 = vunpack.c.l.b16 %v4645
        %v4909 = vunpack.c.l.b16 %v4646
        %v4910 = vunpack.c.l.b16 %v4647
        %v4911 = vunpack.c.l.b16 %v4648
        %v4912 = vunpack.c.l.b16 %v4649
        %v4913 = vunpack.c.l.b16 %v4650
        %v4914 = vunpack.c.l.b16 %v4651
        %v4915 = vunpack.c.l.b16 %v4652
        %v4916 = vunpack.c.l.b16 %v4653
        %v4917 = vunpack.c.l.b16 %v4654
        %v4918 = vunpack.c.l.b16 %v4655
        %v4919 = vunpack.c.l.b16 %v4656
        %v4920 = vunpack.c.l.b16 %v4657
        %v4921 = vunpack.c.l.b16 %v4658
        %v4922 = vunpack.c.l.b16 %v4659
        %v4923 = vunpack.c.l.b16 %v4660
        %v4924 = vunpack.c.l.b16 %v4661
        %v4925 = vunpack.c.l.b16 %v4662
        %v4926 = vunpack.c.l.b16 %v4663
        %v4927 = vunpack.c.l.b16 %v4664
        %v4928 = vunpack.c.l.b16 %v4665
        %v4929 = vunpack.c.l.b16 %v4666
        %v4930 = vunpack.c.l.b16 %v4667
        %v4931 = vunpack.c.l.b16 %v4668
        %v4932 = vunpack.c.l.b16 %v4669
        %v4933 = vunpack.c.l.b16 %v4670
        %v4934 = vunpack.c.l.b16 %v4671
        %v4935 = vunpack.c.l.b16 %v4672
        %v4936 = vunpack.c.l.b16 %v4673
        %v4937 = vunpack.c.l.b16 %v4674
        %v4938 = vunpack.c.l.b16 %v4675
        %v4939 = vunpack.c.l.b16 %v4676
        %v4940 = vunpack.c.l.b16 %v4677
        %v4941 = vunpack.c.l.b16 %v4678
        %v4942 = vunpack.c.l.b16 %v4679
        %v4943 = vunpack.c.l.b16 %v4680
        %v4944 = vunpack.c.l.b16 %v4681
        %v4945 = vunpack.c.l.b16 %v4682
        %v4946 = vunpack.c.l.b16 %v4683
        %v4947 = vunpack.c.l.b16 %v4684
        %v4948 = vunpack.c.l.b16 %v4685
        %v4949 = vunpack.c.l.b16 %v4686
        %v4950 = vunpack.c.l.b16 %v4687
        %v4951 = vunpack.c.l.b16 %v4688
        %v4952 = vunpack.c.l.b16 %v4689
        %v4953 = vunpack.c.l.b16 %v4690
        %v4954 = vunpack.c.l.b16 %v4691
        %v4955 = vunpack.c.l.b16 %v4692
        %v4956 = vunpack.c.l.b16 %v4693
        %v4957 = vunpack.c.l.b16 %v4694
        %v4958 = vunpack.c.l.b16 %v4695
        %v4959 = vunpack.c.l.b16 %v4696
        %v4960 = vunpack.c.l.b16 %v4697
        %v4961 = vunpack.c.l.b16 %v4698
        %v4962 = vunpack.c.l.b16 %v4699
        %v4963 = vunpack.c.l.b16 %v4700
        %v4964 = vunpack.c.l.b16 %v4701
        %v4965 = vunpack.c.l.b16 %v4702
        %v4966 = vunpack.c.l.b16 %v4703
        %v4967 = vunpack.c.l.b16 %v4704
        %v4968 = vunpack.c.l.b16 %v4705
        %v4969 = vunpack.c.l.b16 %v4706
        %v4970 = vunpack.c.l.b16 %v4707
        %v4971 = vunpack.c.l.b16 %v4708
        %v4972 = vunpack.c.l.b16 %v4709
        %v4973 = vunpack.c.l.b16 %v4710
        %v4974 = vunpack.c.l.b16 %v4711
        %v4975 = vpack.c.b16 %v4848, %v4847
        %v4976 = vpack.c.b16 %v4850, %v4849
        %v4977 = vpack.c.b16 %v4852, %v4851
        %v4978 = vpack.c.b16 %v4854, %v4853
        %v4979 = vpack.c.b16 %v4856, %v4855
        %v4980 = vpack.c.b16 %v4858, %v4857
        %v4981 = vpack.c.b16 %v4860, %v4859
        %v4982 = vpack.c.b16 %v4862, %v4861
        %v4983 = vpack.c.b16 %v4864, %v4863
        %v4984 = vpack.c.b16 %v4866, %v4865
        %v4985 = vpack.c.b16 %v4868, %v4867
        %v4986 = vpack.c.b16 %v4870, %v4869
        %v4987 = vpack.c.b16 %v4872, %v4871
        %v4988 = vpack.c.b16 %v4874, %v4873
        %v4989 = vpack.c.b16 %v4876, %v4875
        %v4990 = vpack.c.b16 %v4878, %v4877
        %v4991 = vpack.c.b16 %v4880, %v4879
        %v4992 = vpack.c.b16 %v4882, %v4881
        %v4993 = vpack.c.b16 %v4884, %v4883
        %v4994 = vpack.c.b16 %v4886, %v4885
        %v4995 = vpack.c.b16 %v4888, %v4887
        %v4996 = vpack.c.b16 %v4890, %v4889
        %v4997 = vpack.c.b16 %v4892, %v4891
        %v4998 = vpack.c.b16 %v4894, %v4893
        %v4999 = vpack.c.b16 %v4896, %v4895
        %v5000 = vpack.c.b16 %v4898, %v4897
        %v5001 = vpack.c.b16 %v4900, %v4899
        %v5002 = vpack.c.b16 %v4902, %v4901
        %v5003 = vpack.c.b16 %v4904, %v4903
        %v5004 = vpack.c.b16 %v4906, %v4905
        %v5005 = vpack.c.b16 %v4908, %v4907
        %v5006 = vpack.c.b16 %v4910, %v4909
        %v5007 = vpack.c.b16 %v4912, %v4911
        %v5008 = vpack.c.b16 %v4914, %v4913
        %v5009 = vpack.c.b16 %v4916, %v4915
        %v5010 = vpack.c.b16 %v4918, %v4917
        %v5011 = vpack.c.b16 %v4920, %v4919
        %v5012 = vpack.c.b16 %v4922, %v4921
        %v5013 = vpack.c.b16 %v4924, %v4923
        %v5014 = vpack.c.b16 %v4926, %v4925
        %v5015 = vpack.c.b16 %v4928, %v4927
        %v5016 = vpack.c.b16 %v4930, %v4929
        %v5017 = vpack.c.b16 %v4932, %v4931
        %v5018 = vpack.c.b16 %v4934, %v4933
        %v5019 = vpack.c.b16 %v4936, %v4935
        %v5020 = vpack.c.b16 %v4938, %v4937
        %v5021 = vpack.c.b16 %v4940, %v4939
        %v5022 = vpack.c.b16 %v4942, %v4941
        %v5023 = vpack.c.b16 %v4944, %v4943
        %v5024 = vpack.c.b16 %v4946, %v4945
        %v5025 = vpack.c.b16 %v4948, %v4947
        %v5026 = vpack.c.b16 %v4950, %v4949
        %v5027 = vpack.c.b16 %v4952, %v4951
        %v5028 = vpack.c.b16 %v4954, %v4953
        %v5029 = vpack.c.b16 %v4956, %v4955
        %v5030 = vpack.c.b16 %v4958, %v4957
        %v5031 = vpack.c.b16 %v4960, %v4959
        %v5032 = vpack.c.b16 %v4962, %v4961
        %v5033 = vpack.c.b16 %v4964, %v4963
        %v5034 = vpack.c.b16 %v4966, %v4965
        %v5035 = vpack.c.b16 %v4968, %v4967
        %v5036 = vpack.c.b16 %v4970, %v4969
        %v5037 = vpack.c.b16 %v4972, %v4971
        %v5038 = vpack.c.b16 %v4974, %v4973
        %5103 = vmatprep.subr.bf16.mxu0 0
        %5104 = vmatpush1.bf16.msra.mxu0 %v4975
        %5105 = vmatprep.subr.bf16.mxu0 0
        %5106 = vmatpush1.bf16.msra.mxu0 %v4976
        %5107 = vmatprep.subr.bf16.mxu0 0
        %5108 = vmatpush1.bf16.msra.mxu0 %v4977
        %5109 = vmatprep.subr.bf16.mxu0 0
        %5110 = vmatpush1.bf16.msra.mxu0 %v4978
        %5111 = vmatprep.subr.bf16.mxu0 0
        %5112 = vmatpush1.bf16.msra.mxu0 %v4979
        %5113 = vmatprep.subr.bf16.mxu0 0
        %5114 = vmatpush1.bf16.msra.mxu0 %v4980
        %5115 = vmatprep.subr.bf16.mxu0 0
        %5116 = vmatpush1.bf16.msra.mxu0 %v4981
        %5117 = vmatprep.subr.bf16.mxu0 0
        %5118 = vmatpush1.bf16.msra.mxu0 %v4982
        %5119 = vmatprep.subr.bf16.mxu0 0
        %5120 = vmatpush1.bf16.msra.mxu0 %v4983
        %5121 = vmatprep.subr.bf16.mxu0 0
        %5122 = vmatpush1.bf16.msra.mxu0 %v4984
        %5123 = vmatprep.subr.bf16.mxu0 0
        %5124 = vmatpush1.bf16.msra.mxu0 %v4985
        %5125 = vmatprep.subr.bf16.mxu0 0
        %5126 = vmatpush1.bf16.msra.mxu0 %v4986
        %5127 = vmatprep.subr.bf16.mxu0 0
        %5128 = vmatpush1.bf16.msra.mxu0 %v4987
        %5129 = vmatprep.subr.bf16.mxu0 0
        %5130 = vmatpush1.bf16.msra.mxu0 %v4988
        %5131 = vmatprep.subr.bf16.mxu0 0
        %5132 = vmatpush1.bf16.msra.mxu0 %v4989
        %5133 = vmatprep.subr.bf16.mxu0 0
        %5134 = vmatpush1.bf16.msra.mxu0 %v4990
        %5135 = vmatprep.mubr.bf16.mxu0 %v4577
        %5136 = vmatmul.mubr.bf16.gmra.mrb[0].mxu0 %v4576
        %v5137 = vpop.f32.mrb[0].mxu0
        %v5138 = vadd.f32 %v4717, %v5137
        %v5139 = vpop.f32.mrb[0].mxu0
        %v5140 = vpop.f32.mrb[0].mxu0
        %v5141 = vpop.f32.mrb[0].mxu0
        %5142 = vdwg.mxu0
        %5143 = vmatprep.subr.bf16.mxu0 0
        %5144 = vmatpush1.bf16.msra.mxu0 %v4991
        %5145 = vmatprep.subr.bf16.mxu0 0
        %5146 = vmatpush1.bf16.msra.mxu0 %v4992
        %5147 = vmatprep.subr.bf16.mxu0 0
        %5148 = vmatpush1.bf16.msra.mxu0 %v4993
        %5149 = vmatprep.subr.bf16.mxu0 0
        %5150 = vmatpush1.bf16.msra.mxu0 %v4994
        %5151 = vmatprep.subr.bf16.mxu0 0
        %5152 = vmatpush1.bf16.msra.mxu0 %v4995
        %5153 = vmatprep.subr.bf16.mxu0 0
        %5154 = vmatpush1.bf16.msra.mxu0 %v4996
        %5155 = vmatprep.subr.bf16.mxu0 0
        %5156 = vmatpush1.bf16.msra.mxu0 %v4997
        %5157 = vmatprep.subr.bf16.mxu0 0
        %5158 = vmatpush1.bf16.msra.mxu0 %v4998
        %5159 = vmatprep.subr.bf16.mxu0 0
        %5160 = vmatpush1.bf16.msra.mxu0 %v4999
        %5161 = vmatprep.subr.bf16.mxu0 0
        %5162 = vmatpush1.bf16.msra.mxu0 %v5000
        %5163 = vmatprep.subr.bf16.mxu0 0
        %5164 = vmatpush1.bf16.msra.mxu0 %v5001
        %5165 = vmatprep.subr.bf16.mxu0 0
        %5166 = vmatpush1.bf16.msra.mxu0 %v5002
        %5167 = vmatprep.subr.bf16.mxu0 0
        %5168 = vmatpush1.bf16.msra.mxu0 %v5003
        %5169 = vmatprep.subr.bf16.mxu0 0
        %5170 = vmatpush1.bf16.msra.mxu0 %v5004
        %5171 = vmatprep.subr.bf16.mxu0 0
        %5172 = vmatpush1.bf16.msra.mxu0 %v5005
        %5173 = vmatprep.subr.bf16.mxu0 0
        %5174 = vmatpush1.bf16.msra.mxu0 %v5006
        %5175 = vmatprep.mubr.bf16.mxu0 %v4579
        %5176 = vmatmul.mubr.bf16.gmra.mrb[0].mxu0 %v4578
        %v5177 = vpop.f32.mrb[0].mxu0
        %v5178 = vadd.f32 %v5138, %v5177
        %v5179 = vpop.f32.mrb[0].mxu0
        %v5180 = vpop.f32.mrb[0].mxu0
        %v5181 = vpop.f32.mrb[0].mxu0
        %5182 = vdwg.mxu0
        %5183 = vmatprep.subr.bf16.mxu0 0
        %5184 = vmatpush1.bf16.msra.mxu0 %v5007
        %5185 = vmatprep.subr.bf16.mxu0 0
        %5186 = vmatpush1.bf16.msra.mxu0 %v5008
        %5187 = vmatprep.subr.bf16.mxu0 0
        %5188 = vmatpush1.bf16.msra.mxu0 %v5009
        %5189 = vmatprep.subr.bf16.mxu0 0
        %5190 = vmatpush1.bf16.msra.mxu0 %v5010
        %5191 = vmatprep.subr.bf16.mxu0 0
        %5192 = vmatpush1.bf16.msra.mxu0 %v5011
        %5193 = vmatprep.subr.bf16.mxu0 0
        %5194 = vmatpush1.bf16.msra.mxu0 %v5012
        %5195 = vmatprep.subr.bf16.mxu0 0
        %5196 = vmatpush1.bf16.msra.mxu0 %v5013
        %5197 = vmatprep.subr.bf16.mxu0 0
        %5198 = vmatpush1.bf16.msra.mxu0 %v5014
        %5199 = vmatprep.subr.bf16.mxu0 0
        %5200 = vmatpush1.bf16.msra.mxu0 %v5015
        %5201 = vmatprep.subr.bf16.mxu0 0
        %5202 = vmatpush1.bf16.msra.mxu0 %v5016
        %5203 = vmatprep.subr.bf16.mxu0 0
        %5204 = vmatpush1.bf16.msra.mxu0 %v5017
        %5205 = vmatprep.subr.bf16.mxu0 0
        %5206 = vmatpush1.bf16.msra.mxu0 %v5018
        %5207 = vmatprep.subr.bf16.mxu0 0
        %5208 = vmatpush1.bf16.msra.mxu0 %v5019
        %5209 = vmatprep.subr.bf16.mxu0 0
        %5210 = vmatpush1.bf16.msra.mxu0 %v5020
        %5211 = vmatprep.subr.bf16.mxu0 0
        %5212 = vmatpush1.bf16.msra.mxu0 %v5021
        %5213 = vmatprep.subr.bf16.mxu0 0
        %5214 = vmatpush1.bf16.msra.mxu0 %v5022
        %5215 = vmatprep.mubr.bf16.mxu0 %v4581
        %5216 = vmatmul.mubr.bf16.gmra.mrb[0].mxu0 %v4580
        %v5217 = vpop.f32.mrb[0].mxu0
        %v5218 = vadd.f32 %v5178, %v5217
        %v5219 = vpop.f32.mrb[0].mxu0
        %v5220 = vpop.f32.mrb[0].mxu0
        %v5221 = vpop.f32.mrb[0].mxu0
        %5222 = vdwg.mxu0
        %5223 = vmatprep.subr.bf16.mxu0 0
        %5224 = vmatpush1.bf16.msra.mxu0 %v5023
        %5225 = vmatprep.subr.bf16.mxu0 0
        %5226 = vmatpush1.bf16.msra.mxu0 %v5024
        %5227 = vmatprep.subr.bf16.mxu0 0
        %5228 = vmatpush1.bf16.msra.mxu0 %v5025
        %5229 = vmatprep.subr.bf16.mxu0 0
        %5230 = vmatpush1.bf16.msra.mxu0 %v5026
        %5231 = vmatprep.subr.bf16.mxu0 0
        %5232 = vmatpush1.bf16.msra.mxu0 %v5027
        %5233 = vmatprep.subr.bf16.mxu0 0
        %5234 = vmatpush1.bf16.msra.mxu0 %v5028
        %5235 = vmatprep.subr.bf16.mxu0 0
        %5236 = vmatpush1.bf16.msra.mxu0 %v5029
        %5237 = vmatprep.subr.bf16.mxu0 0
        %5238 = vmatpush1.bf16.msra.mxu0 %v5030
        %5239 = vmatprep.subr.bf16.mxu0 0
        %5240 = vmatpush1.bf16.msra.mxu0 %v5031
        %5241 = vmatprep.subr.bf16.mxu0 0
        %5242 = vmatpush1.bf16.msra.mxu0 %v5032
        %5243 = vmatprep.subr.bf16.mxu0 0
        %5244 = vmatpush1.bf16.msra.mxu0 %v5033
        %5245 = vmatprep.subr.bf16.mxu0 0
        %5246 = vmatpush1.bf16.msra.mxu0 %v5034
        %5247 = vmatprep.subr.bf16.mxu0 0
        %5248 = vmatpush1.bf16.msra.mxu0 %v5035
        %5249 = vmatprep.subr.bf16.mxu0 0
        %5250 = vmatpush1.bf16.msra.mxu0 %v5036
        %5251 = vmatprep.subr.bf16.mxu0 0
        %5252 = vmatpush1.bf16.msra.mxu0 %v5037
        %5253 = vmatprep.subr.bf16.mxu0 0
        %5254 = vmatpush1.bf16.msra.mxu0 %v5038
        %5255 = vmatprep.mubr.bf16.mxu0 %v4583
        %5256 = vmatmul.mubr.bf16.gmra.mrb[0].mxu0 %v4582
        %v5257 = vpop.f32.mrb[0].mxu0
        %v5258 = vadd.f32 %v5218, %v5257
        %v5259 = vpop.f32.mrb[0].mxu0
        %v5260 = vpop.f32.mrb[0].mxu0
        %v5261 = vpop.f32.mrb[0].mxu0
        %5262 = vdwg.mxu0
        %v5263 = vmax.f32 %v5258, 0.0
        %v5264 = vpack.c.bf16 %v5263, %v5263
        %v5265 = vld [vmem:[#allocation6] sm:$0xf]
        %v5266 = vld [vmem:[#allocation6 + $0x4] sm:$0xf]
        %v5267 = vld [vmem:[#allocation6 + $0x8] sm:$0xf]
        %v5268 = vld [vmem:[#allocation6 + $0xc] sm:$0xf]
        %v5269 = vld [vmem:[#allocation6 + $0x10] sm:$0xf]
        %v5270 = vld [vmem:[#allocation6 + $0x14] sm:$0xf]
        %v5271 = vld [vmem:[#allocation6 + $0x18] sm:$0xf]
        %v5272 = vld [vmem:[#allocation6 + $0x1c] sm:$0xf]
        %v5273 = vld [vmem:[#allocation6 + $0x20] sm:$0xf]
        %v5274 = vld [vmem:[#allocation6 + $0x24] sm:$0xf]
        %v5275 = vld [vmem:[#allocation6 + $0x28] sm:$0xf]
        %v5276 = vld [vmem:[#allocation6 + $0x2c] sm:$0xf]
        %v5277 = vld [vmem:[#allocation6 + $0x30] sm:$0xf]
        %v5278 = vld [vmem:[#allocation6 + $0x34] sm:$0xf]
        %v5279 = vld [vmem:[#allocation6 + $0x38] sm:$0xf]
        %v5280 = vld [vmem:[#allocation6 + $0x3c] sm:$0xf]
        %v5281 = vld [vmem:[%s8] sm:$0x1]
        %v5283 = vlaneseq
        %v5284 = vshrl.u32 %v5283, 7
        %v5285 = vsub.s32 0, %v5284
        %v5286 = vrot.slane %v5281, %v5285
        %v5304 = vunpack.c.l.b16 %v5265
        %v5305 = vunpack.c.l.b16 %v5266
        %v5306 = vunpack.c.l.b16 %v5267
        %v5307 = vunpack.c.l.b16 %v5268
        %v5308 = vunpack.c.l.b16 %v5269
        %v5309 = vunpack.c.l.b16 %v5270
        %v5310 = vunpack.c.l.b16 %v5271
        %v5311 = vunpack.c.l.b16 %v5272
        %v5312 = vunpack.c.l.b16 %v5273
        %v5313 = vunpack.c.l.b16 %v5274
        %v5314 = vunpack.c.l.b16 %v5275
        %v5315 = vunpack.c.l.b16 %v5276
        %v5316 = vunpack.c.l.b16 %v5277
        %v5317 = vunpack.c.l.b16 %v5278
        %v5318 = vunpack.c.l.b16 %v5279
        %v5319 = vunpack.c.l.b16 %v5280
        %v5320 = vpack.c.b16 %v5305, %v5304
        %v5321 = vpack.c.b16 %v5307, %v5306
        %v5322 = vpack.c.b16 %v5309, %v5308
        %v5323 = vpack.c.b16 %v5311, %v5310
        %v5324 = vpack.c.b16 %v5313, %v5312
        %v5325 = vpack.c.b16 %v5315, %v5314
        %v5326 = vpack.c.b16 %v5317, %v5316
        %v5327 = vpack.c.b16 %v5319, %v5318
        %5336 = vmatprep.subr.bf16.mxu0 0
        %5337 = vmatpush1.bf16.msra.mxu0 %v5320
        %5338 = vmatprep.subr.bf16.mxu0 0
        %5339 = vmatpush1.bf16.msra.mxu0 %v5321
        %5340 = vmatprep.subr.bf16.mxu0 0
        %5341 = vmatpush1.bf16.msra.mxu0 %v5322
        %5342 = vmatprep.subr.bf16.mxu0 0
        %5343 = vmatpush1.bf16.msra.mxu0 %v5323
        %5344 = vmatprep.subr.bf16.mxu0 0
        %5345 = vmatpush1.bf16.msra.mxu0 %v5324
        %5346 = vmatprep.subr.bf16.mxu0 0
        %5347 = vmatpush1.bf16.msra.mxu0 %v5325
        %5348 = vmatprep.subr.bf16.mxu0 0
        %5349 = vmatpush1.bf16.msra.mxu0 %v5326
        %5350 = vmatprep.subr.bf16.mxu0 0
        %5351 = vmatpush1.bf16.msra.mxu0 %v5327
        %5352 = vmatprep.subr.bf16.mxu0 0
        %5353 = vmatpush1.bf16.msra.mxu0 0
        %5354 = vmatprep.subr.bf16.mxu0 0
        %5355 = vmatpush1.bf16.msra.mxu0 0
        %5356 = vmatprep.subr.bf16.mxu0 0
        %5357 = vmatpush1.bf16.msra.mxu0 0
        %5358 = vmatprep.subr.bf16.mxu0 0
        %5359 = vmatpush1.bf16.msra.mxu0 0
        %5360 = vmatprep.subr.bf16.mxu0 0
        %5361 = vmatpush1.bf16.msra.mxu0 0
        %5362 = vmatprep.subr.bf16.mxu0 0
        %5363 = vmatpush1.bf16.msra.mxu0 0
        %5364 = vmatprep.subr.bf16.mxu0 0
        %5365 = vmatpush1.bf16.msra.mxu0 0
        %5366 = vmatprep.subr.bf16.mxu0 0
        %5367 = vmatpush1.bf16.msra.mxu0 0
        %5368 = vmatprep.mubr.bf16.mxu0 0
        %5369 = vmatmul.mubr.bf16.gmra.mrb[0].mxu0 %v5264
        %v5370 = vpop.f32.mrb[0].mxu0
        %v5371 = vadd.f32 %v5286, %v5370
        %v5372 = vpop.f32.mrb[0].mxu0
        %v5373 = vpop.f32.mrb[0].mxu0
        %v5374 = vpop.f32.mrb[0].mxu0
        %5375 = vdwg.mxu0
        %v5376 = vmax.f32 %v5371, 0.0
        %v5377 = vpack.c.bf16 %v5376, %v5376
        %v5378 = vld [vmem:[#allocation7] sm:$0xf]
        %v5379 = vld [vmem:[#allocation7 + $0x4] sm:$0xf]
        %v5380 = vld [vmem:[#allocation7 + $0x8] sm:$0xf]
        %v5381 = vld [vmem:[#allocation7 + $0xc] sm:$0xf]
        %v5382 = vld [vmem:[#allocation7 + $0x10] sm:$0xf]
        %v5383 = vld [vmem:[#allocation7 + $0x14] sm:$0xf]
        %v5384 = vld [vmem:[#allocation7 + $0x18] sm:$0xf]
        %v5385 = vld [vmem:[#allocation7 + $0x1c] sm:$0xf]
        %v5386 = vld [vmem:[#allocation7 + $0x20] sm:$0xf]
        %v5387 = vld [vmem:[#allocation7 + $0x24] sm:$0xf]
        %v5388 = vld [vmem:[#allocation7 + $0x28] sm:$0xf]
        %v5389 = vld [vmem:[#allocation7 + $0x2c] sm:$0xf]
        %v5390 = vld [vmem:[#allocation7 + $0x30] sm:$0xf]
        %v5391 = vld [vmem:[#allocation7 + $0x34] sm:$0xf]
        %v5392 = vld [vmem:[#allocation7 + $0x38] sm:$0xf]
        %v5393 = vld [vmem:[#allocation7 + $0x3c] sm:$0xf]
        %v5394 = vld [vmem:[%s10] sm:$0x1]
        %v5396 = vlaneseq
        %v5397 = vshrl.u32 %v5396, 7
        %v5398 = vsub.s32 0, %v5397
        %v5399 = vrot.slane %v5394, %v5398
        %v5417 = vunpack.c.l.b16 %v5378
        %v5418 = vunpack.c.l.b16 %v5379
        %v5419 = vunpack.c.l.b16 %v5380
        %v5420 = vunpack.c.l.b16 %v5381
        %v5421 = vunpack.c.l.b16 %v5382
        %v5422 = vunpack.c.l.b16 %v5383
        %v5423 = vunpack.c.l.b16 %v5384
        %v5424 = vunpack.c.l.b16 %v5385
        %v5425 = vunpack.c.l.b16 %v5386
        %v5426 = vunpack.c.l.b16 %v5387
        %v5427 = vunpack.c.l.b16 %v5388
        %v5428 = vunpack.c.l.b16 %v5389
        %v5429 = vunpack.c.l.b16 %v5390
        %v5430 = vunpack.c.l.b16 %v5391
        %v5431 = vunpack.c.l.b16 %v5392
        %v5432 = vunpack.c.l.b16 %v5393
        %v5433 = vpack.c.b16 %v5418, %v5417
        %v5434 = vpack.c.b16 %v5420, %v5419
        %v5435 = vpack.c.b16 %v5422, %v5421
        %v5436 = vpack.c.b16 %v5424, %v5423
        %v5437 = vpack.c.b16 %v5426, %v5425
        %v5438 = vpack.c.b16 %v5428, %v5427
        %v5439 = vpack.c.b16 %v5430, %v5429
        %v5440 = vpack.c.b16 %v5432, %v5431
        %5449 = vmatprep.subr.bf16.mxu0 0
        %5450 = vmatpush1.bf16.msra.mxu0 %v5433
        %5451 = vmatprep.subr.bf16.mxu0 0
        %5452 = vmatpush1.bf16.msra.mxu0 %v5434
        %5453 = vmatprep.subr.bf16.mxu0 0
        %5454 = vmatpush1.bf16.msra.mxu0 %v5435
        %5455 = vmatprep.subr.bf16.mxu0 0
        %5456 = vmatpush1.bf16.msra.mxu0 %v5436
        %5457 = vmatprep.subr.bf16.mxu0 0
        %5458 = vmatpush1.bf16.msra.mxu0 %v5437
        %5459 = vmatprep.subr.bf16.mxu0 0
        %5460 = vmatpush1.bf16.msra.mxu0 %v5438
        %5461 = vmatprep.subr.bf16.mxu0 0
        %5462 = vmatpush1.bf16.msra.mxu0 %v5439
        %5463 = vmatprep.subr.bf16.mxu0 0
        %5464 = vmatpush1.bf16.msra.mxu0 %v5440
        %5465 = vmatprep.subr.bf16.mxu0 0
        %5466 = vmatpush1.bf16.msra.mxu0 0
        %5467 = vmatprep.subr.bf16.mxu0 0
        %5468 = vmatpush1.bf16.msra.mxu0 0
        %5469 = vmatprep.subr.bf16.mxu0 0
        %5470 = vmatpush1.bf16.msra.mxu0 0
        %5471 = vmatprep.subr.bf16.mxu0 0
        %5472 = vmatpush1.bf16.msra.mxu0 0
        %5473 = vmatprep.subr.bf16.mxu0 0
        %5474 = vmatpush1.bf16.msra.mxu0 0
        %5475 = vmatprep.subr.bf16.mxu0 0
        %5476 = vmatpush1.bf16.msra.mxu0 0
        %5477 = vmatprep.subr.bf16.mxu0 0
        %5478 = vmatpush1.bf16.msra.mxu0 0
        %5479 = vmatprep.subr.bf16.mxu0 0
        %5480 = vmatpush1.bf16.msra.mxu0 0
        %5481 = vmatprep.mubr.bf16.mxu0 0
        %5482 = vmatmul.mubr.bf16.gmra.mrb[0].mxu0 %v5377
        %v5483 = vpop.f32.mrb[0].mxu0
        %v5484 = vadd.f32 %v5399, %v5483
        %v5485 = vpop.f32.mrb[0].mxu0
        %v5486 = vpop.f32.mrb[0].mxu0
        %v5487 = vpop.f32.mrb[0].mxu0
        %5488 = vdwg.mxu0
        %5489 = vst [vmem:[%s445] sm:$0xff] %v5484
        %p5490 = scmp.lt.s32.totalorder %s25, 1
        %s5491 = scalar_select %p5490, %s25, 1
        %s5492 = smul.addr %s5491, 8
        %s5493 = scalar_lea.vmem %s11, %s5492
        // Predicated region
        $region81: #{lenet_forward.1} parent=63 // pred_check
          %p5494 = pneg %p279
        $region82: #{lenet_forward.1} parent=63 // pred_check_branch
          %5496 = sbr.rel (%p5494) target = $region84
        $region83: #{lenet_forward.1} parent=63 // pred_region
          _
        $region84: #{lenet_forward.1} parent=63 // pred_fallthru
          _
      $region64: #{lenet_forward.1} parent=5 // pred_fallthru
        _
      %p5497 = scmp.le.s32.totalorder 2, %s20
      // Predicated region
      $region85: #{lenet_forward.1} parent=5 // pred_check
        %p5498 = pneg %p5497
      $region86: #{lenet_forward.1} parent=5 // pred_check_branch
        %5500 = sbr.rel (%p5498) target = $region88
      $region87: #{lenet_forward.1} parent=5 // pred_region
        %s5501 = ssub.s32 %s20, 2
        // Predicated region
        $region89: #{lenet_forward.1} parent=87 // pred_check
          %p5502 = pneg %p285
        $region90: #{lenet_forward.1} parent=87 // pred_check_branch
          %5504 = sbr.rel (%p5502) target = $region92
        $region91: #{lenet_forward.1} parent=87 // pred_region
          %p5505 = scmp.lt.s32.totalorder %s26, 1
          %s5506 = scalar_select %p5505, %s26, 1
          %s5507 = smul.addr %s5506, 8
          %s5508 = scalar_lea.vmem %s11, %s5507
        $region92: #{lenet_forward.1} parent=87 // pred_fallthru
          _
      $region88: #{lenet_forward.1} parent=5 // pred_fallthru
        _
    $region6: #{lenet_forward.1} parent=1 // loop_footer
      %s24 = sadd.s32 1, %s20
    $region7: #{lenet_forward.1} parent=1 // loop_footer_branch
      %19 = sbr.rel target = $region3
    $region8: #{lenet_forward.1} parent=1 // loop_exit
      _
    %5509 = vsyncpa [#allocation3], 1
    %s5510 = scalar_lea.sflag [#allocation3], 1
    %5511 = vsyncpa %s5510, 1
    %5512 = vsyncpa [#allocation5], 1
    %5513 = vsyncpa [#allocation8], 1

</llo_original>
